<compile_context>
chip_gen: v7x
topology: tpu7x:2x2x1
jax: 0.10.0
libtpu: 0.0.40
codegen_flags: <defaults>
</compile_context>

<pallas_src>
import functools

import jax
import jax.numpy as jnp
from jax.experimental import pallas as pl
from jax.experimental.pallas import tpu as pltpu


def _round_up(x, m):
    return -(-x // m) * m


def _pcrnn_kernel(x_ref, wx_ref, bg_ref, whh_ref, bhhn_ref, wdec_ref, bdec_ref,
                  out_ref, hid_ref, gi_ref, h_all_ref, *, unroll):
    """One grid step == one batch chunk, all timesteps.

    x_ref:    (S, BB, Fp)  bf16  raw x if encoder folded, else pre-encoded activations
    wx_ref:   (Fp, 3Hp)    bf16  input -> gates weight (encoder pre-folded when cheap)
    bg_ref:   (1, 3Hp)     f32   gate bias (b_ih + b_hh[r,z] + folded encoder bias)
    whh_ref:  (Hp, 3Hp)    bf16  hidden -> gates weight
    bhhn_ref: (1, Hp)      f32   b_hh n-slice (must stay inside r * (gh_n + b_hn))
    wdec_ref: (Hp, NOp)    bf16  decoder weight
    bdec_ref: (1, NOp)     f32   decoder bias
    """
    S, BB, Fp = x_ref.shape
    Hp = whh_ref.shape[0]

    # ---- Phase 0: hoisted input->gates GEMM for ALL timesteps (bf16 MXU, f32 acc) ----
    x_flat = x_ref[...].reshape(S * BB, Fp)
    gi = jnp.dot(x_flat, wx_ref[...], preferred_element_type=jnp.float32) + bg_ref[...]
    gi_ref[...] = gi.reshape(S, BB, 3 * Hp)

    # ---- Phase 1: serial recurrence -- only h_prev @ Whh on the critical path ----
    # Hoist the (1, Hp) -> (BB, Hp) broadcast out of the (partially unrolled) loop:
    # JAX does not CSE broadcast_in_dim, so inlining it would re-emit it every step.
    bhhn = jnp.broadcast_to(bhhn_ref[...], (BB, Hp))

    def step(t, h_prev):
        gi_t = gi_ref[t]                                            # (BB, 3Hp) f32
        gh = jnp.dot(h_prev.astype(jnp.bfloat16), whh_ref[...],
                     preferred_element_type=jnp.float32)
        r = jax.nn.sigmoid(gi_t[:, 0 * Hp:1 * Hp] + gh[:, 0 * Hp:1 * Hp])
        z = jax.nn.sigmoid(gi_t[:, 1 * Hp:2 * Hp] + gh[:, 1 * Hp:2 * Hp])
        n = jnp.tanh(gi_t[:, 2 * Hp:3 * Hp] + r * (gh[:, 2 * Hp:3 * Hp] + bhhn))
        h_new = n + z * (h_prev - n)                                # == (1-z)*n + z*h
        h_all_ref[t] = h_new.astype(h_all_ref.dtype)
        return h_new

    h0 = jnp.zeros((BB, Hp), jnp.float32)
    h_last = jax.lax.fori_loop(0, S, step, h0, unroll=unroll)

    # ---- Phase 2: batched decoder -- one GEMM, one lane-dense store ----
    h_flat = h_all_ref[...].reshape(S * BB, Hp).astype(jnp.bfloat16)
    y = jnp.dot(h_flat, wdec_ref[...], preferred_element_type=jnp.float32) + bdec_ref[...]
    out_ref[...] = y.reshape(S, BB, -1).astype(out_ref.dtype)
    hid_ref[...] = h_last.astype(hid_ref.dtype)


def _num_tensorcores():
    """2 TensorCores on v7x-class chips, else 1 (v5e / v6e)."""
    try:
        kind = jax.devices()[0].device_kind.lower()
        if "v7" in kind or "7x" in kind:
            return 2
    except Exception:
        pass
    return 1


def pcrnn_forward(x, params, *, batch_block=None, time_unroll=8):
    """x: (batch, seq, n_inputs).  Returns (output (seq, batch, n_output),
    hidden (1, batch, n_hidden)) exactly like the PyTorch module."""
    # glue: permute(1, 0, 2) -> time-major
    x = jnp.transpose(x, (1, 0, 2)).astype(jnp.float32)
    S, B, n_in = x.shape
    H = params["w_enc"].shape[0]
    n_out = params["w_dec"].shape[0]
    f32, bf16 = jnp.float32, jnp.bfloat16

    Hp = _round_up(H, 128)
    NOp = _round_up(n_out, 128)
    NIp = _round_up(n_in, 128)

    b_ih = params["b_ih"].astype(f32)
    b_hh = params["b_hh"].astype(f32)
    # Fold b_hh r/z into the input-gate bias (they only ever appear summed); the n
    # slice must stay separate because of the r * (gh_n + b_hn) term.
    bias_rz_fold = jnp.concatenate([b_ih[:2 * H] + b_hh[:2 * H], b_ih[2 * H:]])

    # Encoder handling: fold into the input gates when it reduces FLOPs (NIp <= 1.5*Hp);
    # otherwise run the fully parallel encoder GEMM in plain XLA and feed e to the kernel.
    fold = 2 * NIp <= 3 * Hp
    if fold:
        wx_full = params["w_enc"].T.astype(f32) @ params["w_ih"].T.astype(f32)   # (n_in, 3H)
        bg_full = params["b_enc"].astype(f32) @ params["w_ih"].T.astype(f32) + bias_rz_fold
        x_in, Fp = x, NIp
    else:
        wx_full = params["w_ih"].T.astype(f32)                                   # (H, 3H)
        bg_full = bias_rz_fold
        x_in = x @ params["w_enc"].T.astype(f32) + params["b_enc"].astype(f32)   # (S, B, H)
        Fp = Hp

    # Pad every feature dim to the (8, 128) vreg tile; padded weights/biases are zero
    # so padded hidden lanes stay exactly 0 through the recurrence.
    def pad2(w, shape):
        return jnp.zeros(shape, f32).at[:w.shape[0], :w.shape[1]].set(w.astype(f32))

    def pad_gate_mat(w_t, in_p):
        # w_t: (in_dim, 3H) pre-transposed GRU weight; gate g lands at cols [g*Hp, g*Hp+H)
        out = jnp.zeros((in_p, 3 * Hp), f32)
        for g in range(3):
            out = out.at[:w_t.shape[0], g * Hp:g * Hp + H].set(
                w_t[:, g * H:(g + 1) * H].astype(f32))
        return out

    def pad_gate_bias(b):
        out = jnp.zeros((3 * Hp,), f32)
        for g in range(3):
            out = out.at[g * Hp:g * Hp + H].set(b[g * H:(g + 1) * H])
        return out

    wx = pad_gate_mat(wx_full, Fp).astype(bf16)
    bg = pad_gate_bias(bg_full)[None, :]
    whh = pad_gate_mat(params["w_hh"].T, Hp).astype(bf16)
    bhhn = jnp.zeros((1, Hp), f32).at[0, :H].set(b_hh[2 * H:])
    wdec = pad2(params["w_dec"].T, (Hp, NOp)).astype(bf16)
    bdec = jnp.zeros((1, NOp), f32).at[0, :n_out].set(params["b_dec"].astype(f32))

    # ---- Batch-chunk sizing: fill the MXU M dimension. 1 chunk on v5e/v6e, 2 on ----
    # ---- v7x (one per TensorCore); shrink only if the VMEM estimate overflows.   ----
    num_tc = _num_tensorcores()
    if num_tc == 2:        # v7x-class: 64 MiB physical VMEM per TC
        budget, cap = 44 << 20, 60 << 20
    else:                  # v5e / v6e: 128 MiB physical VMEM
        budget, cap = 96 << 20, 112 << 20

    def vmem_need(bb):
        x_blk = 2 * S * bb * Fp * 2             # bf16 input block, double-buffered
        out_blk = 2 * S * bb * NOp * 4          # f32 output block, double-buffered
        hid_blk = 2 * bb * Hp * 4
        gi = S * bb * 3 * Hp * 4                # f32 gate-preactivation scratch
        h_all = S * bb * Hp * (2 if bb % 16 == 0 else 4)
        weights = 2 * ((Fp + Hp) * 3 * Hp * 2 + Hp * NOp * 2
                       + (3 * Hp + Hp + NOp) * 4)
        return x_blk + out_blk + hid_blk + gi + h_all + weights

    Bp0 = _round_up(B, 8)
    if batch_block is None:
        n_chunks = num_tc if (num_tc > 1 and Bp0 >= 8 * num_tc) else 1
        BB = _round_up(-(-Bp0 // n_chunks), 8)
        while BB > 8 and vmem_need(BB) > budget:
            BB = _round_up(-(-BB // 2), 8)
    else:
        assert batch_block % 8 == 0
        BB = batch_block
    n_chunks = -(-Bp0 // BB)
    Bp = n_chunks * BB

    # TODO(synk): for very large S*B the (S, BB, 3Hp) gi scratch should be tiled over
    # time (inner emit_pipeline) instead of shrinking BB; unnecessary at these sizes.
    vmem_limit = int(min(max(vmem_need(BB) * 5 // 4, 32 << 20), cap))
    # bf16 hidden-state scratch only when each timestep slab is a whole (16,128) tile,
    # so dynamic stores at index t stay tile-aligned for the packed dtype.
    h_all_dtype = bf16 if BB % 16 == 0 else f32

    xp = jnp.zeros((S, Bp, Fp), bf16).at[:, :B, :x_in.shape[-1]].set(x_in.astype(bf16))

    full = lambda a: pl.BlockSpec(a.shape, lambda b: (0,) * a.ndim)
    kernel = functools.partial(_pcrnn_kernel, unroll=max(1, min(time_unroll, S)))

    out_p, hid_p = pl.pallas_call(
        kernel,
        out_shape=(
            jax.ShapeDtypeStruct((S, Bp, NOp), jnp.float32),
            jax.ShapeDtypeStruct((Bp, Hp), jnp.float32),
        ),
        grid_spec=pltpu.PrefetchScalarGridSpec(
            num_scalar_prefetch=0,
            grid=(n_chunks,),
            in_specs=[
                pl.BlockSpec((S, BB, Fp), lambda b: (0, b, 0)),    # input chunk, all steps
                # Grid-invariant weights/biases (grid has <= 2 steps, so the default
                # double-buffering of these tiny operands is negligible).
                full(wx), full(bg), full(whh), full(bhhn), full(wdec), full(bdec),
            ],
            out_specs=[
                pl.BlockSpec((S, BB, NOp), lambda b: (0, b, 0)),   # decoded outputs
                pl.BlockSpec((BB, Hp), lambda b: (b, 0)),          # final hidden
            ],
            scratch_shapes=[
                pltpu.VMEM((S, BB, 3 * Hp), jnp.float32),          # hoisted gi for all t
                pltpu.VMEM((S, BB, Hp), h_all_dtype),              # per-step hidden states
            ],
        ),
        compiler_params=pltpu.CompilerParams(
            dimension_semantics=("parallel",),                     # batch chunks independent
            vmem_limit_bytes=vmem_limit),
    )(xp, wx, bg, whh, bhhn, wdec, bdec)

    out = out_p[:, :B, :n_out]
    hidden = hid_p[None, :B, :H]
    return out, hidden


def init_params(key, n_inputs, n_hidden, n_output):
    """Deterministic synthetic init mirroring the PyTorch parameter shapes
    (nn.Linear/nn.GRU default uniform +-1/sqrt(fan_in))."""
    ks = jax.random.split(key, 8)
    u = lambda k, shape, fan: jax.random.uniform(
        k, shape, jnp.float32, -1.0 / jnp.sqrt(fan), 1.0 / jnp.sqrt(fan))
    return {
        "w_enc": u(ks[0], (n_hidden, n_inputs), n_inputs),
        "b_enc": u(ks[1], (n_hidden,), n_inputs),
        "w_ih":  u(ks[2], (3 * n_hidden, n_hidden), n_hidden),
        "b_ih":  u(ks[3], (3 * n_hidden,), n_hidden),
        "w_hh":  u(ks[4], (3 * n_hidden, n_hidden), n_hidden),
        "b_hh":  u(ks[5], (3 * n_hidden,), n_hidden),
        "w_dec": u(ks[6], (n_output, n_hidden), n_hidden),
        "b_dec": u(ks[7], (n_output,), n_hidden),
    }


def _reference(x, p):
    """Pure-JAX f32 reference of the PyTorch forward (n_layers = 1)."""
    x = jnp.transpose(x, (1, 0, 2))
    S, B, _ = x.shape
    H = p["w_enc"].shape[0]
    e = x @ p["w_enc"].T + p["b_enc"]
    h = jnp.zeros((B, H), jnp.float32)
    outs = []
    for t in range(S):
        gi = e[t] @ p["w_ih"].T + p["b_ih"]
        gh = h @ p["w_hh"].T + p["b_hh"]
        r = jax.nn.sigmoid(gi[:, :H] + gh[:, :H])
        z = jax.nn.sigmoid(gi[:, H:2 * H] + gh[:, H:2 * H])
        n = jnp.tanh(gi[:, 2 * H:] + r * gh[:, 2 * H:])
        h = (1 - z) * n + z * h
        outs.append(h)
    o = jnp.stack(outs, 0) @ p["w_dec"].T + p["b_dec"]
    return o, h[None]


if __name__ == "__main__":
    # Tolerances are loosened vs. the pure-f32 version because the GEMMs now run in
    # bf16 on the MXU (gate elementwise math stays f32).
    TOL = dict(atol=3e-2, rtol=3e-2)

    # --- Test 1: folded-encoder path, single batch chunk ---
    n_inputs, n_hidden, n_output = 16, 32, 8
    batch, seq = 4, 8
    key = jax.random.PRNGKey(0)
    kx, kp = jax.random.split(key)
    x = jax.random.normal(kx, (batch, seq, n_inputs), jnp.float32)
    params = init_params(kp, n_inputs, n_hidden, n_output)

    out, hidden = pcrnn_forward(x, params)
    jax.block_until_ready((out, hidden))

    ref_out, ref_hidden = _reference(x, params)
    assert out.shape == (seq, batch, n_output)
    assert hidden.shape == (1, batch, n_hidden)
    assert jnp.allclose(out, ref_out, **TOL), "output mismatch (test 1)"
    assert jnp.allclose(hidden, ref_hidden, **TOL), "hidden mismatch (test 1)"

    # --- Test 2: wide-input (unfolded encoder) path, multi-chunk grid ---
    n_inputs2, n_hidden2, n_output2 = 256, 32, 8
    batch2, seq2 = 12, 6
    kx2, kp2 = jax.random.split(jax.random.PRNGKey(0), 2)
    x2 = jax.random.normal(kx2, (batch2, seq2, n_inputs2), jnp.float32)
    params2 = init_params(kp2, n_inputs2, n_hidden2, n_output2)

    out2, hidden2 = pcrnn_forward(x2, params2, batch_block=8)   # forces 2 batch chunks
    jax.block_until_ready((out2, hidden2))

    ref_out2, ref_hidden2 = _reference(x2, params2)
    assert out2.shape == (seq2, batch2, n_output2)
    assert hidden2.shape == (1, batch2, n_hidden2)
    assert jnp.allclose(out2, ref_out2, **TOL), "output mismatch (test 2)"
    assert jnp.allclose(hidden2, ref_hidden2, **TOL), "hidden mismatch (test 2)"

    print("KERNEL_OK")
</pallas_src>

<mosaic_0001>
module attributes {stable_mosaic.version = 11 : i64} {
  func.func @_pcrnn_kernel(%arg0: i32, %arg1: memref<8x8x128xbf16, #tpu.memory_space<vmem>>, %arg2: memref<128x384xbf16, #tpu.memory_space<vmem>>, %arg3: memref<1x384xf32, #tpu.memory_space<vmem>>, %arg4: memref<128x384xbf16, #tpu.memory_space<vmem>>, %arg5: memref<1x128xf32, #tpu.memory_space<vmem>>, %arg6: memref<128x128xbf16, #tpu.memory_space<vmem>>, %arg7: memref<1x128xf32, #tpu.memory_space<vmem>>, %arg8: memref<8x8x128xf32, #tpu.memory_space<vmem>>, %arg9: memref<8x128xf32, #tpu.memory_space<vmem>>, %arg10: memref<8x8x384xf32, #tpu.memory_space<vmem>>, %arg11: memref<8x8x128xf32, #tpu.memory_space<vmem>>) attributes {dimension_semantics = [#tpu.dimension_semantics<parallel>], iteration_bounds = array<i64: 1>, scalar_prefetch = 0 : i64, scratch_operands = 2 : i64, tpu.core_type = #tpu.core_type<tc>, window_params = [{transform_indices = @transform_0, window_bounds = array<i64: 8, 8, 128>}, {pipeline_mode = #tpu.pipeline_mode<synchronous>, transform_indices = @transform_1, window_bounds = array<i64: 128, 384>}, {pipeline_mode = #tpu.pipeline_mode<synchronous>, transform_indices = @transform_2, window_bounds = array<i64: 1, 384>}, {pipeline_mode = #tpu.pipeline_mode<synchronous>, transform_indices = @transform_3, window_bounds = array<i64: 128, 384>}, {pipeline_mode = #tpu.pipeline_mode<synchronous>, transform_indices = @transform_4, window_bounds = array<i64: 1, 128>}, {pipeline_mode = #tpu.pipeline_mode<synchronous>, transform_indices = @transform_5, window_bounds = array<i64: 128, 128>}, {pipeline_mode = #tpu.pipeline_mode<synchronous>, transform_indices = @transform_6, window_bounds = array<i64: 1, 128>}, {transform_indices = @transform_7, window_bounds = array<i64: 8, 8, 128>}, {transform_indices = @transform_8, window_bounds = array<i64: 8, 128>}]} {
    %c0 = arith.constant 0 : index
    %c0_0 = arith.constant 0 : index
    %c0_1 = arith.constant 0 : index
    %0 = vector.load %arg1[%c0, %c0_0, %c0_1] : memref<8x8x128xbf16, #tpu.memory_space<vmem>>, vector<8x8x128xbf16>
    %1 = vector.shape_cast %0 : vector<8x8x128xbf16> to vector<64x128xbf16>
    %c0_2 = arith.constant 0 : index
    %c0_3 = arith.constant 0 : index
    %2 = vector.load %arg2[%c0_2, %c0_3] : memref<128x384xbf16, #tpu.memory_space<vmem>>, vector<128x384xbf16>
    %cst = arith.constant dense<0.000000e+00> : vector<64x384xf32>
    %3 = tpu.matmul %1, %2, %cst {dimension_numbers = #tpu.dot_dimension_numbers<[1], [0], [0], [1], [0, 0, 1, 1], [], []>} : vector<64x128xbf16>, vector<128x384xbf16>, vector<64x384xf32> -> vector<64x384xf32>
    %c0_4 = arith.constant 0 : index
    %c0_5 = arith.constant 0 : index
    %4 = vector.load %arg3[%c0_4, %c0_5] : memref<1x384xf32, #tpu.memory_space<vmem>>, vector<1x384xf32>
    %5 = vector.broadcast %4 : vector<1x384xf32> to vector<64x384xf32>
    %6 = arith.addf %3, %5 : vector<64x384xf32>
    %7 = vector.shape_cast %6 : vector<64x384xf32> to vector<8x8x384xf32>
    %c0_6 = arith.constant 0 : index
    %c0_7 = arith.constant 0 : index
    %c0_8 = arith.constant 0 : index
    %8 = vector.load %arg10[%c0_6, %c0_7, %c0_8] : memref<8x8x384xf32, #tpu.memory_space<vmem>>, vector<8x8x384xf32>
    tpu.vector_store %arg10[%c0_6, %c0_7, %c0_8], %7 {strides = array<i32>} : memref<8x8x384xf32, #tpu.memory_space<vmem>>, vector<8x8x384xf32>,
    %c0_9 = arith.constant 0 : index
    %c0_10 = arith.constant 0 : index
    %9 = vector.load %arg5[%c0_9, %c0_10] : memref<1x128xf32, #tpu.memory_space<vmem>>, vector<1x128xf32>
    %10 = vector.shape_cast %9 : vector<1x128xf32> to vector<1x128xf32>
    %11 = vector.broadcast %10 : vector<1x128xf32> to vector<8x128xf32>
    %cst_11 = arith.constant 0.000000e+00 : f32
    %12 = vector.broadcast %cst_11 : f32 to vector<8x128xf32>
    %c0_i32 = arith.constant 0 : i32
    %13 = arith.index_cast %c0_i32 : i32 to index
    %c0_12 = arith.constant 0 : index
    %c0_13 = arith.constant 0 : index
    %14 = vector.load %arg10[%13, %c0_12, %c0_13] : memref<8x8x384xf32, #tpu.memory_space<vmem>>, vector<1x8x384xf32>
    %15 = vector.shape_cast %14 : vector<1x8x384xf32> to vector<8x384xf32>
    %16 = arith.truncf %12 : vector<8x128xf32> to vector<8x128xbf16>
    %c0_14 = arith.constant 0 : index
    %c0_15 = arith.constant 0 : index
    %17 = vector.load %arg4[%c0_14, %c0_15] : memref<128x384xbf16, #tpu.memory_space<vmem>>, vector<128x384xbf16>
    %cst_16 = arith.constant dense<0.000000e+00> : vector<8x384xf32>
    %18 = tpu.matmul %16, %17, %cst_16 {dimension_numbers = #tpu.dot_dimension_numbers<[1], [0], [0], [1], [0, 0, 1, 1], [], []>} : vector<8x128xbf16>, vector<128x384xbf16>, vector<8x384xf32> -> vector<8x384xf32>
    %19 = vector.extract_strided_slice %15 {offsets = [0, 0], sizes = [8, 128], strides = [1, 1]} : vector<8x384xf32> to vector<8x128xf32>
    %20 = vector.extract_strided_slice %18 {offsets = [0, 0], sizes = [8, 128], strides = [1, 1]} : vector<8x384xf32> to vector<8x128xf32>
    %21 = arith.addf %19, %20 : vector<8x128xf32>
    %22 = arith.negf %21 : vector<8x128xf32>
    %23 = math.exp %22 : vector<8x128xf32>
    %cst_17 = arith.constant 1.000000e+00 : f32
    %24 = vector.broadcast %cst_17 : f32 to vector<8x128xf32>
    %25 = arith.addf %24, %23 : vector<8x128xf32>
    %26 = arith.divf %24, %25 : vector<8x128xf32>
    %27 = vector.extract_strided_slice %15 {offsets = [0, 128], sizes = [8, 128], strides = [1, 1]} : vector<8x384xf32> to vector<8x128xf32>
    %28 = vector.extract_strided_slice %18 {offsets = [0, 128], sizes = [8, 128], strides = [1, 1]} : vector<8x384xf32> to vector<8x128xf32>
    %29 = arith.addf %27, %28 : vector<8x128xf32>
    %30 = arith.negf %29 : vector<8x128xf32>
    %31 = math.exp %30 : vector<8x128xf32>
    %cst_18 = arith.constant 1.000000e+00 : f32
    %32 = vector.broadcast %cst_18 : f32 to vector<8x128xf32>
    %33 = arith.addf %32, %31 : vector<8x128xf32>
    %34 = arith.divf %32, %33 : vector<8x128xf32>
    %35 = vector.extract_strided_slice %15 {offsets = [0, 256], sizes = [8, 128], strides = [1, 1]} : vector<8x384xf32> to vector<8x128xf32>
    %36 = vector.extract_strided_slice %18 {offsets = [0, 256], sizes = [8, 128], strides = [1, 1]} : vector<8x384xf32> to vector<8x128xf32>
    %37 = arith.addf %36, %11 : vector<8x128xf32>
    %38 = arith.mulf %26, %37 : vector<8x128xf32>
    %39 = arith.addf %35, %38 : vector<8x128xf32>
    %40 = math.tanh %39 : vector<8x128xf32>
    %41 = arith.subf %12, %40 : vector<8x128xf32>
    %42 = arith.mulf %34, %41 : vector<8x128xf32>
    %43 = arith.addf %40, %42 : vector<8x128xf32>
    %44 = arith.index_cast %c0_i32 : i32 to index
    %c0_19 = arith.constant 0 : index
    %c0_20 = arith.constant 0 : index
    %45 = vector.load %arg11[%44, %c0_19, %c0_20] : memref<8x8x128xf32, #tpu.memory_space<vmem>>, vector<1x8x128xf32>
    %46 = vector.shape_cast %45 : vector<1x8x128xf32> to vector<8x128xf32>
    %47 = vector.shape_cast %43 : vector<8x128xf32> to vector<1x8x128xf32>
    tpu.vector_store %arg11[%44, %c0_19, %c0_20], %47 {strides = array<i32>} : memref<8x8x128xf32, #tpu.memory_space<vmem>>, vector<1x8x128xf32>,
    %c1_i32 = arith.constant 1 : i32
    %48 = arith.index_cast %c1_i32 : i32 to index
    %c0_21 = arith.constant 0 : index
    %c0_22 = arith.constant 0 : index
    %49 = vector.load %arg10[%48, %c0_21, %c0_22] : memref<8x8x384xf32, #tpu.memory_space<vmem>>, vector<1x8x384xf32>
    %50 = vector.shape_cast %49 : vector<1x8x384xf32> to vector<8x384xf32>
    %51 = arith.truncf %43 : vector<8x128xf32> to vector<8x128xbf16>
    %c0_23 = arith.constant 0 : index
    %c0_24 = arith.constant 0 : index
    %52 = vector.load %arg4[%c0_23, %c0_24] : memref<128x384xbf16, #tpu.memory_space<vmem>>, vector<128x384xbf16>
    %cst_25 = arith.constant dense<0.000000e+00> : vector<8x384xf32>
    %53 = tpu.matmul %51, %52, %cst_25 {dimension_numbers = #tpu.dot_dimension_numbers<[1], [0], [0], [1], [0, 0, 1, 1], [], []>} : vector<8x128xbf16>, vector<128x384xbf16>, vector<8x384xf32> -> vector<8x384xf32>
    %54 = vector.extract_strided_slice %50 {offsets = [0, 0], sizes = [8, 128], strides = [1, 1]} : vector<8x384xf32> to vector<8x128xf32>
    %55 = vector.extract_strided_slice %53 {offsets = [0, 0], sizes = [8, 128], strides = [1, 1]} : vector<8x384xf32> to vector<8x128xf32>
    %56 = arith.addf %54, %55 : vector<8x128xf32>
    %57 = arith.negf %56 : vector<8x128xf32>
    %58 = math.exp %57 : vector<8x128xf32>
    %cst_26 = arith.constant 1.000000e+00 : f32
    %59 = vector.broadcast %cst_26 : f32 to vector<8x128xf32>
    %60 = arith.addf %59, %58 : vector<8x128xf32>
    %61 = arith.divf %59, %60 : vector<8x128xf32>
    %62 = vector.extract_strided_slice %50 {offsets = [0, 128], sizes = [8, 128], strides = [1, 1]} : vector<8x384xf32> to vector<8x128xf32>
    %63 = vector.extract_strided_slice %53 {offsets = [0, 128], sizes = [8, 128], strides = [1, 1]} : vector<8x384xf32> to vector<8x128xf32>
    %64 = arith.addf %62, %63 : vector<8x128xf32>
    %65 = arith.negf %64 : vector<8x128xf32>
    %66 = math.exp %65 : vector<8x128xf32>
    %cst_27 = arith.constant 1.000000e+00 : f32
    %67 = vector.broadcast %cst_27 : f32 to vector<8x128xf32>
    %68 = arith.addf %67, %66 : vector<8x128xf32>
    %69 = arith.divf %67, %68 : vector<8x128xf32>
    %70 = vector.extract_strided_slice %50 {offsets = [0, 256], sizes = [8, 128], strides = [1, 1]} : vector<8x384xf32> to vector<8x128xf32>
    %71 = vector.extract_strided_slice %53 {offsets = [0, 256], sizes = [8, 128], strides = [1, 1]} : vector<8x384xf32> to vector<8x128xf32>
    %72 = arith.addf %71, %11 : vector<8x128xf32>
    %73 = arith.mulf %61, %72 : vector<8x128xf32>
    %74 = arith.addf %70, %73 : vector<8x128xf32>
    %75 = math.tanh %74 : vector<8x128xf32>
    %76 = arith.subf %43, %75 : vector<8x128xf32>
    %77 = arith.mulf %69, %76 : vector<8x128xf32>
    %78 = arith.addf %75, %77 : vector<8x128xf32>
    %79 = arith.index_cast %c1_i32 : i32 to index
    %c0_28 = arith.constant 0 : index
    %c0_29 = arith.constant 0 : index
    %80 = vector.load %arg11[%79, %c0_28, %c0_29] : memref<8x8x128xf32, #tpu.memory_space<vmem>>, vector<1x8x128xf32>
    %81 = vector.shape_cast %80 : vector<1x8x128xf32> to vector<8x128xf32>
    %82 = vector.shape_cast %78 : vector<8x128xf32> to vector<1x8x128xf32>
    tpu.vector_store %arg11[%79, %c0_28, %c0_29], %82 {strides = array<i32>} : memref<8x8x128xf32, #tpu.memory_space<vmem>>, vector<1x8x128xf32>,
    %c2_i32 = arith.constant 2 : i32
    %83 = arith.index_cast %c2_i32 : i32 to index
    %c0_30 = arith.constant 0 : index
    %c0_31 = arith.constant 0 : index
    %84 = vector.load %arg10[%83, %c0_30, %c0_31] : memref<8x8x384xf32, #tpu.memory_space<vmem>>, vector<1x8x384xf32>
    %85 = vector.shape_cast %84 : vector<1x8x384xf32> to vector<8x384xf32>
    %86 = arith.truncf %78 : vector<8x128xf32> to vector<8x128xbf16>
    %c0_32 = arith.constant 0 : index
    %c0_33 = arith.constant 0 : index
    %87 = vector.load %arg4[%c0_32, %c0_33] : memref<128x384xbf16, #tpu.memory_space<vmem>>, vector<128x384xbf16>
    %cst_34 = arith.constant dense<0.000000e+00> : vector<8x384xf32>
    %88 = tpu.matmul %86, %87, %cst_34 {dimension_numbers = #tpu.dot_dimension_numbers<[1], [0], [0], [1], [0, 0, 1, 1], [], []>} : vector<8x128xbf16>, vector<128x384xbf16>, vector<8x384xf32> -> vector<8x384xf32>
    %89 = vector.extract_strided_slice %85 {offsets = [0, 0], sizes = [8, 128], strides = [1, 1]} : vector<8x384xf32> to vector<8x128xf32>
    %90 = vector.extract_strided_slice %88 {offsets = [0, 0], sizes = [8, 128], strides = [1, 1]} : vector<8x384xf32> to vector<8x128xf32>
    %91 = arith.addf %89, %90 : vector<8x128xf32>
    %92 = arith.negf %91 : vector<8x128xf32>
    %93 = math.exp %92 : vector<8x128xf32>
    %cst_35 = arith.constant 1.000000e+00 : f32
    %94 = vector.broadcast %cst_35 : f32 to vector<8x128xf32>
    %95 = arith.addf %94, %93 : vector<8x128xf32>
    %96 = arith.divf %94, %95 : vector<8x128xf32>
    %97 = vector.extract_strided_slice %85 {offsets = [0, 128], sizes = [8, 128], strides = [1, 1]} : vector<8x384xf32> to vector<8x128xf32>
    %98 = vector.extract_strided_slice %88 {offsets = [0, 128], sizes = [8, 128], strides = [1, 1]} : vector<8x384xf32> to vector<8x128xf32>
    %99 = arith.addf %97, %98 : vector<8x128xf32>
    %100 = arith.negf %99 : vector<8x128xf32>
    %101 = math.exp %100 : vector<8x128xf32>
    %cst_36 = arith.constant 1.000000e+00 : f32
    %102 = vector.broadcast %cst_36 : f32 to vector<8x128xf32>
    %103 = arith.addf %102, %101 : vector<8x128xf32>
    %104 = arith.divf %102, %103 : vector<8x128xf32>
    %105 = vector.extract_strided_slice %85 {offsets = [0, 256], sizes = [8, 128], strides = [1, 1]} : vector<8x384xf32> to vector<8x128xf32>
    %106 = vector.extract_strided_slice %88 {offsets = [0, 256], sizes = [8, 128], strides = [1, 1]} : vector<8x384xf32> to vector<8x128xf32>
    %107 = arith.addf %106, %11 : vector<8x128xf32>
    %108 = arith.mulf %96, %107 : vector<8x128xf32>
    %109 = arith.addf %105, %108 : vector<8x128xf32>
    %110 = math.tanh %109 : vector<8x128xf32>
    %111 = arith.subf %78, %110 : vector<8x128xf32>
    %112 = arith.mulf %104, %111 : vector<8x128xf32>
    %113 = arith.addf %110, %112 : vector<8x128xf32>
    %114 = arith.index_cast %c2_i32 : i32 to index
    %c0_37 = arith.constant 0 : index
    %c0_38 = arith.constant 0 : index
    %115 = vector.load %arg11[%114, %c0_37, %c0_38] : memref<8x8x128xf32, #tpu.memory_space<vmem>>, vector<1x8x128xf32>
    %116 = vector.shape_cast %115 : vector<1x8x128xf32> to vector<8x128xf32>
    %117 = vector.shape_cast %113 : vector<8x128xf32> to vector<1x8x128xf32>
    tpu.vector_store %arg11[%114, %c0_37, %c0_38], %117 {strides = array<i32>} : memref<8x8x128xf32, #tpu.memory_space<vmem>>, vector<1x8x128xf32>,
    %c3_i32 = arith.constant 3 : i32
    %118 = arith.index_cast %c3_i32 : i32 to index
    %c0_39 = arith.constant 0 : index
    %c0_40 = arith.constant 0 : index
    %119 = vector.load %arg10[%118, %c0_39, %c0_40] : memref<8x8x384xf32, #tpu.memory_space<vmem>>, vector<1x8x384xf32>
    %120 = vector.shape_cast %119 : vector<1x8x384xf32> to vector<8x384xf32>
    %121 = arith.truncf %113 : vector<8x128xf32> to vector<8x128xbf16>
    %c0_41 = arith.constant 0 : index
    %c0_42 = arith.constant 0 : index
    %122 = vector.load %arg4[%c0_41, %c0_42] : memref<128x384xbf16, #tpu.memory_space<vmem>>, vector<128x384xbf16>
    %cst_43 = arith.constant dense<0.000000e+00> : vector<8x384xf32>
    %123 = tpu.matmul %121, %122, %cst_43 {dimension_numbers = #tpu.dot_dimension_numbers<[1], [0], [0], [1], [0, 0, 1, 1], [], []>} : vector<8x128xbf16>, vector<128x384xbf16>, vector<8x384xf32> -> vector<8x384xf32>
    %124 = vector.extract_strided_slice %120 {offsets = [0, 0], sizes = [8, 128], strides = [1, 1]} : vector<8x384xf32> to vector<8x128xf32>
    %125 = vector.extract_strided_slice %123 {offsets = [0, 0], sizes = [8, 128], strides = [1, 1]} : vector<8x384xf32> to vector<8x128xf32>
    %126 = arith.addf %124, %125 : vector<8x128xf32>
    %127 = arith.negf %126 : vector<8x128xf32>
    %128 = math.exp %127 : vector<8x128xf32>
    %cst_44 = arith.constant 1.000000e+00 : f32
    %129 = vector.broadcast %cst_44 : f32 to vector<8x128xf32>
    %130 = arith.addf %129, %128 : vector<8x128xf32>
    %131 = arith.divf %129, %130 : vector<8x128xf32>
    %132 = vector.extract_strided_slice %120 {offsets = [0, 128], sizes = [8, 128], strides = [1, 1]} : vector<8x384xf32> to vector<8x128xf32>
    %133 = vector.extract_strided_slice %123 {offsets = [0, 128], sizes = [8, 128], strides = [1, 1]} : vector<8x384xf32> to vector<8x128xf32>
    %134 = arith.addf %132, %133 : vector<8x128xf32>
    %135 = arith.negf %134 : vector<8x128xf32>
    %136 = math.exp %135 : vector<8x128xf32>
    %cst_45 = arith.constant 1.000000e+00 : f32
    %137 = vector.broadcast %cst_45 : f32 to vector<8x128xf32>
    %138 = arith.addf %137, %136 : vector<8x128xf32>
    %139 = arith.divf %137, %138 : vector<8x128xf32>
    %140 = vector.extract_strided_slice %120 {offsets = [0, 256], sizes = [8, 128], strides = [1, 1]} : vector<8x384xf32> to vector<8x128xf32>
    %141 = vector.extract_strided_slice %123 {offsets = [0, 256], sizes = [8, 128], strides = [1, 1]} : vector<8x384xf32> to vector<8x128xf32>
    %142 = arith.addf %141, %11 : vector<8x128xf32>
    %143 = arith.mulf %131, %142 : vector<8x128xf32>
    %144 = arith.addf %140, %143 : vector<8x128xf32>
    %145 = math.tanh %144 : vector<8x128xf32>
    %146 = arith.subf %113, %145 : vector<8x128xf32>
    %147 = arith.mulf %139, %146 : vector<8x128xf32>
    %148 = arith.addf %145, %147 : vector<8x128xf32>
    %149 = arith.index_cast %c3_i32 : i32 to index
    %c0_46 = arith.constant 0 : index
    %c0_47 = arith.constant 0 : index
    %150 = vector.load %arg11[%149, %c0_46, %c0_47] : memref<8x8x128xf32, #tpu.memory_space<vmem>>, vector<1x8x128xf32>
    %151 = vector.shape_cast %150 : vector<1x8x128xf32> to vector<8x128xf32>
    %152 = vector.shape_cast %148 : vector<8x128xf32> to vector<1x8x128xf32>
    tpu.vector_store %arg11[%149, %c0_46, %c0_47], %152 {strides = array<i32>} : memref<8x8x128xf32, #tpu.memory_space<vmem>>, vector<1x8x128xf32>,
    %c4_i32 = arith.constant 4 : i32
    %153 = arith.index_cast %c4_i32 : i32 to index
    %c0_48 = arith.constant 0 : index
    %c0_49 = arith.constant 0 : index
    %154 = vector.load %arg10[%153, %c0_48, %c0_49] : memref<8x8x384xf32, #tpu.memory_space<vmem>>, vector<1x8x384xf32>
    %155 = vector.shape_cast %154 : vector<1x8x384xf32> to vector<8x384xf32>
    %156 = arith.truncf %148 : vector<8x128xf32> to vector<8x128xbf16>
    %c0_50 = arith.constant 0 : index
    %c0_51 = arith.constant 0 : index
    %157 = vector.load %arg4[%c0_50, %c0_51] : memref<128x384xbf16, #tpu.memory_space<vmem>>, vector<128x384xbf16>
    %cst_52 = arith.constant dense<0.000000e+00> : vector<8x384xf32>
    %158 = tpu.matmul %156, %157, %cst_52 {dimension_numbers = #tpu.dot_dimension_numbers<[1], [0], [0], [1], [0, 0, 1, 1], [], []>} : vector<8x128xbf16>, vector<128x384xbf16>, vector<8x384xf32> -> vector<8x384xf32>
    %159 = vector.extract_strided_slice %155 {offsets = [0, 0], sizes = [8, 128], strides = [1, 1]} : vector<8x384xf32> to vector<8x128xf32>
    %160 = vector.extract_strided_slice %158 {offsets = [0, 0], sizes = [8, 128], strides = [1, 1]} : vector<8x384xf32> to vector<8x128xf32>
    %161 = arith.addf %159, %160 : vector<8x128xf32>
    %162 = arith.negf %161 : vector<8x128xf32>
    %163 = math.exp %162 : vector<8x128xf32>
    %cst_53 = arith.constant 1.000000e+00 : f32
    %164 = vector.broadcast %cst_53 : f32 to vector<8x128xf32>
    %165 = arith.addf %164, %163 : vector<8x128xf32>
    %166 = arith.divf %164, %165 : vector<8x128xf32>
    %167 = vector.extract_strided_slice %155 {offsets = [0, 128], sizes = [8, 128], strides = [1, 1]} : vector<8x384xf32> to vector<8x128xf32>
    %168 = vector.extract_strided_slice %158 {offsets = [0, 128], sizes = [8, 128], strides = [1, 1]} : vector<8x384xf32> to vector<8x128xf32>
    %169 = arith.addf %167, %168 : vector<8x128xf32>
    %170 = arith.negf %169 : vector<8x128xf32>
    %171 = math.exp %170 : vector<8x128xf32>
    %cst_54 = arith.constant 1.000000e+00 : f32
    %172 = vector.broadcast %cst_54 : f32 to vector<8x128xf32>
    %173 = arith.addf %172, %171 : vector<8x128xf32>
    %174 = arith.divf %172, %173 : vector<8x128xf32>
    %175 = vector.extract_strided_slice %155 {offsets = [0, 256], sizes = [8, 128], strides = [1, 1]} : vector<8x384xf32> to vector<8x128xf32>
    %176 = vector.extract_strided_slice %158 {offsets = [0, 256], sizes = [8, 128], strides = [1, 1]} : vector<8x384xf32> to vector<8x128xf32>
    %177 = arith.addf %176, %11 : vector<8x128xf32>
    %178 = arith.mulf %166, %177 : vector<8x128xf32>
    %179 = arith.addf %175, %178 : vector<8x128xf32>
    %180 = math.tanh %179 : vector<8x128xf32>
    %181 = arith.subf %148, %180 : vector<8x128xf32>
    %182 = arith.mulf %174, %181 : vector<8x128xf32>
    %183 = arith.addf %180, %182 : vector<8x128xf32>
    %184 = arith.index_cast %c4_i32 : i32 to index
    %c0_55 = arith.constant 0 : index
    %c0_56 = arith.constant 0 : index
    %185 = vector.load %arg11[%184, %c0_55, %c0_56] : memref<8x8x128xf32, #tpu.memory_space<vmem>>, vector<1x8x128xf32>
    %186 = vector.shape_cast %185 : vector<1x8x128xf32> to vector<8x128xf32>
    %187 = vector.shape_cast %183 : vector<8x128xf32> to vector<1x8x128xf32>
    tpu.vector_store %arg11[%184, %c0_55, %c0_56], %187 {strides = array<i32>} : memref<8x8x128xf32, #tpu.memory_space<vmem>>, vector<1x8x128xf32>,
    %c5_i32 = arith.constant 5 : i32
    %188 = arith.index_cast %c5_i32 : i32 to index
    %c0_57 = arith.constant 0 : index
    %c0_58 = arith.constant 0 : index
    %189 = vector.load %arg10[%188, %c0_57, %c0_58] : memref<8x8x384xf32, #tpu.memory_space<vmem>>, vector<1x8x384xf32>
    %190 = vector.shape_cast %189 : vector<1x8x384xf32> to vector<8x384xf32>
    %191 = arith.truncf %183 : vector<8x128xf32> to vector<8x128xbf16>
    %c0_59 = arith.constant 0 : index
    %c0_60 = arith.constant 0 : index
    %192 = vector.load %arg4[%c0_59, %c0_60] : memref<128x384xbf16, #tpu.memory_space<vmem>>, vector<128x384xbf16>
    %cst_61 = arith.constant dense<0.000000e+00> : vector<8x384xf32>
    %193 = tpu.matmul %191, %192, %cst_61 {dimension_numbers = #tpu.dot_dimension_numbers<[1], [0], [0], [1], [0, 0, 1, 1], [], []>} : vector<8x128xbf16>, vector<128x384xbf16>, vector<8x384xf32> -> vector<8x384xf32>
    %194 = vector.extract_strided_slice %190 {offsets = [0, 0], sizes = [8, 128], strides = [1, 1]} : vector<8x384xf32> to vector<8x128xf32>
    %195 = vector.extract_strided_slice %193 {offsets = [0, 0], sizes = [8, 128], strides = [1, 1]} : vector<8x384xf32> to vector<8x128xf32>
    %196 = arith.addf %194, %195 : vector<8x128xf32>
    %197 = arith.negf %196 : vector<8x128xf32>
    %198 = math.exp %197 : vector<8x128xf32>
    %cst_62 = arith.constant 1.000000e+00 : f32
    %199 = vector.broadcast %cst_62 : f32 to vector<8x128xf32>
    %200 = arith.addf %199, %198 : vector<8x128xf32>
    %201 = arith.divf %199, %200 : vector<8x128xf32>
    %202 = vector.extract_strided_slice %190 {offsets = [0, 128], sizes = [8, 128], strides = [1, 1]} : vector<8x384xf32> to vector<8x128xf32>
    %203 = vector.extract_strided_slice %193 {offsets = [0, 128], sizes = [8, 128], strides = [1, 1]} : vector<8x384xf32> to vector<8x128xf32>
    %204 = arith.addf %202, %203 : vector<8x128xf32>
    %205 = arith.negf %204 : vector<8x128xf32>
    %206 = math.exp %205 : vector<8x128xf32>
    %cst_63 = arith.constant 1.000000e+00 : f32
    %207 = vector.broadcast %cst_63 : f32 to vector<8x128xf32>
    %208 = arith.addf %207, %206 : vector<8x128xf32>
    %209 = arith.divf %207, %208 : vector<8x128xf32>
    %210 = vector.extract_strided_slice %190 {offsets = [0, 256], sizes = [8, 128], strides = [1, 1]} : vector<8x384xf32> to vector<8x128xf32>
    %211 = vector.extract_strided_slice %193 {offsets = [0, 256], sizes = [8, 128], strides = [1, 1]} : vector<8x384xf32> to vector<8x128xf32>
    %212 = arith.addf %211, %11 : vector<8x128xf32>
    %213 = arith.mulf %201, %212 : vector<8x128xf32>
    %214 = arith.addf %210, %213 : vector<8x128xf32>
    %215 = math.tanh %214 : vector<8x128xf32>
    %216 = arith.subf %183, %215 : vector<8x128xf32>
    %217 = arith.mulf %209, %216 : vector<8x128xf32>
    %218 = arith.addf %215, %217 : vector<8x128xf32>
    %219 = arith.index_cast %c5_i32 : i32 to index
    %c0_64 = arith.constant 0 : index
    %c0_65 = arith.constant 0 : index
    %220 = vector.load %arg11[%219, %c0_64, %c0_65] : memref<8x8x128xf32, #tpu.memory_space<vmem>>, vector<1x8x128xf32>
    %221 = vector.shape_cast %220 : vector<1x8x128xf32> to vector<8x128xf32>
    %222 = vector.shape_cast %218 : vector<8x128xf32> to vector<1x8x128xf32>
    tpu.vector_store %arg11[%219, %c0_64, %c0_65], %222 {strides = array<i32>} : memref<8x8x128xf32, #tpu.memory_space<vmem>>, vector<1x8x128xf32>,
    %c6_i32 = arith.constant 6 : i32
    %223 = arith.index_cast %c6_i32 : i32 to index
    %c0_66 = arith.constant 0 : index
    %c0_67 = arith.constant 0 : index
    %224 = vector.load %arg10[%223, %c0_66, %c0_67] : memref<8x8x384xf32, #tpu.memory_space<vmem>>, vector<1x8x384xf32>
    %225 = vector.shape_cast %224 : vector<1x8x384xf32> to vector<8x384xf32>
    %226 = arith.truncf %218 : vector<8x128xf32> to vector<8x128xbf16>
    %c0_68 = arith.constant 0 : index
    %c0_69 = arith.constant 0 : index
    %227 = vector.load %arg4[%c0_68, %c0_69] : memref<128x384xbf16, #tpu.memory_space<vmem>>, vector<128x384xbf16>
    %cst_70 = arith.constant dense<0.000000e+00> : vector<8x384xf32>
    %228 = tpu.matmul %226, %227, %cst_70 {dimension_numbers = #tpu.dot_dimension_numbers<[1], [0], [0], [1], [0, 0, 1, 1], [], []>} : vector<8x128xbf16>, vector<128x384xbf16>, vector<8x384xf32> -> vector<8x384xf32>
    %229 = vector.extract_strided_slice %225 {offsets = [0, 0], sizes = [8, 128], strides = [1, 1]} : vector<8x384xf32> to vector<8x128xf32>
    %230 = vector.extract_strided_slice %228 {offsets = [0, 0], sizes = [8, 128], strides = [1, 1]} : vector<8x384xf32> to vector<8x128xf32>
    %231 = arith.addf %229, %230 : vector<8x128xf32>
    %232 = arith.negf %231 : vector<8x128xf32>
    %233 = math.exp %232 : vector<8x128xf32>
    %cst_71 = arith.constant 1.000000e+00 : f32
    %234 = vector.broadcast %cst_71 : f32 to vector<8x128xf32>
    %235 = arith.addf %234, %233 : vector<8x128xf32>
    %236 = arith.divf %234, %235 : vector<8x128xf32>
    %237 = vector.extract_strided_slice %225 {offsets = [0, 128], sizes = [8, 128], strides = [1, 1]} : vector<8x384xf32> to vector<8x128xf32>
    %238 = vector.extract_strided_slice %228 {offsets = [0, 128], sizes = [8, 128], strides = [1, 1]} : vector<8x384xf32> to vector<8x128xf32>
    %239 = arith.addf %237, %238 : vector<8x128xf32>
    %240 = arith.negf %239 : vector<8x128xf32>
    %241 = math.exp %240 : vector<8x128xf32>
    %cst_72 = arith.constant 1.000000e+00 : f32
    %242 = vector.broadcast %cst_72 : f32 to vector<8x128xf32>
    %243 = arith.addf %242, %241 : vector<8x128xf32>
    %244 = arith.divf %242, %243 : vector<8x128xf32>
    %245 = vector.extract_strided_slice %225 {offsets = [0, 256], sizes = [8, 128], strides = [1, 1]} : vector<8x384xf32> to vector<8x128xf32>
    %246 = vector.extract_strided_slice %228 {offsets = [0, 256], sizes = [8, 128], strides = [1, 1]} : vector<8x384xf32> to vector<8x128xf32>
    %247 = arith.addf %246, %11 : vector<8x128xf32>
    %248 = arith.mulf %236, %247 : vector<8x128xf32>
    %249 = arith.addf %245, %248 : vector<8x128xf32>
    %250 = math.tanh %249 : vector<8x128xf32>
    %251 = arith.subf %218, %250 : vector<8x128xf32>
    %252 = arith.mulf %244, %251 : vector<8x128xf32>
    %253 = arith.addf %250, %252 : vector<8x128xf32>
    %254 = arith.index_cast %c6_i32 : i32 to index
    %c0_73 = arith.constant 0 : index
    %c0_74 = arith.constant 0 : index
    %255 = vector.load %arg11[%254, %c0_73, %c0_74] : memref<8x8x128xf32, #tpu.memory_space<vmem>>, vector<1x8x128xf32>
    %256 = vector.shape_cast %255 : vector<1x8x128xf32> to vector<8x128xf32>
    %257 = vector.shape_cast %253 : vector<8x128xf32> to vector<1x8x128xf32>
    tpu.vector_store %arg11[%254, %c0_73, %c0_74], %257 {strides = array<i32>} : memref<8x8x128xf32, #tpu.memory_space<vmem>>, vector<1x8x128xf32>,
    %c7_i32 = arith.constant 7 : i32
    %258 = arith.index_cast %c7_i32 : i32 to index
    %c0_75 = arith.constant 0 : index
    %c0_76 = arith.constant 0 : index
    %259 = vector.load %arg10[%258, %c0_75, %c0_76] : memref<8x8x384xf32, #tpu.memory_space<vmem>>, vector<1x8x384xf32>
    %260 = vector.shape_cast %259 : vector<1x8x384xf32> to vector<8x384xf32>
    %261 = arith.truncf %253 : vector<8x128xf32> to vector<8x128xbf16>
    %c0_77 = arith.constant 0 : index
    %c0_78 = arith.constant 0 : index
    %262 = vector.load %arg4[%c0_77, %c0_78] : memref<128x384xbf16, #tpu.memory_space<vmem>>, vector<128x384xbf16>
    %cst_79 = arith.constant dense<0.000000e+00> : vector<8x384xf32>
    %263 = tpu.matmul %261, %262, %cst_79 {dimension_numbers = #tpu.dot_dimension_numbers<[1], [0], [0], [1], [0, 0, 1, 1], [], []>} : vector<8x128xbf16>, vector<128x384xbf16>, vector<8x384xf32> -> vector<8x384xf32>
    %264 = vector.extract_strided_slice %260 {offsets = [0, 0], sizes = [8, 128], strides = [1, 1]} : vector<8x384xf32> to vector<8x128xf32>
    %265 = vector.extract_strided_slice %263 {offsets = [0, 0], sizes = [8, 128], strides = [1, 1]} : vector<8x384xf32> to vector<8x128xf32>
    %266 = arith.addf %264, %265 : vector<8x128xf32>
    %267 = arith.negf %266 : vector<8x128xf32>
    %268 = math.exp %267 : vector<8x128xf32>
    %cst_80 = arith.constant 1.000000e+00 : f32
    %269 = vector.broadcast %cst_80 : f32 to vector<8x128xf32>
    %270 = arith.addf %269, %268 : vector<8x128xf32>
    %271 = arith.divf %269, %270 : vector<8x128xf32>
    %272 = vector.extract_strided_slice %260 {offsets = [0, 128], sizes = [8, 128], strides = [1, 1]} : vector<8x384xf32> to vector<8x128xf32>
    %273 = vector.extract_strided_slice %263 {offsets = [0, 128], sizes = [8, 128], strides = [1, 1]} : vector<8x384xf32> to vector<8x128xf32>
    %274 = arith.addf %272, %273 : vector<8x128xf32>
    %275 = arith.negf %274 : vector<8x128xf32>
    %276 = math.exp %275 : vector<8x128xf32>
    %cst_81 = arith.constant 1.000000e+00 : f32
    %277 = vector.broadcast %cst_81 : f32 to vector<8x128xf32>
    %278 = arith.addf %277, %276 : vector<8x128xf32>
    %279 = arith.divf %277, %278 : vector<8x128xf32>
    %280 = vector.extract_strided_slice %260 {offsets = [0, 256], sizes = [8, 128], strides = [1, 1]} : vector<8x384xf32> to vector<8x128xf32>
    %281 = vector.extract_strided_slice %263 {offsets = [0, 256], sizes = [8, 128], strides = [1, 1]} : vector<8x384xf32> to vector<8x128xf32>
    %282 = arith.addf %281, %11 : vector<8x128xf32>
    %283 = arith.mulf %271, %282 : vector<8x128xf32>
    %284 = arith.addf %280, %283 : vector<8x128xf32>
    %285 = math.tanh %284 : vector<8x128xf32>
    %286 = arith.subf %253, %285 : vector<8x128xf32>
    %287 = arith.mulf %279, %286 : vector<8x128xf32>
    %288 = arith.addf %285, %287 : vector<8x128xf32>
    %289 = arith.index_cast %c7_i32 : i32 to index
    %c0_82 = arith.constant 0 : index
    %c0_83 = arith.constant 0 : index
    %290 = vector.load %arg11[%289, %c0_82, %c0_83] : memref<8x8x128xf32, #tpu.memory_space<vmem>>, vector<1x8x128xf32>
    %291 = vector.shape_cast %290 : vector<1x8x128xf32> to vector<8x128xf32>
    %292 = vector.shape_cast %288 : vector<8x128xf32> to vector<1x8x128xf32>
    tpu.vector_store %arg11[%289, %c0_82, %c0_83], %292 {strides = array<i32>} : memref<8x8x128xf32, #tpu.memory_space<vmem>>, vector<1x8x128xf32>,
    %c8_i32 = arith.constant 8 : i32
    %c0_84 = arith.constant 0 : index
    %c0_85 = arith.constant 0 : index
    %c0_86 = arith.constant 0 : index
    %293 = vector.load %arg11[%c0_84, %c0_85, %c0_86] : memref<8x8x128xf32, #tpu.memory_space<vmem>>, vector<8x8x128xf32>
    %294 = vector.shape_cast %293 : vector<8x8x128xf32> to vector<64x128xf32>
    %295 = arith.truncf %294 : vector<64x128xf32> to vector<64x128xbf16>
    %c0_87 = arith.constant 0 : index
    %c0_88 = arith.constant 0 : index
    %296 = vector.load %arg6[%c0_87, %c0_88] : memref<128x128xbf16, #tpu.memory_space<vmem>>, vector<128x128xbf16>
    %cst_89 = arith.constant dense<0.000000e+00> : vector<64x128xf32>
    %297 = tpu.matmul %295, %296, %cst_89 {dimension_numbers = #tpu.dot_dimension_numbers<[1], [0], [0], [1], [0, 0, 1, 1], [], []>} : vector<64x128xbf16>, vector<128x128xbf16>, vector<64x128xf32> -> vector<64x128xf32>
    %c0_90 = arith.constant 0 : index
    %c0_91 = arith.constant 0 : index
    %298 = vector.load %arg7[%c0_90, %c0_91] : memref<1x128xf32, #tpu.memory_space<vmem>>, vector<1x128xf32>
    %299 = vector.broadcast %298 : vector<1x128xf32> to vector<64x128xf32>
    %300 = arith.addf %297, %299 : vector<64x128xf32>
    %301 = vector.shape_cast %300 : vector<64x128xf32> to vector<8x8x128xf32>
    %c0_92 = arith.constant 0 : index
    %c0_93 = arith.constant 0 : index
    %c0_94 = arith.constant 0 : index
    %302 = vector.load %arg8[%c0_92, %c0_93, %c0_94] : memref<8x8x128xf32, #tpu.memory_space<vmem>>, vector<8x8x128xf32>
    tpu.vector_store %arg8[%c0_92, %c0_93, %c0_94], %301 {strides = array<i32>} : memref<8x8x128xf32, #tpu.memory_space<vmem>>, vector<8x8x128xf32>,
    %c0_95 = arith.constant 0 : index
    %c0_96 = arith.constant 0 : index
    %303 = vector.load %arg9[%c0_95, %c0_96] : memref<8x128xf32, #tpu.memory_space<vmem>>, vector<8x128xf32>
    tpu.vector_store %arg9[%c0_95, %c0_96], %288 {strides = array<i32>} : memref<8x128xf32, #tpu.memory_space<vmem>>, vector<8x128xf32>,
    return
  }
  func.func @transform_0(%arg0: i32) -> (i32, i32, i32) {
    %c0_i32 = arith.constant 0 : i32
    %c0_i32_0 = arith.constant 0 : i32
    %c0_i32_1 = arith.constant 0 : i32
    return %c0_i32, %arg0, %c0_i32_0 : i32, i32, i32
  }
  func.func @transform_1(%arg0: i32) -> (i32, i32) {
    %c0_i32 = arith.constant 0 : i32
    %c0_i32_0 = arith.constant 0 : i32
    %c0_i32_1 = arith.constant 0 : i32
    return %c0_i32, %c0_i32_0 : i32, i32
  }
  func.func @transform_2(%arg0: i32) -> (i32, i32) {
    %c0_i32 = arith.constant 0 : i32
    %c0_i32_0 = arith.constant 0 : i32
    %c0_i32_1 = arith.constant 0 : i32
    return %c0_i32, %c0_i32_0 : i32, i32
  }
  func.func @transform_3(%arg0: i32) -> (i32, i32) {
    %c0_i32 = arith.constant 0 : i32
    %c0_i32_0 = arith.constant 0 : i32
    %c0_i32_1 = arith.constant 0 : i32
    return %c0_i32, %c0_i32_0 : i32, i32
  }
  func.func @transform_4(%arg0: i32) -> (i32, i32) {
    %c0_i32 = arith.constant 0 : i32
    %c0_i32_0 = arith.constant 0 : i32
    %c0_i32_1 = arith.constant 0 : i32
    return %c0_i32, %c0_i32_0 : i32, i32
  }
  func.func @transform_5(%arg0: i32) -> (i32, i32) {
    %c0_i32 = arith.constant 0 : i32
    %c0_i32_0 = arith.constant 0 : i32
    %c0_i32_1 = arith.constant 0 : i32
    return %c0_i32, %c0_i32_0 : i32, i32
  }
  func.func @transform_6(%arg0: i32) -> (i32, i32) {
    %c0_i32 = arith.constant 0 : i32
    %c0_i32_0 = arith.constant 0 : i32
    %c0_i32_1 = arith.constant 0 : i32
    return %c0_i32, %c0_i32_0 : i32, i32
  }
  func.func @transform_7(%arg0: i32) -> (i32, i32, i32) {
    %c0_i32 = arith.constant 0 : i32
    %c0_i32_0 = arith.constant 0 : i32
    %c0_i32_1 = arith.constant 0 : i32
    return %c0_i32, %arg0, %c0_i32_0 : i32, i32, i32
  }
  func.func @transform_8(%arg0: i32) -> (i32, i32) {
    %c0_i32 = arith.constant 0 : i32
    %c0_i32_0 = arith.constant 0 : i32
    return %arg0, %c0_i32 : i32, i32
  }
}

</mosaic_0001>

<llo_original>
// kernel: tpu_custom_call.1
$region0: #{tpu_custom_call.1}
  #allocation0 [shape = 'u32[]', space=smem, size = 0x4, offset = 0x4, fixed_abs, tag = 'smem constant byte address 0x4 - core index']
  #allocation1 [shape = 'u32[144,128]{1,0:T(1,128)}', space=vmem, size = 0x12000, scoped, tag = 'internal scratch']
  #allocation2 [shape = 'f32[8,8,384]{2,1,0:T(8,128)}', space=vmem, size = 0x18000, scoped, tag = 'scratch operand']
  #allocation3 [shape = 'f32[8,8,128]{2,1,0:T(8,128)}', space=vmem, size = 0x8000, scoped, tag = 'scratch operand']
  %s0 = inlined_call_operand.hbm [shape: bf16[8,8,128], index: 0, kind: input, shape index: {}]
  %s1 = inlined_call_operand.hbm [shape: bf16[128,384], index: 1, kind: input, shape index: {}]
  %s2 = inlined_call_operand.vmem [shape: f32[1,384], index: 2, kind: input, shape index: {}]
  %s3 = inlined_call_operand.hbm [shape: bf16[128,384], index: 3, kind: input, shape index: {}]
  %s4 = inlined_call_operand.vmem [shape: f32[1,128], index: 4, kind: input, shape index: {}]
  %s5 = inlined_call_operand.hbm [shape: bf16[128,128], index: 5, kind: input, shape index: {}]
  %s6 = inlined_call_operand.vmem [shape: f32[1,128], index: 6, kind: input, shape index: {}]
  %s7 = inlined_call_operand.hbm [shape: f32[8,8,128], index: 7, kind: output, shape index: {0}]
  %s8 = inlined_call_operand.hbm [shape: f32[8,128], index: 8, kind: output, shape index: {1}]
  %9 = xla_tuple %s7, %s8
  %s10 = sld [smem:[#allocation0]]
  $region62: #{tpu_custom_call.1} parent=0
    _
  %s12 = ssub.s32 1, %s10
  %s13 = scalar_select 0, %s12, %s10
  $region1: #{tpu_custom_call.1} parent=0
    #allocation4 [shape = 'u8[16384]{0}', space=vmem, size = 0x4000, scoped, tag = 'input window, operand 0, single buffered']
    #allocation5 [shape = 's32[1]{0}', space=sflag, size = 0x4, scoped, tag = 'scoped memory for tpu_custom_call.1']
    #allocation6 [shape = 's32[1]{0}', space=sflag, size = 0x4, scoped, tag = 'scoped memory for tpu_custom_call.1']
    #allocation7 [shape = 'u8[98304]{0}', space=vmem, size = 0x18000, scoped, tag = 'input window, operand 1, single buffered']
    #allocation8 [shape = 's32[1]{0}', space=sflag, size = 0x4, scoped, tag = 'scoped memory for tpu_custom_call.1']
    #allocation9 [shape = 'u8[98304]{0}', space=vmem, size = 0x18000, scoped, tag = 'input window, operand 3, single buffered']
    #allocation10 [shape = 'u8[32768]{0}', space=vmem, size = 0x8000, scoped, tag = 'input window, operand 5, single buffered']
    #allocation11 [shape = 's32[1]{0}', space=sflag, size = 0x4, scoped, tag = 'scoped memory for tpu_custom_call.1']
    #allocation12 [shape = 'u8[32768]{0}', space=vmem, size = 0x8000, scoped, tag = 'output window, operand 0, single buffered']
    #allocation13 [shape = 'u8[4096]{0}', space=vmem, size = 0x1000, scoped, tag = 'output window, operand 1, single buffered']
    #allocation14 [shape = 's32[1]{0}', space=sflag, size = 0x4, scoped, tag = 'scoped memory for tpu_custom_call.1']
    %14 = vsyncpa [#allocation5], 0
    %15 = vsyncpa [#allocation8], 0
    %16 = vsyncpa [#allocation11], 0
    %17 = vsyncpa [#allocation6], 0
    %18 = vsyncpa [#allocation14], 0
    // Predicated region
    $region2: #{tpu_custom_call.1} parent=1 // pred_check
      _
    $region3: #{tpu_custom_call.1} parent=1 // pred_check_branch
      %20 = sbr.rel (0) target = $region5
    $region4: #{tpu_custom_call.1} parent=1 // pred_region
      %s22 = ssub.s32 512, 512
      %23 = vsyncadd [#allocation5], %s22
      %s24 = sshll.u32 [#allocation4], 4
      %s25 = int_to_ptr.vmem [resolvable:$true] %s24
      %30 = dma.hbm_to_vmem [thread:$0]  %s0, 512, %s25, [#allocation5], 64, 64, 4
    $region5: #{tpu_custom_call.1} parent=1 // pred_fallthru
      _
    // Predicated region
    $region6: #{tpu_custom_call.1} parent=1 // pred_check
      _
    $region7: #{tpu_custom_call.1} parent=1 // pred_check_branch
      %32 = sbr.rel (0) target = $region9
    $region8: #{tpu_custom_call.1} parent=1 // pred_region
      %s34 = ssub.s32 3072, 3072
      %35 = vsyncadd [#allocation8], %s34
      %s36 = sshll.u32 [#allocation7], 4
      %s37 = int_to_ptr.vmem [resolvable:$true] %s36
      %42 = dma.hbm_to_vmem [thread:$0]  %s1, 3072, %s37, [#allocation8], 192, 192, 12
    $region9: #{tpu_custom_call.1} parent=1 // pred_fallthru
      _
    // Predicated region
    $region10: #{tpu_custom_call.1} parent=1 // pred_check
      _
    $region11: #{tpu_custom_call.1} parent=1 // pred_check_branch
      %44 = sbr.rel (0) target = $region13
    $region12: #{tpu_custom_call.1} parent=1 // pred_region
      _
    $region13: #{tpu_custom_call.1} parent=1 // pred_fallthru
      _
    // Predicated region
    $region14: #{tpu_custom_call.1} parent=1 // pred_check
      _
    $region15: #{tpu_custom_call.1} parent=1 // pred_check_branch
      %46 = sbr.rel (0) target = $region17
    $region16: #{tpu_custom_call.1} parent=1 // pred_region
      %s48 = ssub.s32 3072, 3072
      %49 = vsyncadd [#allocation8], %s48
      %s50 = sshll.u32 [#allocation9], 4
      %s51 = int_to_ptr.vmem [resolvable:$true] %s50
      %56 = dma.hbm_to_vmem [thread:$0]  %s3, 3072, %s51, [#allocation8], 192, 192, 12
    $region17: #{tpu_custom_call.1} parent=1 // pred_fallthru
      _
    // Predicated region
    $region18: #{tpu_custom_call.1} parent=1 // pred_check
      _
    $region19: #{tpu_custom_call.1} parent=1 // pred_check_branch
      %58 = sbr.rel (0) target = $region21
    $region20: #{tpu_custom_call.1} parent=1 // pred_region
      _
    $region21: #{tpu_custom_call.1} parent=1 // pred_fallthru
      _
    // Predicated region
    $region22: #{tpu_custom_call.1} parent=1 // pred_check
      _
    $region23: #{tpu_custom_call.1} parent=1 // pred_check_branch
      %60 = sbr.rel (0) target = $region25
    $region24: #{tpu_custom_call.1} parent=1 // pred_region
      %s62 = ssub.s32 1024, 1024
      %63 = vsyncadd [#allocation11], %s62
      %s64 = sshll.u32 [#allocation10], 4
      %s65 = int_to_ptr.vmem [resolvable:$true] %s64
      %70 = dma.hbm_to_vmem [thread:$0]  %s5, 1024, %s65, [#allocation11], 64, 64, 4
    $region25: #{tpu_custom_call.1} parent=1 // pred_fallthru
      _
    // Predicated region
    $region26: #{tpu_custom_call.1} parent=1 // pred_check
      _
    $region27: #{tpu_custom_call.1} parent=1 // pred_check_branch
      %72 = sbr.rel (0) target = $region29
    $region28: #{tpu_custom_call.1} parent=1 // pred_region
      _
    $region29: #{tpu_custom_call.1} parent=1 // pred_fallthru
      _
    // Predicated region
    $region30: #{tpu_custom_call.1} parent=1 // pred_check
      _
    $region31: #{tpu_custom_call.1} parent=1 // pred_check_branch
      %74 = sbr.rel (0) target = $region33
    $region32: #{tpu_custom_call.1} parent=1 // pred_region
      %75 = dma.done [#allocation5], 512
    $region33: #{tpu_custom_call.1} parent=1 // pred_fallthru
      _
    // Predicated region
    $region34: #{tpu_custom_call.1} parent=1 // pred_check
      _
    $region35: #{tpu_custom_call.1} parent=1 // pred_check_branch
      %77 = sbr.rel (0) target = $region37
    $region36: #{tpu_custom_call.1} parent=1 // pred_region
      %78 = dma.done [#allocation8], 3072
    $region37: #{tpu_custom_call.1} parent=1 // pred_fallthru
      _
    // Predicated region
    $region38: #{tpu_custom_call.1} parent=1 // pred_check
      _
    $region39: #{tpu_custom_call.1} parent=1 // pred_check_branch
      %80 = sbr.rel (0) target = $region41
    $region40: #{tpu_custom_call.1} parent=1 // pred_region
      %81 = dma.done [#allocation8], 3072
    $region41: #{tpu_custom_call.1} parent=1 // pred_fallthru
      _
    // Predicated region
    $region42: #{tpu_custom_call.1} parent=1 // pred_check
      _
    $region43: #{tpu_custom_call.1} parent=1 // pred_check_branch
      %83 = sbr.rel (0) target = $region45
    $region44: #{tpu_custom_call.1} parent=1 // pred_region
      %84 = dma.done [#allocation11], 1024
    $region45: #{tpu_custom_call.1} parent=1 // pred_fallthru
      _
    %v86 = vld [vmem:[#allocation4] sm:$0xf]
    %v87 = vld [vmem:[#allocation4 + $0x4] sm:$0xf]
    %v88 = vld [vmem:[#allocation4 + $0x8] sm:$0xf]
    %v89 = vld [vmem:[#allocation4 + $0xc] sm:$0xf]
    %v90 = vld [vmem:[#allocation4 + $0x10] sm:$0xf]
    %v91 = vld [vmem:[#allocation4 + $0x14] sm:$0xf]
    %v92 = vld [vmem:[#allocation4 + $0x18] sm:$0xf]
    %v93 = vld [vmem:[#allocation4 + $0x1c] sm:$0xf]
    %v94 = vld [vmem:[#allocation7] sm:$0xff]
    %v95 = vld [vmem:[#allocation7 + $0x8] sm:$0xf]
    %v96 = vld [vmem:[#allocation7 + $0xc] sm:$0xff]
    %v97 = vld [vmem:[#allocation7 + $0x14] sm:$0xf]
    %v98 = vld [vmem:[#allocation7 + $0x18] sm:$0xff]
    %v99 = vld [vmem:[#allocation7 + $0x20] sm:$0xf]
    %v100 = vld [vmem:[#allocation7 + $0x24] sm:$0xff]
    %v101 = vld [vmem:[#allocation7 + $0x2c] sm:$0xf]
    %v102 = vld [vmem:[#allocation7 + $0x30] sm:$0xff]
    %v103 = vld [vmem:[#allocation7 + $0x38] sm:$0xf]
    %v104 = vld [vmem:[#allocation7 + $0x3c] sm:$0xff]
    %v105 = vld [vmem:[#allocation7 + $0x44] sm:$0xf]
    %v106 = vld [vmem:[#allocation7 + $0x48] sm:$0xff]
    %v107 = vld [vmem:[#allocation7 + $0x50] sm:$0xf]
    %v108 = vld [vmem:[#allocation7 + $0x54] sm:$0xff]
    %v109 = vld [vmem:[#allocation7 + $0x5c] sm:$0xf]
    %v110 = vld [vmem:[#allocation7 + $0x60] sm:$0xff]
    %v111 = vld [vmem:[#allocation7 + $0x68] sm:$0xf]
    %v112 = vld [vmem:[#allocation7 + $0x6c] sm:$0xff]
    %v113 = vld [vmem:[#allocation7 + $0x74] sm:$0xf]
    %v114 = vld [vmem:[#allocation7 + $0x78] sm:$0xff]
    %v115 = vld [vmem:[#allocation7 + $0x80] sm:$0xf]
    %v116 = vld [vmem:[#allocation7 + $0x84] sm:$0xff]
    %v117 = vld [vmem:[#allocation7 + $0x8c] sm:$0xf]
    %v118 = vld [vmem:[#allocation7 + $0x90] sm:$0xff]
    %v119 = vld [vmem:[#allocation7 + $0x98] sm:$0xf]
    %v120 = vld [vmem:[#allocation7 + $0x9c] sm:$0xff]
    %v121 = vld [vmem:[#allocation7 + $0xa4] sm:$0xf]
    %v122 = vld [vmem:[#allocation7 + $0xa8] sm:$0xff]
    %v123 = vld [vmem:[#allocation7 + $0xb0] sm:$0xf]
    %v124 = vld [vmem:[#allocation7 + $0xb4] sm:$0xff]
    %v125 = vld [vmem:[#allocation7 + $0xbc] sm:$0xf]
    %v126 = vld [vmem:[%s2] sm:$0x7]
    %v128 = vlaneseq
    %v129 = vshrl.u32 %v128, 7
    %v130 = vsub.s32 0, %v129
    %v131 = vrot.slane %v126, %v130
    %v132 = vlaneseq
    %v133 = vshrl.u32 %v132, 7
    %v134 = vsub.s32 1, %v133
    %v135 = vrot.slane %v126, %v134
    %v136 = vlaneseq
    %v137 = vshrl.u32 %v136, 7
    %v138 = vsub.s32 2, %v137
    %v139 = vrot.slane %v126, %v138
    %v151 = vunpack.c.l.b16 %v86
    %v152 = vunpack.c.l.b16 %v87
    %v153 = vunpack.c.l.b16 %v88
    %v154 = vunpack.c.l.b16 %v89
    %v155 = vunpack.c.l.b16 %v90
    %v156 = vunpack.c.l.b16 %v91
    %v157 = vunpack.c.l.b16 %v92
    %v158 = vunpack.c.l.b16 %v93
    %v159 = vpack.c.b16 %v152, %v151
    %v160 = vpack.c.b16 %v154, %v153
    %v161 = vpack.c.b16 %v156, %v155
    %v162 = vpack.c.b16 %v158, %v157
    %v199 = vunpack.c.l.b16 %v94
    %v200 = vunpack.c.h.b16 %v94
    %v201 = vunpack.c.l.b16 %v95
    %v202 = vunpack.c.l.b16 %v96
    %v203 = vunpack.c.h.b16 %v96
    %v204 = vunpack.c.l.b16 %v97
    %v205 = vunpack.c.l.b16 %v98
    %v206 = vunpack.c.h.b16 %v98
    %v207 = vunpack.c.l.b16 %v99
    %v208 = vunpack.c.l.b16 %v100
    %v209 = vunpack.c.h.b16 %v100
    %v210 = vunpack.c.l.b16 %v101
    %v211 = vunpack.c.l.b16 %v102
    %v212 = vunpack.c.h.b16 %v102
    %v213 = vunpack.c.l.b16 %v103
    %v214 = vunpack.c.l.b16 %v104
    %v215 = vunpack.c.h.b16 %v104
    %v216 = vunpack.c.l.b16 %v105
    %v217 = vunpack.c.l.b16 %v106
    %v218 = vunpack.c.h.b16 %v106
    %v219 = vunpack.c.l.b16 %v107
    %v220 = vunpack.c.l.b16 %v108
    %v221 = vunpack.c.h.b16 %v108
    %v222 = vunpack.c.l.b16 %v109
    %v223 = vunpack.c.l.b16 %v110
    %v224 = vunpack.c.h.b16 %v110
    %v225 = vunpack.c.l.b16 %v111
    %v226 = vunpack.c.l.b16 %v112
    %v227 = vunpack.c.h.b16 %v112
    %v228 = vunpack.c.l.b16 %v113
    %v229 = vunpack.c.l.b16 %v114
    %v230 = vunpack.c.h.b16 %v114
    %v231 = vunpack.c.l.b16 %v115
    %v232 = vunpack.c.l.b16 %v116
    %v233 = vunpack.c.h.b16 %v116
    %v234 = vunpack.c.l.b16 %v117
    %v235 = vunpack.c.l.b16 %v118
    %v236 = vunpack.c.h.b16 %v118
    %v237 = vunpack.c.l.b16 %v119
    %v238 = vunpack.c.l.b16 %v120
    %v239 = vunpack.c.h.b16 %v120
    %v240 = vunpack.c.l.b16 %v121
    %v241 = vunpack.c.l.b16 %v122
    %v242 = vunpack.c.h.b16 %v122
    %v243 = vunpack.c.l.b16 %v123
    %v244 = vunpack.c.l.b16 %v124
    %v245 = vunpack.c.h.b16 %v124
    %v246 = vunpack.c.l.b16 %v125
    %v247 = vpack.c.b16 %v202, %v199
    %v248 = vpack.c.b16 %v203, %v200
    %v249 = vpack.c.b16 %v204, %v201
    %v250 = vpack.c.b16 %v208, %v205
    %v251 = vpack.c.b16 %v209, %v206
    %v252 = vpack.c.b16 %v210, %v207
    %v253 = vpack.c.b16 %v214, %v211
    %v254 = vpack.c.b16 %v215, %v212
    %v255 = vpack.c.b16 %v216, %v213
    %v256 = vpack.c.b16 %v220, %v217
    %v257 = vpack.c.b16 %v221, %v218
    %v258 = vpack.c.b16 %v222, %v219
    %v259 = vpack.c.b16 %v226, %v223
    %v260 = vpack.c.b16 %v227, %v224
    %v261 = vpack.c.b16 %v228, %v225
    %v262 = vpack.c.b16 %v232, %v229
    %v263 = vpack.c.b16 %v233, %v230
    %v264 = vpack.c.b16 %v234, %v231
    %v265 = vpack.c.b16 %v238, %v235
    %v266 = vpack.c.b16 %v239, %v236
    %v267 = vpack.c.b16 %v240, %v237
    %v268 = vpack.c.b16 %v244, %v241
    %v269 = vpack.c.b16 %v245, %v242
    %v270 = vpack.c.b16 %v246, %v243
    %295 = vmatprep.subr.bf16.mxu0 %v248
    %296 = vmatpush1.bf16.msra.mxu0 %v247
    %297 = vmatprep.subr.bf16.mxu0 %v251
    %298 = vmatpush1.bf16.msra.mxu0 %v250
    %299 = vmatprep.subr.bf16.mxu0 %v254
    %300 = vmatpush1.bf16.msra.mxu0 %v253
    %301 = vmatprep.subr.bf16.mxu0 %v257
    %302 = vmatpush1.bf16.msra.mxu0 %v256
    %303 = vmatprep.subr.bf16.mxu0 %v260
    %304 = vmatpush1.bf16.msra.mxu0 %v259
    %305 = vmatprep.subr.bf16.mxu0 %v263
    %306 = vmatpush1.bf16.msra.mxu0 %v262
    %307 = vmatprep.subr.bf16.mxu0 %v266
    %308 = vmatpush1.bf16.msra.mxu0 %v265
    %309 = vmatprep.subr.bf16.mxu0 %v269
    %310 = vmatpush1.bf16.msra.mxu0 %v268
    %311 = vmatprep.subr.bf16.mxu0 0
    %312 = vmatpush1.bf16.msra.mxu0 0
    %313 = vmatprep.subr.bf16.mxu0 0
    %314 = vmatpush1.bf16.msra.mxu0 0
    %315 = vmatprep.subr.bf16.mxu0 0
    %316 = vmatpush1.bf16.msra.mxu0 0
    %317 = vmatprep.subr.bf16.mxu0 0
    %318 = vmatpush1.bf16.msra.mxu0 0
    %319 = vmatprep.subr.bf16.mxu0 0
    %320 = vmatpush1.bf16.msra.mxu0 0
    %321 = vmatprep.subr.bf16.mxu0 0
    %322 = vmatpush1.bf16.msra.mxu0 0
    %323 = vmatprep.subr.bf16.mxu0 0
    %324 = vmatpush1.bf16.msra.mxu0 0
    %325 = vmatprep.subr.bf16.mxu0 0
    %326 = vmatpush1.bf16.msra.mxu0 0
    %327 = vmatprep.mubr.bf16.mxu0 0
    %328 = vmatmul.mubr.bf16.gmra.mrb[0].mxu0 %v159
    %v329 = vpop.f32.mrb[0].mxu0
    %v330 = vadd.f32 %v131, %v329
    %v331 = vpop.f32.mrb[0].mxu0
    %v332 = vadd.f32 %v135, %v331
    %v333 = vpop.f32.mrb[0].mxu0
    %v334 = vadd.f32 %v131, %v333
    %v335 = vpop.f32.mrb[0].mxu0
    %v336 = vadd.f32 %v135, %v335
    %337 = vmatprep.mubr.bf16.mxu0 0
    %338 = vmatmul.mubr.bf16.gmra.mrb[0].mxu0 %v160
    %v339 = vpop.f32.mrb[0].mxu0
    %v340 = vadd.f32 %v131, %v339
    %v341 = vpop.f32.mrb[0].mxu0
    %v342 = vadd.f32 %v135, %v341
    %v343 = vpop.f32.mrb[0].mxu0
    %v344 = vadd.f32 %v131, %v343
    %v345 = vpop.f32.mrb[0].mxu0
    %v346 = vadd.f32 %v135, %v345
    %347 = vmatprep.mubr.bf16.mxu0 0
    %348 = vmatmul.mubr.bf16.gmra.mrb[0].mxu0 %v161
    %v349 = vpop.f32.mrb[0].mxu0
    %v350 = vadd.f32 %v131, %v349
    %v351 = vpop.f32.mrb[0].mxu0
    %v352 = vadd.f32 %v135, %v351
    %v353 = vpop.f32.mrb[0].mxu0
    %v354 = vadd.f32 %v131, %v353
    %v355 = vpop.f32.mrb[0].mxu0
    %v356 = vadd.f32 %v135, %v355
    %357 = vmatprep.mubr.bf16.mxu0 0
    %358 = vmatmul.mubr.bf16.gmra.mrb[0].mxu0 %v162
    %v359 = vpop.f32.mrb[0].mxu0
    %v360 = vadd.f32 %v131, %v359
    %v361 = vpop.f32.mrb[0].mxu0
    %v362 = vadd.f32 %v135, %v361
    %v363 = vpop.f32.mrb[0].mxu0
    %v364 = vadd.f32 %v131, %v363
    %v365 = vpop.f32.mrb[0].mxu0
    %v366 = vadd.f32 %v135, %v365
    %367 = vdwg.mxu0
    %368 = vmatprep.subr.bf16.mxu0 0
    %369 = vmatpush1.bf16.msra.mxu0 %v249
    %370 = vmatprep.subr.bf16.mxu0 0
    %371 = vmatpush1.bf16.msra.mxu0 %v252
    %372 = vmatprep.subr.bf16.mxu0 0
    %373 = vmatpush1.bf16.msra.mxu0 %v255
    %374 = vmatprep.subr.bf16.mxu0 0
    %375 = vmatpush1.bf16.msra.mxu0 %v258
    %376 = vmatprep.subr.bf16.mxu0 0
    %377 = vmatpush1.bf16.msra.mxu0 %v261
    %378 = vmatprep.subr.bf16.mxu0 0
    %379 = vmatpush1.bf16.msra.mxu0 %v264
    %380 = vmatprep.subr.bf16.mxu0 0
    %381 = vmatpush1.bf16.msra.mxu0 %v267
    %382 = vmatprep.subr.bf16.mxu0 0
    %383 = vmatpush1.bf16.msra.mxu0 %v270
    %384 = vmatprep.subr.bf16.mxu0 0
    %385 = vmatpush1.bf16.msra.mxu0 0
    %386 = vmatprep.subr.bf16.mxu0 0
    %387 = vmatpush1.bf16.msra.mxu0 0
    %388 = vmatprep.subr.bf16.mxu0 0
    %389 = vmatpush1.bf16.msra.mxu0 0
    %390 = vmatprep.subr.bf16.mxu0 0
    %391 = vmatpush1.bf16.msra.mxu0 0
    %392 = vmatprep.subr.bf16.mxu0 0
    %393 = vmatpush1.bf16.msra.mxu0 0
    %394 = vmatprep.subr.bf16.mxu0 0
    %395 = vmatpush1.bf16.msra.mxu0 0
    %396 = vmatprep.subr.bf16.mxu0 0
    %397 = vmatpush1.bf16.msra.mxu0 0
    %398 = vmatprep.subr.bf16.mxu0 0
    %399 = vmatpush1.bf16.msra.mxu0 0
    %400 = vmatprep.mubr.bf16.mxu0 0
    %401 = vmatmul.mubr.bf16.gmra.mrb[0].mxu0 %v159
    %v402 = vpop.f32.mrb[0].mxu0
    %v403 = vadd.f32 %v139, %v402
    %v404 = vpop.f32.mrb[0].mxu0
    %v405 = vpop.f32.mrb[0].mxu0
    %v406 = vadd.f32 %v139, %v405
    %v407 = vpop.f32.mrb[0].mxu0
    %408 = vmatprep.mubr.bf16.mxu0 0
    %409 = vmatmul.mubr.bf16.gmra.mrb[0].mxu0 %v160
    %v410 = vpop.f32.mrb[0].mxu0
    %v411 = vadd.f32 %v139, %v410
    %v412 = vpop.f32.mrb[0].mxu0
    %v413 = vpop.f32.mrb[0].mxu0
    %v414 = vadd.f32 %v139, %v413
    %v415 = vpop.f32.mrb[0].mxu0
    %416 = vmatprep.mubr.bf16.mxu0 0
    %417 = vmatmul.mubr.bf16.gmra.mrb[0].mxu0 %v161
    %v418 = vpop.f32.mrb[0].mxu0
    %v419 = vadd.f32 %v139, %v418
    %v420 = vpop.f32.mrb[0].mxu0
    %v421 = vpop.f32.mrb[0].mxu0
    %v422 = vadd.f32 %v139, %v421
    %v423 = vpop.f32.mrb[0].mxu0
    %424 = vmatprep.mubr.bf16.mxu0 0
    %425 = vmatmul.mubr.bf16.gmra.mrb[0].mxu0 %v162
    %v426 = vpop.f32.mrb[0].mxu0
    %v427 = vadd.f32 %v139, %v426
    %v428 = vpop.f32.mrb[0].mxu0
    %v429 = vpop.f32.mrb[0].mxu0
    %v430 = vadd.f32 %v139, %v429
    %v431 = vpop.f32.mrb[0].mxu0
    %432 = vdwg.mxu0
    %433 = vst [vmem:[#allocation2] sm:$0xff] %v330
    %434 = vst [vmem:[#allocation2 + $0x8] sm:$0xff] %v332
    %435 = vst [vmem:[#allocation2 + $0x10] sm:$0xff] %v403
    %436 = vst [vmem:[#allocation2 + $0x18] sm:$0xff] %v334
    %437 = vst [vmem:[#allocation2 + $0x20] sm:$0xff] %v336
    %438 = vst [vmem:[#allocation2 + $0x28] sm:$0xff] %v406
    %439 = vst [vmem:[#allocation2 + $0x30] sm:$0xff] %v340
    %440 = vst [vmem:[#allocation2 + $0x38] sm:$0xff] %v342
    %441 = vst [vmem:[#allocation2 + $0x40] sm:$0xff] %v411
    %442 = vst [vmem:[#allocation2 + $0x48] sm:$0xff] %v344
    %443 = vst [vmem:[#allocation2 + $0x50] sm:$0xff] %v346
    %444 = vst [vmem:[#allocation2 + $0x58] sm:$0xff] %v414
    %445 = vst [vmem:[#allocation2 + $0x60] sm:$0xff] %v350
    %446 = vst [vmem:[#allocation2 + $0x68] sm:$0xff] %v352
    %447 = vst [vmem:[#allocation2 + $0x70] sm:$0xff] %v419
    %448 = vst [vmem:[#allocation2 + $0x78] sm:$0xff] %v354
    %449 = vst [vmem:[#allocation2 + $0x80] sm:$0xff] %v356
    %450 = vst [vmem:[#allocation2 + $0x88] sm:$0xff] %v422
    %451 = vst [vmem:[#allocation2 + $0x90] sm:$0xff] %v360
    %452 = vst [vmem:[#allocation2 + $0x98] sm:$0xff] %v362
    %453 = vst [vmem:[#allocation2 + $0xa0] sm:$0xff] %v427
    %454 = vst [vmem:[#allocation2 + $0xa8] sm:$0xff] %v364
    %455 = vst [vmem:[#allocation2 + $0xb0] sm:$0xff] %v366
    %456 = vst [vmem:[#allocation2 + $0xb8] sm:$0xff] %v430
    %v457 = vld [vmem:[%s4] sm:$0x1]
    %v459 = vlaneseq
    %v460 = vshrl.u32 %v459, 7
    %v461 = vsub.s32 0, %v460
    %v462 = vrot.slane %v457, %v461
    %v464 = vld [vmem:[#allocation2] sm:$0xff]
    %v465 = vld [vmem:[#allocation2 + $0x8] sm:$0xff]
    %v466 = vld [vmem:[#allocation2 + $0x10] sm:$0xff]
    %v467 = vld [vmem:[#allocation9] sm:$0xff]
    %v468 = vld [vmem:[#allocation9 + $0x8] sm:$0xf]
    %v469 = vld [vmem:[#allocation9 + $0xc] sm:$0xff]
    %v470 = vld [vmem:[#allocation9 + $0x14] sm:$0xf]
    %v471 = vld [vmem:[#allocation9 + $0x18] sm:$0xff]
    %v472 = vld [vmem:[#allocation9 + $0x20] sm:$0xf]
    %v473 = vld [vmem:[#allocation9 + $0x24] sm:$0xff]
    %v474 = vld [vmem:[#allocation9 + $0x2c] sm:$0xf]
    %v475 = vld [vmem:[#allocation9 + $0x30] sm:$0xff]
    %v476 = vld [vmem:[#allocation9 + $0x38] sm:$0xf]
    %v477 = vld [vmem:[#allocation9 + $0x3c] sm:$0xff]
    %v478 = vld [vmem:[#allocation9 + $0x44] sm:$0xf]
    %v479 = vld [vmem:[#allocation9 + $0x48] sm:$0xff]
    %v480 = vld [vmem:[#allocation9 + $0x50] sm:$0xf]
    %v481 = vld [vmem:[#allocation9 + $0x54] sm:$0xff]
    %v482 = vld [vmem:[#allocation9 + $0x5c] sm:$0xf]
    %v483 = vld [vmem:[#allocation9 + $0x60] sm:$0xff]
    %v484 = vld [vmem:[#allocation9 + $0x68] sm:$0xf]
    %v485 = vld [vmem:[#allocation9 + $0x6c] sm:$0xff]
    %v486 = vld [vmem:[#allocation9 + $0x74] sm:$0xf]
    %v487 = vld [vmem:[#allocation9 + $0x78] sm:$0xff]
    %v488 = vld [vmem:[#allocation9 + $0x80] sm:$0xf]
    %v489 = vld [vmem:[#allocation9 + $0x84] sm:$0xff]
    %v490 = vld [vmem:[#allocation9 + $0x8c] sm:$0xf]
    %v491 = vld [vmem:[#allocation9 + $0x90] sm:$0xff]
    %v492 = vld [vmem:[#allocation9 + $0x98] sm:$0xf]
    %v493 = vld [vmem:[#allocation9 + $0x9c] sm:$0xff]
    %v494 = vld [vmem:[#allocation9 + $0xa4] sm:$0xf]
    %v495 = vld [vmem:[#allocation9 + $0xa8] sm:$0xff]
    %v496 = vld [vmem:[#allocation9 + $0xb0] sm:$0xf]
    %v497 = vld [vmem:[#allocation9 + $0xb4] sm:$0xff]
    %v498 = vld [vmem:[#allocation9 + $0xbc] sm:$0xf]
    %v531 = vunpack.c.l.b16 %v467
    %v532 = vunpack.c.h.b16 %v467
    %v533 = vunpack.c.l.b16 %v468
    %v534 = vunpack.c.l.b16 %v469
    %v535 = vunpack.c.h.b16 %v469
    %v536 = vunpack.c.l.b16 %v470
    %v537 = vunpack.c.l.b16 %v471
    %v538 = vunpack.c.h.b16 %v471
    %v539 = vunpack.c.l.b16 %v472
    %v540 = vunpack.c.l.b16 %v473
    %v541 = vunpack.c.h.b16 %v473
    %v542 = vunpack.c.l.b16 %v474
    %v543 = vunpack.c.l.b16 %v475
    %v544 = vunpack.c.h.b16 %v475
    %v545 = vunpack.c.l.b16 %v476
    %v546 = vunpack.c.l.b16 %v477
    %v547 = vunpack.c.h.b16 %v477
    %v548 = vunpack.c.l.b16 %v478
    %v549 = vunpack.c.l.b16 %v479
    %v550 = vunpack.c.h.b16 %v479
    %v551 = vunpack.c.l.b16 %v480
    %v552 = vunpack.c.l.b16 %v481
    %v553 = vunpack.c.h.b16 %v481
    %v554 = vunpack.c.l.b16 %v482
    %v555 = vunpack.c.l.b16 %v483
    %v556 = vunpack.c.h.b16 %v483
    %v557 = vunpack.c.l.b16 %v484
    %v558 = vunpack.c.l.b16 %v485
    %v559 = vunpack.c.h.b16 %v485
    %v560 = vunpack.c.l.b16 %v486
    %v561 = vunpack.c.l.b16 %v487
    %v562 = vunpack.c.h.b16 %v487
    %v563 = vunpack.c.l.b16 %v488
    %v564 = vunpack.c.l.b16 %v489
    %v565 = vunpack.c.h.b16 %v489
    %v566 = vunpack.c.l.b16 %v490
    %v567 = vunpack.c.l.b16 %v491
    %v568 = vunpack.c.h.b16 %v491
    %v569 = vunpack.c.l.b16 %v492
    %v570 = vunpack.c.l.b16 %v493
    %v571 = vunpack.c.h.b16 %v493
    %v572 = vunpack.c.l.b16 %v494
    %v573 = vunpack.c.l.b16 %v495
    %v574 = vunpack.c.h.b16 %v495
    %v575 = vunpack.c.l.b16 %v496
    %v576 = vunpack.c.l.b16 %v497
    %v577 = vunpack.c.h.b16 %v497
    %v578 = vunpack.c.l.b16 %v498
    %v579 = vpack.c.b16 %v534, %v531
    %v580 = vpack.c.b16 %v535, %v532
    %v581 = vpack.c.b16 %v536, %v533
    %v582 = vpack.c.b16 %v540, %v537
    %v583 = vpack.c.b16 %v541, %v538
    %v584 = vpack.c.b16 %v542, %v539
    %v585 = vpack.c.b16 %v546, %v543
    %v586 = vpack.c.b16 %v547, %v544
    %v587 = vpack.c.b16 %v548, %v545
    %v588 = vpack.c.b16 %v552, %v549
    %v589 = vpack.c.b16 %v553, %v550
    %v590 = vpack.c.b16 %v554, %v551
    %v591 = vpack.c.b16 %v558, %v555
    %v592 = vpack.c.b16 %v559, %v556
    %v593 = vpack.c.b16 %v560, %v557
    %v594 = vpack.c.b16 %v564, %v561
    %v595 = vpack.c.b16 %v565, %v562
    %v596 = vpack.c.b16 %v566, %v563
    %v597 = vpack.c.b16 %v570, %v567
    %v598 = vpack.c.b16 %v571, %v568
    %v599 = vpack.c.b16 %v572, %v569
    %v600 = vpack.c.b16 %v576, %v573
    %v601 = vpack.c.b16 %v577, %v574
    %v602 = vpack.c.b16 %v578, %v575
    %627 = vmatprep.subr.bf16.mxu0 %v580
    %628 = vmatpush1.bf16.msra.mxu0 %v579
    %629 = vmatprep.subr.bf16.mxu0 %v583
    %630 = vmatpush1.bf16.msra.mxu0 %v582
    %631 = vmatprep.subr.bf16.mxu0 %v586
    %632 = vmatpush1.bf16.msra.mxu0 %v585
    %633 = vmatprep.subr.bf16.mxu0 %v589
    %634 = vmatpush1.bf16.msra.mxu0 %v588
    %635 = vmatprep.subr.bf16.mxu0 %v592
    %636 = vmatpush1.bf16.msra.mxu0 %v591
    %637 = vmatprep.subr.bf16.mxu0 %v595
    %638 = vmatpush1.bf16.msra.mxu0 %v594
    %639 = vmatprep.subr.bf16.mxu0 %v598
    %640 = vmatpush1.bf16.msra.mxu0 %v597
    %641 = vmatprep.subr.bf16.mxu0 %v601
    %642 = vmatpush1.bf16.msra.mxu0 %v600
    %643 = vmatprep.subr.bf16.mxu0 0
    %644 = vmatpush1.bf16.msra.mxu0 0
    %645 = vmatprep.subr.bf16.mxu0 0
    %646 = vmatpush1.bf16.msra.mxu0 0
    %647 = vmatprep.subr.bf16.mxu0 0
    %648 = vmatpush1.bf16.msra.mxu0 0
    %649 = vmatprep.subr.bf16.mxu0 0
    %650 = vmatpush1.bf16.msra.mxu0 0
    %651 = vmatprep.subr.bf16.mxu0 0
    %652 = vmatpush1.bf16.msra.mxu0 0
    %653 = vmatprep.subr.bf16.mxu0 0
    %654 = vmatpush1.bf16.msra.mxu0 0
    %655 = vmatprep.subr.bf16.mxu0 0
    %656 = vmatpush1.bf16.msra.mxu0 0
    %657 = vmatprep.subr.bf16.mxu0 0
    %658 = vmatpush1.bf16.msra.mxu0 0
    %659 = vmatprep.mubr.bf16.mxu0 0
    %660 = vmatmul.mubr.bf16.gmra.mrb[0].mxu0 0
    %v661 = vpop.f32.mrb[0].mxu0
    %v662 = vadd.f32 0.0, %v661
    %v663 = vpop.f32.mrb[0].mxu0
    %v664 = vadd.f32 0.0, %v663
    %v665 = vpop.f32.mrb[0].mxu0
    %v666 = vpop.f32.mrb[0].mxu0
    %667 = vdwg.mxu0
    %668 = vmatprep.subr.bf16.mxu0 0
    %669 = vmatpush1.bf16.msra.mxu0 %v581
    %670 = vmatprep.subr.bf16.mxu0 0
    %671 = vmatpush1.bf16.msra.mxu0 %v584
    %672 = vmatprep.subr.bf16.mxu0 0
    %673 = vmatpush1.bf16.msra.mxu0 %v587
    %674 = vmatprep.subr.bf16.mxu0 0
    %675 = vmatpush1.bf16.msra.mxu0 %v590
    %676 = vmatprep.subr.bf16.mxu0 0
    %677 = vmatpush1.bf16.msra.mxu0 %v593
    %678 = vmatprep.subr.bf16.mxu0 0
    %679 = vmatpush1.bf16.msra.mxu0 %v596
    %680 = vmatprep.subr.bf16.mxu0 0
    %681 = vmatpush1.bf16.msra.mxu0 %v599
    %682 = vmatprep.subr.bf16.mxu0 0
    %683 = vmatpush1.bf16.msra.mxu0 %v602
    %684 = vmatprep.subr.bf16.mxu0 0
    %685 = vmatpush1.bf16.msra.mxu0 0
    %686 = vmatprep.subr.bf16.mxu0 0
    %687 = vmatpush1.bf16.msra.mxu0 0
    %688 = vmatprep.subr.bf16.mxu0 0
    %689 = vmatpush1.bf16.msra.mxu0 0
    %690 = vmatprep.subr.bf16.mxu0 0
    %691 = vmatpush1.bf16.msra.mxu0 0
    %692 = vmatprep.subr.bf16.mxu0 0
    %693 = vmatpush1.bf16.msra.mxu0 0
    %694 = vmatprep.subr.bf16.mxu0 0
    %695 = vmatpush1.bf16.msra.mxu0 0
    %696 = vmatprep.subr.bf16.mxu0 0
    %697 = vmatpush1.bf16.msra.mxu0 0
    %698 = vmatprep.subr.bf16.mxu0 0
    %699 = vmatpush1.bf16.msra.mxu0 0
    %700 = vmatprep.mubr.bf16.mxu0 0
    %701 = vmatmul.mubr.bf16.gmra.mrb[0].mxu0 0
    %v702 = vpop.f32.mrb[0].mxu0
    %v703 = vadd.f32 0.0, %v702
    %v704 = vpop.f32.mrb[0].mxu0
    %v705 = vpop.f32.mrb[0].mxu0
    %v706 = vpop.f32.mrb[0].mxu0
    %707 = vdwg.mxu0
    %v708 = vadd.f32 %v464, %v662
    %v709 = vxor.u32 %v708, 2147483648
    %v710 = vmul.f32 %v709, 1.442695
    %v711 = vpow.pop %v710
    %v712 = vadd.f32 %v711, 1.0
    %v713 = vrcp.pop %v712
    %v714 = vmul.f32 1.0, %v713
    %v715 = vadd.f32 %v465, %v664
    %v716 = vxor.u32 %v715, 2147483648
    %v717 = vmul.f32 %v716, 1.442695
    %v718 = vpow.pop %v717
    %v719 = vadd.f32 %v718, 1.0
    %v720 = vrcp.pop %v719
    %v721 = vmul.f32 1.0, %v720
    %v722 = vadd.f32 %v703, %v462
    %v723 = vmul.f32 %v714, %v722
    %v724 = vadd.f32 %v466, %v723
    %v725 = vtanh.pop %v724
    %v726 = vsub.f32 0.0, %v725
    %v727 = vmul.f32 %v721, %v726
    %v728 = vadd.f32 %v725, %v727
    %729 = vst [vmem:[#allocation3] sm:$0xff] %v728
    %s730 = scalar_lea.vmem [#allocation2], 24
    %v731 = vld [vmem:[%s730] sm:$0xff]
    %v732 = vld [vmem:[%s730 + $0x8] sm:$0xff]
    %v733 = vld [vmem:[%s730 + $0x10] sm:$0xff]
    %v734 = vpack.c.bf16 %v728, %v728
    %v735 = vld [vmem:[#allocation9] sm:$0xff]
    %v736 = vld [vmem:[#allocation9 + $0x8] sm:$0xf]
    %v737 = vld [vmem:[#allocation9 + $0xc] sm:$0xff]
    %v738 = vld [vmem:[#allocation9 + $0x14] sm:$0xf]
    %v739 = vld [vmem:[#allocation9 + $0x18] sm:$0xff]
    %v740 = vld [vmem:[#allocation9 + $0x20] sm:$0xf]
    %v741 = vld [vmem:[#allocation9 + $0x24] sm:$0xff]
    %v742 = vld [vmem:[#allocation9 + $0x2c] sm:$0xf]
    %v743 = vld [vmem:[#allocation9 + $0x30] sm:$0xff]
    %v744 = vld [vmem:[#allocation9 + $0x38] sm:$0xf]
    %v745 = vld [vmem:[#allocation9 + $0x3c] sm:$0xff]
    %v746 = vld [vmem:[#allocation9 + $0x44] sm:$0xf]
    %v747 = vld [vmem:[#allocation9 + $0x48] sm:$0xff]
    %v748 = vld [vmem:[#allocation9 + $0x50] sm:$0xf]
    %v749 = vld [vmem:[#allocation9 + $0x54] sm:$0xff]
    %v750 = vld [vmem:[#allocation9 + $0x5c] sm:$0xf]
    %v751 = vld [vmem:[#allocation9 + $0x60] sm:$0xff]
    %v752 = vld [vmem:[#allocation9 + $0x68] sm:$0xf]
    %v753 = vld [vmem:[#allocation9 + $0x6c] sm:$0xff]
    %v754 = vld [vmem:[#allocation9 + $0x74] sm:$0xf]
    %v755 = vld [vmem:[#allocation9 + $0x78] sm:$0xff]
    %v756 = vld [vmem:[#allocation9 + $0x80] sm:$0xf]
    %v757 = vld [vmem:[#allocation9 + $0x84] sm:$0xff]
    %v758 = vld [vmem:[#allocation9 + $0x8c] sm:$0xf]
    %v759 = vld [vmem:[#allocation9 + $0x90] sm:$0xff]
    %v760 = vld [vmem:[#allocation9 + $0x98] sm:$0xf]
    %v761 = vld [vmem:[#allocation9 + $0x9c] sm:$0xff]
    %v762 = vld [vmem:[#allocation9 + $0xa4] sm:$0xf]
    %v763 = vld [vmem:[#allocation9 + $0xa8] sm:$0xff]
    %v764 = vld [vmem:[#allocation9 + $0xb0] sm:$0xf]
    %v765 = vld [vmem:[#allocation9 + $0xb4] sm:$0xff]
    %v766 = vld [vmem:[#allocation9 + $0xbc] sm:$0xf]
    %v799 = vunpack.c.l.b16 %v735
    %v800 = vunpack.c.h.b16 %v735
    %v801 = vunpack.c.l.b16 %v736
    %v802 = vunpack.c.l.b16 %v737
    %v803 = vunpack.c.h.b16 %v737
    %v804 = vunpack.c.l.b16 %v738
    %v805 = vunpack.c.l.b16 %v739
    %v806 = vunpack.c.h.b16 %v739
    %v807 = vunpack.c.l.b16 %v740
    %v808 = vunpack.c.l.b16 %v741
    %v809 = vunpack.c.h.b16 %v741
    %v810 = vunpack.c.l.b16 %v742
    %v811 = vunpack.c.l.b16 %v743
    %v812 = vunpack.c.h.b16 %v743
    %v813 = vunpack.c.l.b16 %v744
    %v814 = vunpack.c.l.b16 %v745
    %v815 = vunpack.c.h.b16 %v745
    %v816 = vunpack.c.l.b16 %v746
    %v817 = vunpack.c.l.b16 %v747
    %v818 = vunpack.c.h.b16 %v747
    %v819 = vunpack.c.l.b16 %v748
    %v820 = vunpack.c.l.b16 %v749
    %v821 = vunpack.c.h.b16 %v749
    %v822 = vunpack.c.l.b16 %v750
    %v823 = vunpack.c.l.b16 %v751
    %v824 = vunpack.c.h.b16 %v751
    %v825 = vunpack.c.l.b16 %v752
    %v826 = vunpack.c.l.b16 %v753
    %v827 = vunpack.c.h.b16 %v753
    %v828 = vunpack.c.l.b16 %v754
    %v829 = vunpack.c.l.b16 %v755
    %v830 = vunpack.c.h.b16 %v755
    %v831 = vunpack.c.l.b16 %v756
    %v832 = vunpack.c.l.b16 %v757
    %v833 = vunpack.c.h.b16 %v757
    %v834 = vunpack.c.l.b16 %v758
    %v835 = vunpack.c.l.b16 %v759
    %v836 = vunpack.c.h.b16 %v759
    %v837 = vunpack.c.l.b16 %v760
    %v838 = vunpack.c.l.b16 %v761
    %v839 = vunpack.c.h.b16 %v761
    %v840 = vunpack.c.l.b16 %v762
    %v841 = vunpack.c.l.b16 %v763
    %v842 = vunpack.c.h.b16 %v763
    %v843 = vunpack.c.l.b16 %v764
    %v844 = vunpack.c.l.b16 %v765
    %v845 = vunpack.c.h.b16 %v765
    %v846 = vunpack.c.l.b16 %v766
    %v847 = vpack.c.b16 %v802, %v799
    %v848 = vpack.c.b16 %v803, %v800
    %v849 = vpack.c.b16 %v804, %v801
    %v850 = vpack.c.b16 %v808, %v805
    %v851 = vpack.c.b16 %v809, %v806
    %v852 = vpack.c.b16 %v810, %v807
    %v853 = vpack.c.b16 %v814, %v811
    %v854 = vpack.c.b16 %v815, %v812
    %v855 = vpack.c.b16 %v816, %v813
    %v856 = vpack.c.b16 %v820, %v817
    %v857 = vpack.c.b16 %v821, %v818
    %v858 = vpack.c.b16 %v822, %v819
    %v859 = vpack.c.b16 %v826, %v823
    %v860 = vpack.c.b16 %v827, %v824
    %v861 = vpack.c.b16 %v828, %v825
    %v862 = vpack.c.b16 %v832, %v829
    %v863 = vpack.c.b16 %v833, %v830
    %v864 = vpack.c.b16 %v834, %v831
    %v865 = vpack.c.b16 %v838, %v835
    %v866 = vpack.c.b16 %v839, %v836
    %v867 = vpack.c.b16 %v840, %v837
    %v868 = vpack.c.b16 %v844, %v841
    %v869 = vpack.c.b16 %v845, %v842
    %v870 = vpack.c.b16 %v846, %v843
    %895 = vmatprep.subr.bf16.mxu0 %v848
    %896 = vmatpush1.bf16.msra.mxu0 %v847
    %897 = vmatprep.subr.bf16.mxu0 %v851
    %898 = vmatpush1.bf16.msra.mxu0 %v850
    %899 = vmatprep.subr.bf16.mxu0 %v854
    %900 = vmatpush1.bf16.msra.mxu0 %v853
    %901 = vmatprep.subr.bf16.mxu0 %v857
    %902 = vmatpush1.bf16.msra.mxu0 %v856
    %903 = vmatprep.subr.bf16.mxu0 %v860
    %904 = vmatpush1.bf16.msra.mxu0 %v859
    %905 = vmatprep.subr.bf16.mxu0 %v863
    %906 = vmatpush1.bf16.msra.mxu0 %v862
    %907 = vmatprep.subr.bf16.mxu0 %v866
    %908 = vmatpush1.bf16.msra.mxu0 %v865
    %909 = vmatprep.subr.bf16.mxu0 %v869
    %910 = vmatpush1.bf16.msra.mxu0 %v868
    %911 = vmatprep.subr.bf16.mxu0 0
    %912 = vmatpush1.bf16.msra.mxu0 0
    %913 = vmatprep.subr.bf16.mxu0 0
    %914 = vmatpush1.bf16.msra.mxu0 0
    %915 = vmatprep.subr.bf16.mxu0 0
    %916 = vmatpush1.bf16.msra.mxu0 0
    %917 = vmatprep.subr.bf16.mxu0 0
    %918 = vmatpush1.bf16.msra.mxu0 0
    %919 = vmatprep.subr.bf16.mxu0 0
    %920 = vmatpush1.bf16.msra.mxu0 0
    %921 = vmatprep.subr.bf16.mxu0 0
    %922 = vmatpush1.bf16.msra.mxu0 0
    %923 = vmatprep.subr.bf16.mxu0 0
    %924 = vmatpush1.bf16.msra.mxu0 0
    %925 = vmatprep.subr.bf16.mxu0 0
    %926 = vmatpush1.bf16.msra.mxu0 0
    %927 = vmatprep.mubr.bf16.mxu0 0
    %928 = vmatmul.mubr.bf16.gmra.mrb[0].mxu0 %v734
    %v929 = vpop.f32.mrb[0].mxu0
    %v930 = vadd.f32 0.0, %v929
    %v931 = vpop.f32.mrb[0].mxu0
    %v932 = vadd.f32 0.0, %v931
    %v933 = vpop.f32.mrb[0].mxu0
    %v934 = vpop.f32.mrb[0].mxu0
    %935 = vdwg.mxu0
    %936 = vmatprep.subr.bf16.mxu0 0
    %937 = vmatpush1.bf16.msra.mxu0 %v849
    %938 = vmatprep.subr.bf16.mxu0 0
    %939 = vmatpush1.bf16.msra.mxu0 %v852
    %940 = vmatprep.subr.bf16.mxu0 0
    %941 = vmatpush1.bf16.msra.mxu0 %v855
    %942 = vmatprep.subr.bf16.mxu0 0
    %943 = vmatpush1.bf16.msra.mxu0 %v858
    %944 = vmatprep.subr.bf16.mxu0 0
    %945 = vmatpush1.bf16.msra.mxu0 %v861
    %946 = vmatprep.subr.bf16.mxu0 0
    %947 = vmatpush1.bf16.msra.mxu0 %v864
    %948 = vmatprep.subr.bf16.mxu0 0
    %949 = vmatpush1.bf16.msra.mxu0 %v867
    %950 = vmatprep.subr.bf16.mxu0 0
    %951 = vmatpush1.bf16.msra.mxu0 %v870
    %952 = vmatprep.subr.bf16.mxu0 0
    %953 = vmatpush1.bf16.msra.mxu0 0
    %954 = vmatprep.subr.bf16.mxu0 0
    %955 = vmatpush1.bf16.msra.mxu0 0
    %956 = vmatprep.subr.bf16.mxu0 0
    %957 = vmatpush1.bf16.msra.mxu0 0
    %958 = vmatprep.subr.bf16.mxu0 0
    %959 = vmatpush1.bf16.msra.mxu0 0
    %960 = vmatprep.subr.bf16.mxu0 0
    %961 = vmatpush1.bf16.msra.mxu0 0
    %962 = vmatprep.subr.bf16.mxu0 0
    %963 = vmatpush1.bf16.msra.mxu0 0
    %964 = vmatprep.subr.bf16.mxu0 0
    %965 = vmatpush1.bf16.msra.mxu0 0
    %966 = vmatprep.subr.bf16.mxu0 0
    %967 = vmatpush1.bf16.msra.mxu0 0
    %968 = vmatprep.mubr.bf16.mxu0 0
    %969 = vmatmul.mubr.bf16.gmra.mrb[0].mxu0 %v734
    %v970 = vpop.f32.mrb[0].mxu0
    %v971 = vadd.f32 0.0, %v970
    %v972 = vpop.f32.mrb[0].mxu0
    %v973 = vpop.f32.mrb[0].mxu0
    %v974 = vpop.f32.mrb[0].mxu0
    %975 = vdwg.mxu0
    %v976 = vadd.f32 %v731, %v930
    %v977 = vxor.u32 %v976, 2147483648
    %v978 = vmul.f32 %v977, 1.442695
    %v979 = vpow.pop %v978
    %v980 = vadd.f32 %v979, 1.0
    %v981 = vrcp.pop %v980
    %v982 = vmul.f32 1.0, %v981
    %v983 = vadd.f32 %v732, %v932
    %v984 = vxor.u32 %v983, 2147483648
    %v985 = vmul.f32 %v984, 1.442695
    %v986 = vpow.pop %v985
    %v987 = vadd.f32 %v986, 1.0
    %v988 = vrcp.pop %v987
    %v989 = vmul.f32 1.0, %v988
    %v990 = vadd.f32 %v971, %v462
    %v991 = vmul.f32 %v982, %v990
    %v992 = vadd.f32 %v733, %v991
    %v993 = vtanh.pop %v992
    %v994 = vsub.f32 %v728, %v993
    %v995 = vmul.f32 %v989, %v994
    %v996 = vadd.f32 %v993, %v995
    %s997 = scalar_lea.vmem [#allocation3], 8
    %998 = vst [vmem:[%s997] sm:$0xff] %v996
    %s999 = scalar_lea.vmem [#allocation2], 48
    %v1000 = vld [vmem:[%s999] sm:$0xff]
    %v1001 = vld [vmem:[%s999 + $0x8] sm:$0xff]
    %v1002 = vld [vmem:[%s999 + $0x10] sm:$0xff]
    %v1003 = vpack.c.bf16 %v996, %v996
    %v1004 = vld [vmem:[#allocation9] sm:$0xff]
    %v1005 = vld [vmem:[#allocation9 + $0x8] sm:$0xf]
    %v1006 = vld [vmem:[#allocation9 + $0xc] sm:$0xff]
    %v1007 = vld [vmem:[#allocation9 + $0x14] sm:$0xf]
    %v1008 = vld [vmem:[#allocation9 + $0x18] sm:$0xff]
    %v1009 = vld [vmem:[#allocation9 + $0x20] sm:$0xf]
    %v1010 = vld [vmem:[#allocation9 + $0x24] sm:$0xff]
    %v1011 = vld [vmem:[#allocation9 + $0x2c] sm:$0xf]
    %v1012 = vld [vmem:[#allocation9 + $0x30] sm:$0xff]
    %v1013 = vld [vmem:[#allocation9 + $0x38] sm:$0xf]
    %v1014 = vld [vmem:[#allocation9 + $0x3c] sm:$0xff]
    %v1015 = vld [vmem:[#allocation9 + $0x44] sm:$0xf]
    %v1016 = vld [vmem:[#allocation9 + $0x48] sm:$0xff]
    %v1017 = vld [vmem:[#allocation9 + $0x50] sm:$0xf]
    %v1018 = vld [vmem:[#allocation9 + $0x54] sm:$0xff]
    %v1019 = vld [vmem:[#allocation9 + $0x5c] sm:$0xf]
    %v1020 = vld [vmem:[#allocation9 + $0x60] sm:$0xff]
    %v1021 = vld [vmem:[#allocation9 + $0x68] sm:$0xf]
    %v1022 = vld [vmem:[#allocation9 + $0x6c] sm:$0xff]
    %v1023 = vld [vmem:[#allocation9 + $0x74] sm:$0xf]
    %v1024 = vld [vmem:[#allocation9 + $0x78] sm:$0xff]
    %v1025 = vld [vmem:[#allocation9 + $0x80] sm:$0xf]
    %v1026 = vld [vmem:[#allocation9 + $0x84] sm:$0xff]
    %v1027 = vld [vmem:[#allocation9 + $0x8c] sm:$0xf]
    %v1028 = vld [vmem:[#allocation9 + $0x90] sm:$0xff]
    %v1029 = vld [vmem:[#allocation9 + $0x98] sm:$0xf]
    %v1030 = vld [vmem:[#allocation9 + $0x9c] sm:$0xff]
    %v1031 = vld [vmem:[#allocation9 + $0xa4] sm:$0xf]
    %v1032 = vld [vmem:[#allocation9 + $0xa8] sm:$0xff]
    %v1033 = vld [vmem:[#allocation9 + $0xb0] sm:$0xf]
    %v1034 = vld [vmem:[#allocation9 + $0xb4] sm:$0xff]
    %v1035 = vld [vmem:[#allocation9 + $0xbc] sm:$0xf]
    %v1068 = vunpack.c.l.b16 %v1004
    %v1069 = vunpack.c.h.b16 %v1004
    %v1070 = vunpack.c.l.b16 %v1005
    %v1071 = vunpack.c.l.b16 %v1006
    %v1072 = vunpack.c.h.b16 %v1006
    %v1073 = vunpack.c.l.b16 %v1007
    %v1074 = vunpack.c.l.b16 %v1008
    %v1075 = vunpack.c.h.b16 %v1008
    %v1076 = vunpack.c.l.b16 %v1009
    %v1077 = vunpack.c.l.b16 %v1010
    %v1078 = vunpack.c.h.b16 %v1010
    %v1079 = vunpack.c.l.b16 %v1011
    %v1080 = vunpack.c.l.b16 %v1012
    %v1081 = vunpack.c.h.b16 %v1012
    %v1082 = vunpack.c.l.b16 %v1013
    %v1083 = vunpack.c.l.b16 %v1014
    %v1084 = vunpack.c.h.b16 %v1014
    %v1085 = vunpack.c.l.b16 %v1015
    %v1086 = vunpack.c.l.b16 %v1016
    %v1087 = vunpack.c.h.b16 %v1016
    %v1088 = vunpack.c.l.b16 %v1017
    %v1089 = vunpack.c.l.b16 %v1018
    %v1090 = vunpack.c.h.b16 %v1018
    %v1091 = vunpack.c.l.b16 %v1019
    %v1092 = vunpack.c.l.b16 %v1020
    %v1093 = vunpack.c.h.b16 %v1020
    %v1094 = vunpack.c.l.b16 %v1021
    %v1095 = vunpack.c.l.b16 %v1022
    %v1096 = vunpack.c.h.b16 %v1022
    %v1097 = vunpack.c.l.b16 %v1023
    %v1098 = vunpack.c.l.b16 %v1024
    %v1099 = vunpack.c.h.b16 %v1024
    %v1100 = vunpack.c.l.b16 %v1025
    %v1101 = vunpack.c.l.b16 %v1026
    %v1102 = vunpack.c.h.b16 %v1026
    %v1103 = vunpack.c.l.b16 %v1027
    %v1104 = vunpack.c.l.b16 %v1028
    %v1105 = vunpack.c.h.b16 %v1028
    %v1106 = vunpack.c.l.b16 %v1029
    %v1107 = vunpack.c.l.b16 %v1030
    %v1108 = vunpack.c.h.b16 %v1030
    %v1109 = vunpack.c.l.b16 %v1031
    %v1110 = vunpack.c.l.b16 %v1032
    %v1111 = vunpack.c.h.b16 %v1032
    %v1112 = vunpack.c.l.b16 %v1033
    %v1113 = vunpack.c.l.b16 %v1034
    %v1114 = vunpack.c.h.b16 %v1034
    %v1115 = vunpack.c.l.b16 %v1035
    %v1116 = vpack.c.b16 %v1071, %v1068
    %v1117 = vpack.c.b16 %v1072, %v1069
    %v1118 = vpack.c.b16 %v1073, %v1070
    %v1119 = vpack.c.b16 %v1077, %v1074
    %v1120 = vpack.c.b16 %v1078, %v1075
    %v1121 = vpack.c.b16 %v1079, %v1076
    %v1122 = vpack.c.b16 %v1083, %v1080
    %v1123 = vpack.c.b16 %v1084, %v1081
    %v1124 = vpack.c.b16 %v1085, %v1082
    %v1125 = vpack.c.b16 %v1089, %v1086
    %v1126 = vpack.c.b16 %v1090, %v1087
    %v1127 = vpack.c.b16 %v1091, %v1088
    %v1128 = vpack.c.b16 %v1095, %v1092
    %v1129 = vpack.c.b16 %v1096, %v1093
    %v1130 = vpack.c.b16 %v1097, %v1094
    %v1131 = vpack.c.b16 %v1101, %v1098
    %v1132 = vpack.c.b16 %v1102, %v1099
    %v1133 = vpack.c.b16 %v1103, %v1100
    %v1134 = vpack.c.b16 %v1107, %v1104
    %v1135 = vpack.c.b16 %v1108, %v1105
    %v1136 = vpack.c.b16 %v1109, %v1106
    %v1137 = vpack.c.b16 %v1113, %v1110
    %v1138 = vpack.c.b16 %v1114, %v1111
    %v1139 = vpack.c.b16 %v1115, %v1112
    %1164 = vmatprep.subr.bf16.mxu0 %v1117
    %1165 = vmatpush1.bf16.msra.mxu0 %v1116
    %1166 = vmatprep.subr.bf16.mxu0 %v1120
    %1167 = vmatpush1.bf16.msra.mxu0 %v1119
    %1168 = vmatprep.subr.bf16.mxu0 %v1123
    %1169 = vmatpush1.bf16.msra.mxu0 %v1122
    %1170 = vmatprep.subr.bf16.mxu0 %v1126
    %1171 = vmatpush1.bf16.msra.mxu0 %v1125
    %1172 = vmatprep.subr.bf16.mxu0 %v1129
    %1173 = vmatpush1.bf16.msra.mxu0 %v1128
    %1174 = vmatprep.subr.bf16.mxu0 %v1132
    %1175 = vmatpush1.bf16.msra.mxu0 %v1131
    %1176 = vmatprep.subr.bf16.mxu0 %v1135
    %1177 = vmatpush1.bf16.msra.mxu0 %v1134
    %1178 = vmatprep.subr.bf16.mxu0 %v1138
    %1179 = vmatpush1.bf16.msra.mxu0 %v1137
    %1180 = vmatprep.subr.bf16.mxu0 0
    %1181 = vmatpush1.bf16.msra.mxu0 0
    %1182 = vmatprep.subr.bf16.mxu0 0
    %1183 = vmatpush1.bf16.msra.mxu0 0
    %1184 = vmatprep.subr.bf16.mxu0 0
    %1185 = vmatpush1.bf16.msra.mxu0 0
    %1186 = vmatprep.subr.bf16.mxu0 0
    %1187 = vmatpush1.bf16.msra.mxu0 0
    %1188 = vmatprep.subr.bf16.mxu0 0
    %1189 = vmatpush1.bf16.msra.mxu0 0
    %1190 = vmatprep.subr.bf16.mxu0 0
    %1191 = vmatpush1.bf16.msra.mxu0 0
    %1192 = vmatprep.subr.bf16.mxu0 0
    %1193 = vmatpush1.bf16.msra.mxu0 0
    %1194 = vmatprep.subr.bf16.mxu0 0
    %1195 = vmatpush1.bf16.msra.mxu0 0
    %1196 = vmatprep.mubr.bf16.mxu0 0
    %1197 = vmatmul.mubr.bf16.gmra.mrb[0].mxu0 %v1003
    %v1198 = vpop.f32.mrb[0].mxu0
    %v1199 = vadd.f32 0.0, %v1198
    %v1200 = vpop.f32.mrb[0].mxu0
    %v1201 = vadd.f32 0.0, %v1200
    %v1202 = vpop.f32.mrb[0].mxu0
    %v1203 = vpop.f32.mrb[0].mxu0
    %1204 = vdwg.mxu0
    %1205 = vmatprep.subr.bf16.mxu0 0
    %1206 = vmatpush1.bf16.msra.mxu0 %v1118
    %1207 = vmatprep.subr.bf16.mxu0 0
    %1208 = vmatpush1.bf16.msra.mxu0 %v1121
    %1209 = vmatprep.subr.bf16.mxu0 0
    %1210 = vmatpush1.bf16.msra.mxu0 %v1124
    %1211 = vmatprep.subr.bf16.mxu0 0
    %1212 = vmatpush1.bf16.msra.mxu0 %v1127
    %1213 = vmatprep.subr.bf16.mxu0 0
    %1214 = vmatpush1.bf16.msra.mxu0 %v1130
    %1215 = vmatprep.subr.bf16.mxu0 0
    %1216 = vmatpush1.bf16.msra.mxu0 %v1133
    %1217 = vmatprep.subr.bf16.mxu0 0
    %1218 = vmatpush1.bf16.msra.mxu0 %v1136
    %1219 = vmatprep.subr.bf16.mxu0 0
    %1220 = vmatpush1.bf16.msra.mxu0 %v1139
    %1221 = vmatprep.subr.bf16.mxu0 0
    %1222 = vmatpush1.bf16.msra.mxu0 0
    %1223 = vmatprep.subr.bf16.mxu0 0
    %1224 = vmatpush1.bf16.msra.mxu0 0
    %1225 = vmatprep.subr.bf16.mxu0 0
    %1226 = vmatpush1.bf16.msra.mxu0 0
    %1227 = vmatprep.subr.bf16.mxu0 0
    %1228 = vmatpush1.bf16.msra.mxu0 0
    %1229 = vmatprep.subr.bf16.mxu0 0
    %1230 = vmatpush1.bf16.msra.mxu0 0
    %1231 = vmatprep.subr.bf16.mxu0 0
    %1232 = vmatpush1.bf16.msra.mxu0 0
    %1233 = vmatprep.subr.bf16.mxu0 0
    %1234 = vmatpush1.bf16.msra.mxu0 0
    %1235 = vmatprep.subr.bf16.mxu0 0
    %1236 = vmatpush1.bf16.msra.mxu0 0
    %1237 = vmatprep.mubr.bf16.mxu0 0
    %1238 = vmatmul.mubr.bf16.gmra.mrb[0].mxu0 %v1003
    %v1239 = vpop.f32.mrb[0].mxu0
    %v1240 = vadd.f32 0.0, %v1239
    %v1241 = vpop.f32.mrb[0].mxu0
    %v1242 = vpop.f32.mrb[0].mxu0
    %v1243 = vpop.f32.mrb[0].mxu0
    %1244 = vdwg.mxu0
    %v1245 = vadd.f32 %v1000, %v1199
    %v1246 = vxor.u32 %v1245, 2147483648
    %v1247 = vmul.f32 %v1246, 1.442695
    %v1248 = vpow.pop %v1247
    %v1249 = vadd.f32 %v1248, 1.0
    %v1250 = vrcp.pop %v1249
    %v1251 = vmul.f32 1.0, %v1250
    %v1252 = vadd.f32 %v1001, %v1201
    %v1253 = vxor.u32 %v1252, 2147483648
    %v1254 = vmul.f32 %v1253, 1.442695
    %v1255 = vpow.pop %v1254
    %v1256 = vadd.f32 %v1255, 1.0
    %v1257 = vrcp.pop %v1256
    %v1258 = vmul.f32 1.0, %v1257
    %v1259 = vadd.f32 %v1240, %v462
    %v1260 = vmul.f32 %v1251, %v1259
    %v1261 = vadd.f32 %v1002, %v1260
    %v1262 = vtanh.pop %v1261
    %v1263 = vsub.f32 %v996, %v1262
    %v1264 = vmul.f32 %v1258, %v1263
    %v1265 = vadd.f32 %v1262, %v1264
    %s1266 = scalar_lea.vmem [#allocation3], 16
    %1267 = vst [vmem:[%s1266] sm:$0xff] %v1265
    %s1268 = scalar_lea.vmem [#allocation2], 72
    %v1269 = vld [vmem:[%s1268] sm:$0xff]
    %v1270 = vld [vmem:[%s1268 + $0x8] sm:$0xff]
    %v1271 = vld [vmem:[%s1268 + $0x10] sm:$0xff]
    %v1272 = vpack.c.bf16 %v1265, %v1265
    %v1273 = vld [vmem:[#allocation9] sm:$0xff]
    %v1274 = vld [vmem:[#allocation9 + $0x8] sm:$0xf]
    %v1275 = vld [vmem:[#allocation9 + $0xc] sm:$0xff]
    %v1276 = vld [vmem:[#allocation9 + $0x14] sm:$0xf]
    %v1277 = vld [vmem:[#allocation9 + $0x18] sm:$0xff]
    %v1278 = vld [vmem:[#allocation9 + $0x20] sm:$0xf]
    %v1279 = vld [vmem:[#allocation9 + $0x24] sm:$0xff]
    %v1280 = vld [vmem:[#allocation9 + $0x2c] sm:$0xf]
    %v1281 = vld [vmem:[#allocation9 + $0x30] sm:$0xff]
    %v1282 = vld [vmem:[#allocation9 + $0x38] sm:$0xf]
    %v1283 = vld [vmem:[#allocation9 + $0x3c] sm:$0xff]
    %v1284 = vld [vmem:[#allocation9 + $0x44] sm:$0xf]
    %v1285 = vld [vmem:[#allocation9 + $0x48] sm:$0xff]
    %v1286 = vld [vmem:[#allocation9 + $0x50] sm:$0xf]
    %v1287 = vld [vmem:[#allocation9 + $0x54] sm:$0xff]
    %v1288 = vld [vmem:[#allocation9 + $0x5c] sm:$0xf]
    %v1289 = vld [vmem:[#allocation9 + $0x60] sm:$0xff]
    %v1290 = vld [vmem:[#allocation9 + $0x68] sm:$0xf]
    %v1291 = vld [vmem:[#allocation9 + $0x6c] sm:$0xff]
    %v1292 = vld [vmem:[#allocation9 + $0x74] sm:$0xf]
    %v1293 = vld [vmem:[#allocation9 + $0x78] sm:$0xff]
    %v1294 = vld [vmem:[#allocation9 + $0x80] sm:$0xf]
    %v1295 = vld [vmem:[#allocation9 + $0x84] sm:$0xff]
    %v1296 = vld [vmem:[#allocation9 + $0x8c] sm:$0xf]
    %v1297 = vld [vmem:[#allocation9 + $0x90] sm:$0xff]
    %v1298 = vld [vmem:[#allocation9 + $0x98] sm:$0xf]
    %v1299 = vld [vmem:[#allocation9 + $0x9c] sm:$0xff]
    %v1300 = vld [vmem:[#allocation9 + $0xa4] sm:$0xf]
    %v1301 = vld [vmem:[#allocation9 + $0xa8] sm:$0xff]
    %v1302 = vld [vmem:[#allocation9 + $0xb0] sm:$0xf]
    %v1303 = vld [vmem:[#allocation9 + $0xb4] sm:$0xff]
    %v1304 = vld [vmem:[#allocation9 + $0xbc] sm:$0xf]
    %v1337 = vunpack.c.l.b16 %v1273
    %v1338 = vunpack.c.h.b16 %v1273
    %v1339 = vunpack.c.l.b16 %v1274
    %v1340 = vunpack.c.l.b16 %v1275
    %v1341 = vunpack.c.h.b16 %v1275
    %v1342 = vunpack.c.l.b16 %v1276
    %v1343 = vunpack.c.l.b16 %v1277
    %v1344 = vunpack.c.h.b16 %v1277
    %v1345 = vunpack.c.l.b16 %v1278
    %v1346 = vunpack.c.l.b16 %v1279
    %v1347 = vunpack.c.h.b16 %v1279
    %v1348 = vunpack.c.l.b16 %v1280
    %v1349 = vunpack.c.l.b16 %v1281
    %v1350 = vunpack.c.h.b16 %v1281
    %v1351 = vunpack.c.l.b16 %v1282
    %v1352 = vunpack.c.l.b16 %v1283
    %v1353 = vunpack.c.h.b16 %v1283
    %v1354 = vunpack.c.l.b16 %v1284
    %v1355 = vunpack.c.l.b16 %v1285
    %v1356 = vunpack.c.h.b16 %v1285
    %v1357 = vunpack.c.l.b16 %v1286
    %v1358 = vunpack.c.l.b16 %v1287
    %v1359 = vunpack.c.h.b16 %v1287
    %v1360 = vunpack.c.l.b16 %v1288
    %v1361 = vunpack.c.l.b16 %v1289
    %v1362 = vunpack.c.h.b16 %v1289
    %v1363 = vunpack.c.l.b16 %v1290
    %v1364 = vunpack.c.l.b16 %v1291
    %v1365 = vunpack.c.h.b16 %v1291
    %v1366 = vunpack.c.l.b16 %v1292
    %v1367 = vunpack.c.l.b16 %v1293
    %v1368 = vunpack.c.h.b16 %v1293
    %v1369 = vunpack.c.l.b16 %v1294
    %v1370 = vunpack.c.l.b16 %v1295
    %v1371 = vunpack.c.h.b16 %v1295
    %v1372 = vunpack.c.l.b16 %v1296
    %v1373 = vunpack.c.l.b16 %v1297
    %v1374 = vunpack.c.h.b16 %v1297
    %v1375 = vunpack.c.l.b16 %v1298
    %v1376 = vunpack.c.l.b16 %v1299
    %v1377 = vunpack.c.h.b16 %v1299
    %v1378 = vunpack.c.l.b16 %v1300
    %v1379 = vunpack.c.l.b16 %v1301
    %v1380 = vunpack.c.h.b16 %v1301
    %v1381 = vunpack.c.l.b16 %v1302
    %v1382 = vunpack.c.l.b16 %v1303
    %v1383 = vunpack.c.h.b16 %v1303
    %v1384 = vunpack.c.l.b16 %v1304
    %v1385 = vpack.c.b16 %v1340, %v1337
    %v1386 = vpack.c.b16 %v1341, %v1338
    %v1387 = vpack.c.b16 %v1342, %v1339
    %v1388 = vpack.c.b16 %v1346, %v1343
    %v1389 = vpack.c.b16 %v1347, %v1344
    %v1390 = vpack.c.b16 %v1348, %v1345
    %v1391 = vpack.c.b16 %v1352, %v1349
    %v1392 = vpack.c.b16 %v1353, %v1350
    %v1393 = vpack.c.b16 %v1354, %v1351
    %v1394 = vpack.c.b16 %v1358, %v1355
    %v1395 = vpack.c.b16 %v1359, %v1356
    %v1396 = vpack.c.b16 %v1360, %v1357
    %v1397 = vpack.c.b16 %v1364, %v1361
    %v1398 = vpack.c.b16 %v1365, %v1362
    %v1399 = vpack.c.b16 %v1366, %v1363
    %v1400 = vpack.c.b16 %v1370, %v1367
    %v1401 = vpack.c.b16 %v1371, %v1368
    %v1402 = vpack.c.b16 %v1372, %v1369
    %v1403 = vpack.c.b16 %v1376, %v1373
    %v1404 = vpack.c.b16 %v1377, %v1374
    %v1405 = vpack.c.b16 %v1378, %v1375
    %v1406 = vpack.c.b16 %v1382, %v1379
    %v1407 = vpack.c.b16 %v1383, %v1380
    %v1408 = vpack.c.b16 %v1384, %v1381
    %1433 = vmatprep.subr.bf16.mxu0 %v1386
    %1434 = vmatpush1.bf16.msra.mxu0 %v1385
    %1435 = vmatprep.subr.bf16.mxu0 %v1389
    %1436 = vmatpush1.bf16.msra.mxu0 %v1388
    %1437 = vmatprep.subr.bf16.mxu0 %v1392
    %1438 = vmatpush1.bf16.msra.mxu0 %v1391
    %1439 = vmatprep.subr.bf16.mxu0 %v1395
    %1440 = vmatpush1.bf16.msra.mxu0 %v1394
    %1441 = vmatprep.subr.bf16.mxu0 %v1398
    %1442 = vmatpush1.bf16.msra.mxu0 %v1397
    %1443 = vmatprep.subr.bf16.mxu0 %v1401
    %1444 = vmatpush1.bf16.msra.mxu0 %v1400
    %1445 = vmatprep.subr.bf16.mxu0 %v1404
    %1446 = vmatpush1.bf16.msra.mxu0 %v1403
    %1447 = vmatprep.subr.bf16.mxu0 %v1407
    %1448 = vmatpush1.bf16.msra.mxu0 %v1406
    %1449 = vmatprep.subr.bf16.mxu0 0
    %1450 = vmatpush1.bf16.msra.mxu0 0
    %1451 = vmatprep.subr.bf16.mxu0 0
    %1452 = vmatpush1.bf16.msra.mxu0 0
    %1453 = vmatprep.subr.bf16.mxu0 0
    %1454 = vmatpush1.bf16.msra.mxu0 0
    %1455 = vmatprep.subr.bf16.mxu0 0
    %1456 = vmatpush1.bf16.msra.mxu0 0
    %1457 = vmatprep.subr.bf16.mxu0 0
    %1458 = vmatpush1.bf16.msra.mxu0 0
    %1459 = vmatprep.subr.bf16.mxu0 0
    %1460 = vmatpush1.bf16.msra.mxu0 0
    %1461 = vmatprep.subr.bf16.mxu0 0
    %1462 = vmatpush1.bf16.msra.mxu0 0
    %1463 = vmatprep.subr.bf16.mxu0 0
    %1464 = vmatpush1.bf16.msra.mxu0 0
    %1465 = vmatprep.mubr.bf16.mxu0 0
    %1466 = vmatmul.mubr.bf16.gmra.mrb[0].mxu0 %v1272
    %v1467 = vpop.f32.mrb[0].mxu0
    %v1468 = vadd.f32 0.0, %v1467
    %v1469 = vpop.f32.mrb[0].mxu0
    %v1470 = vadd.f32 0.0, %v1469
    %v1471 = vpop.f32.mrb[0].mxu0
    %v1472 = vpop.f32.mrb[0].mxu0
    %1473 = vdwg.mxu0
    %1474 = vmatprep.subr.bf16.mxu0 0
    %1475 = vmatpush1.bf16.msra.mxu0 %v1387
    %1476 = vmatprep.subr.bf16.mxu0 0
    %1477 = vmatpush1.bf16.msra.mxu0 %v1390
    %1478 = vmatprep.subr.bf16.mxu0 0
    %1479 = vmatpush1.bf16.msra.mxu0 %v1393
    %1480 = vmatprep.subr.bf16.mxu0 0
    %1481 = vmatpush1.bf16.msra.mxu0 %v1396
    %1482 = vmatprep.subr.bf16.mxu0 0
    %1483 = vmatpush1.bf16.msra.mxu0 %v1399
    %1484 = vmatprep.subr.bf16.mxu0 0
    %1485 = vmatpush1.bf16.msra.mxu0 %v1402
    %1486 = vmatprep.subr.bf16.mxu0 0
    %1487 = vmatpush1.bf16.msra.mxu0 %v1405
    %1488 = vmatprep.subr.bf16.mxu0 0
    %1489 = vmatpush1.bf16.msra.mxu0 %v1408
    %1490 = vmatprep.subr.bf16.mxu0 0
    %1491 = vmatpush1.bf16.msra.mxu0 0
    %1492 = vmatprep.subr.bf16.mxu0 0
    %1493 = vmatpush1.bf16.msra.mxu0 0
    %1494 = vmatprep.subr.bf16.mxu0 0
    %1495 = vmatpush1.bf16.msra.mxu0 0
    %1496 = vmatprep.subr.bf16.mxu0 0
    %1497 = vmatpush1.bf16.msra.mxu0 0
    %1498 = vmatprep.subr.bf16.mxu0 0
    %1499 = vmatpush1.bf16.msra.mxu0 0
    %1500 = vmatprep.subr.bf16.mxu0 0
    %1501 = vmatpush1.bf16.msra.mxu0 0
    %1502 = vmatprep.subr.bf16.mxu0 0
    %1503 = vmatpush1.bf16.msra.mxu0 0
    %1504 = vmatprep.subr.bf16.mxu0 0
    %1505 = vmatpush1.bf16.msra.mxu0 0
    %1506 = vmatprep.mubr.bf16.mxu0 0
    %1507 = vmatmul.mubr.bf16.gmra.mrb[0].mxu0 %v1272
    %v1508 = vpop.f32.mrb[0].mxu0
    %v1509 = vadd.f32 0.0, %v1508
    %v1510 = vpop.f32.mrb[0].mxu0
    %v1511 = vpop.f32.mrb[0].mxu0
    %v1512 = vpop.f32.mrb[0].mxu0
    %1513 = vdwg.mxu0
    %v1514 = vadd.f32 %v1269, %v1468
    %v1515 = vxor.u32 %v1514, 2147483648
    %v1516 = vmul.f32 %v1515, 1.442695
    %v1517 = vpow.pop %v1516
    %v1518 = vadd.f32 %v1517, 1.0
    %v1519 = vrcp.pop %v1518
    %v1520 = vmul.f32 1.0, %v1519
    %v1521 = vadd.f32 %v1270, %v1470
    %v1522 = vxor.u32 %v1521, 2147483648
    %v1523 = vmul.f32 %v1522, 1.442695
    %v1524 = vpow.pop %v1523
    %v1525 = vadd.f32 %v1524, 1.0
    %v1526 = vrcp.pop %v1525
    %v1527 = vmul.f32 1.0, %v1526
    %v1528 = vadd.f32 %v1509, %v462
    %v1529 = vmul.f32 %v1520, %v1528
    %v1530 = vadd.f32 %v1271, %v1529
    %v1531 = vtanh.pop %v1530
    %v1532 = vsub.f32 %v1265, %v1531
    %v1533 = vmul.f32 %v1527, %v1532
    %v1534 = vadd.f32 %v1531, %v1533
    %s1535 = scalar_lea.vmem [#allocation3], 24
    %1536 = vst [vmem:[%s1535] sm:$0xff] %v1534
    %s1537 = scalar_lea.vmem [#allocation2], 96
    %v1538 = vld [vmem:[%s1537] sm:$0xff]
    %v1539 = vld [vmem:[%s1537 + $0x8] sm:$0xff]
    %v1540 = vld [vmem:[%s1537 + $0x10] sm:$0xff]
    %v1541 = vpack.c.bf16 %v1534, %v1534
    %v1542 = vld [vmem:[#allocation9] sm:$0xff]
    %v1543 = vld [vmem:[#allocation9 + $0x8] sm:$0xf]
    %v1544 = vld [vmem:[#allocation9 + $0xc] sm:$0xff]
    %v1545 = vld [vmem:[#allocation9 + $0x14] sm:$0xf]
    %v1546 = vld [vmem:[#allocation9 + $0x18] sm:$0xff]
    %v1547 = vld [vmem:[#allocation9 + $0x20] sm:$0xf]
    %v1548 = vld [vmem:[#allocation9 + $0x24] sm:$0xff]
    %v1549 = vld [vmem:[#allocation9 + $0x2c] sm:$0xf]
    %v1550 = vld [vmem:[#allocation9 + $0x30] sm:$0xff]
    %v1551 = vld [vmem:[#allocation9 + $0x38] sm:$0xf]
    %v1552 = vld [vmem:[#allocation9 + $0x3c] sm:$0xff]
    %v1553 = vld [vmem:[#allocation9 + $0x44] sm:$0xf]
    %v1554 = vld [vmem:[#allocation9 + $0x48] sm:$0xff]
    %v1555 = vld [vmem:[#allocation9 + $0x50] sm:$0xf]
    %v1556 = vld [vmem:[#allocation9 + $0x54] sm:$0xff]
    %v1557 = vld [vmem:[#allocation9 + $0x5c] sm:$0xf]
    %v1558 = vld [vmem:[#allocation9 + $0x60] sm:$0xff]
    %v1559 = vld [vmem:[#allocation9 + $0x68] sm:$0xf]
    %v1560 = vld [vmem:[#allocation9 + $0x6c] sm:$0xff]
    %v1561 = vld [vmem:[#allocation9 + $0x74] sm:$0xf]
    %v1562 = vld [vmem:[#allocation9 + $0x78] sm:$0xff]
    %v1563 = vld [vmem:[#allocation9 + $0x80] sm:$0xf]
    %v1564 = vld [vmem:[#allocation9 + $0x84] sm:$0xff]
    %v1565 = vld [vmem:[#allocation9 + $0x8c] sm:$0xf]
    %v1566 = vld [vmem:[#allocation9 + $0x90] sm:$0xff]
    %v1567 = vld [vmem:[#allocation9 + $0x98] sm:$0xf]
    %v1568 = vld [vmem:[#allocation9 + $0x9c] sm:$0xff]
    %v1569 = vld [vmem:[#allocation9 + $0xa4] sm:$0xf]
    %v1570 = vld [vmem:[#allocation9 + $0xa8] sm:$0xff]
    %v1571 = vld [vmem:[#allocation9 + $0xb0] sm:$0xf]
    %v1572 = vld [vmem:[#allocation9 + $0xb4] sm:$0xff]
    %v1573 = vld [vmem:[#allocation9 + $0xbc] sm:$0xf]
    %v1606 = vunpack.c.l.b16 %v1542
    %v1607 = vunpack.c.h.b16 %v1542
    %v1608 = vunpack.c.l.b16 %v1543
    %v1609 = vunpack.c.l.b16 %v1544
    %v1610 = vunpack.c.h.b16 %v1544
    %v1611 = vunpack.c.l.b16 %v1545
    %v1612 = vunpack.c.l.b16 %v1546
    %v1613 = vunpack.c.h.b16 %v1546
    %v1614 = vunpack.c.l.b16 %v1547
    %v1615 = vunpack.c.l.b16 %v1548
    %v1616 = vunpack.c.h.b16 %v1548
    %v1617 = vunpack.c.l.b16 %v1549
    %v1618 = vunpack.c.l.b16 %v1550
    %v1619 = vunpack.c.h.b16 %v1550
    %v1620 = vunpack.c.l.b16 %v1551
    %v1621 = vunpack.c.l.b16 %v1552
    %v1622 = vunpack.c.h.b16 %v1552
    %v1623 = vunpack.c.l.b16 %v1553
    %v1624 = vunpack.c.l.b16 %v1554
    %v1625 = vunpack.c.h.b16 %v1554
    %v1626 = vunpack.c.l.b16 %v1555
    %v1627 = vunpack.c.l.b16 %v1556
    %v1628 = vunpack.c.h.b16 %v1556
    %v1629 = vunpack.c.l.b16 %v1557
    %v1630 = vunpack.c.l.b16 %v1558
    %v1631 = vunpack.c.h.b16 %v1558
    %v1632 = vunpack.c.l.b16 %v1559
    %v1633 = vunpack.c.l.b16 %v1560
    %v1634 = vunpack.c.h.b16 %v1560
    %v1635 = vunpack.c.l.b16 %v1561
    %v1636 = vunpack.c.l.b16 %v1562
    %v1637 = vunpack.c.h.b16 %v1562
    %v1638 = vunpack.c.l.b16 %v1563
    %v1639 = vunpack.c.l.b16 %v1564
    %v1640 = vunpack.c.h.b16 %v1564
    %v1641 = vunpack.c.l.b16 %v1565
    %v1642 = vunpack.c.l.b16 %v1566
    %v1643 = vunpack.c.h.b16 %v1566
    %v1644 = vunpack.c.l.b16 %v1567
    %v1645 = vunpack.c.l.b16 %v1568
    %v1646 = vunpack.c.h.b16 %v1568
    %v1647 = vunpack.c.l.b16 %v1569
    %v1648 = vunpack.c.l.b16 %v1570
    %v1649 = vunpack.c.h.b16 %v1570
    %v1650 = vunpack.c.l.b16 %v1571
    %v1651 = vunpack.c.l.b16 %v1572
    %v1652 = vunpack.c.h.b16 %v1572
    %v1653 = vunpack.c.l.b16 %v1573
    %v1654 = vpack.c.b16 %v1609, %v1606
    %v1655 = vpack.c.b16 %v1610, %v1607
    %v1656 = vpack.c.b16 %v1611, %v1608
    %v1657 = vpack.c.b16 %v1615, %v1612
    %v1658 = vpack.c.b16 %v1616, %v1613
    %v1659 = vpack.c.b16 %v1617, %v1614
    %v1660 = vpack.c.b16 %v1621, %v1618
    %v1661 = vpack.c.b16 %v1622, %v1619
    %v1662 = vpack.c.b16 %v1623, %v1620
    %v1663 = vpack.c.b16 %v1627, %v1624
    %v1664 = vpack.c.b16 %v1628, %v1625
    %v1665 = vpack.c.b16 %v1629, %v1626
    %v1666 = vpack.c.b16 %v1633, %v1630
    %v1667 = vpack.c.b16 %v1634, %v1631
    %v1668 = vpack.c.b16 %v1635, %v1632
    %v1669 = vpack.c.b16 %v1639, %v1636
    %v1670 = vpack.c.b16 %v1640, %v1637
    %v1671 = vpack.c.b16 %v1641, %v1638
    %v1672 = vpack.c.b16 %v1645, %v1642
    %v1673 = vpack.c.b16 %v1646, %v1643
    %v1674 = vpack.c.b16 %v1647, %v1644
    %v1675 = vpack.c.b16 %v1651, %v1648
    %v1676 = vpack.c.b16 %v1652, %v1649
    %v1677 = vpack.c.b16 %v1653, %v1650
    %1702 = vmatprep.subr.bf16.mxu0 %v1655
    %1703 = vmatpush1.bf16.msra.mxu0 %v1654
    %1704 = vmatprep.subr.bf16.mxu0 %v1658
    %1705 = vmatpush1.bf16.msra.mxu0 %v1657
    %1706 = vmatprep.subr.bf16.mxu0 %v1661
    %1707 = vmatpush1.bf16.msra.mxu0 %v1660
    %1708 = vmatprep.subr.bf16.mxu0 %v1664
    %1709 = vmatpush1.bf16.msra.mxu0 %v1663
    %1710 = vmatprep.subr.bf16.mxu0 %v1667
    %1711 = vmatpush1.bf16.msra.mxu0 %v1666
    %1712 = vmatprep.subr.bf16.mxu0 %v1670
    %1713 = vmatpush1.bf16.msra.mxu0 %v1669
    %1714 = vmatprep.subr.bf16.mxu0 %v1673
    %1715 = vmatpush1.bf16.msra.mxu0 %v1672
    %1716 = vmatprep.subr.bf16.mxu0 %v1676
    %1717 = vmatpush1.bf16.msra.mxu0 %v1675
    %1718 = vmatprep.subr.bf16.mxu0 0
    %1719 = vmatpush1.bf16.msra.mxu0 0
    %1720 = vmatprep.subr.bf16.mxu0 0
    %1721 = vmatpush1.bf16.msra.mxu0 0
    %1722 = vmatprep.subr.bf16.mxu0 0
    %1723 = vmatpush1.bf16.msra.mxu0 0
    %1724 = vmatprep.subr.bf16.mxu0 0
    %1725 = vmatpush1.bf16.msra.mxu0 0
    %1726 = vmatprep.subr.bf16.mxu0 0
    %1727 = vmatpush1.bf16.msra.mxu0 0
    %1728 = vmatprep.subr.bf16.mxu0 0
    %1729 = vmatpush1.bf16.msra.mxu0 0
    %1730 = vmatprep.subr.bf16.mxu0 0
    %1731 = vmatpush1.bf16.msra.mxu0 0
    %1732 = vmatprep.subr.bf16.mxu0 0
    %1733 = vmatpush1.bf16.msra.mxu0 0
    %1734 = vmatprep.mubr.bf16.mxu0 0
    %1735 = vmatmul.mubr.bf16.gmra.mrb[0].mxu0 %v1541
    %v1736 = vpop.f32.mrb[0].mxu0
    %v1737 = vadd.f32 0.0, %v1736
    %v1738 = vpop.f32.mrb[0].mxu0
    %v1739 = vadd.f32 0.0, %v1738
    %v1740 = vpop.f32.mrb[0].mxu0
    %v1741 = vpop.f32.mrb[0].mxu0
    %1742 = vdwg.mxu0
    %1743 = vmatprep.subr.bf16.mxu0 0
    %1744 = vmatpush1.bf16.msra.mxu0 %v1656
    %1745 = vmatprep.subr.bf16.mxu0 0
    %1746 = vmatpush1.bf16.msra.mxu0 %v1659
    %1747 = vmatprep.subr.bf16.mxu0 0
    %1748 = vmatpush1.bf16.msra.mxu0 %v1662
    %1749 = vmatprep.subr.bf16.mxu0 0
    %1750 = vmatpush1.bf16.msra.mxu0 %v1665
    %1751 = vmatprep.subr.bf16.mxu0 0
    %1752 = vmatpush1.bf16.msra.mxu0 %v1668
    %1753 = vmatprep.subr.bf16.mxu0 0
    %1754 = vmatpush1.bf16.msra.mxu0 %v1671
    %1755 = vmatprep.subr.bf16.mxu0 0
    %1756 = vmatpush1.bf16.msra.mxu0 %v1674
    %1757 = vmatprep.subr.bf16.mxu0 0
    %1758 = vmatpush1.bf16.msra.mxu0 %v1677
    %1759 = vmatprep.subr.bf16.mxu0 0
    %1760 = vmatpush1.bf16.msra.mxu0 0
    %1761 = vmatprep.subr.bf16.mxu0 0
    %1762 = vmatpush1.bf16.msra.mxu0 0
    %1763 = vmatprep.subr.bf16.mxu0 0
    %1764 = vmatpush1.bf16.msra.mxu0 0
    %1765 = vmatprep.subr.bf16.mxu0 0
    %1766 = vmatpush1.bf16.msra.mxu0 0
    %1767 = vmatprep.subr.bf16.mxu0 0
    %1768 = vmatpush1.bf16.msra.mxu0 0
    %1769 = vmatprep.subr.bf16.mxu0 0
    %1770 = vmatpush1.bf16.msra.mxu0 0
    %1771 = vmatprep.subr.bf16.mxu0 0
    %1772 = vmatpush1.bf16.msra.mxu0 0
    %1773 = vmatprep.subr.bf16.mxu0 0
    %1774 = vmatpush1.bf16.msra.mxu0 0
    %1775 = vmatprep.mubr.bf16.mxu0 0
    %1776 = vmatmul.mubr.bf16.gmra.mrb[0].mxu0 %v1541
    %v1777 = vpop.f32.mrb[0].mxu0
    %v1778 = vadd.f32 0.0, %v1777
    %v1779 = vpop.f32.mrb[0].mxu0
    %v1780 = vpop.f32.mrb[0].mxu0
    %v1781 = vpop.f32.mrb[0].mxu0
    %1782 = vdwg.mxu0
    %v1783 = vadd.f32 %v1538, %v1737
    %v1784 = vxor.u32 %v1783, 2147483648
    %v1785 = vmul.f32 %v1784, 1.442695
    %v1786 = vpow.pop %v1785
    %v1787 = vadd.f32 %v1786, 1.0
    %v1788 = vrcp.pop %v1787
    %v1789 = vmul.f32 1.0, %v1788
    %v1790 = vadd.f32 %v1539, %v1739
    %v1791 = vxor.u32 %v1790, 2147483648
    %v1792 = vmul.f32 %v1791, 1.442695
    %v1793 = vpow.pop %v1792
    %v1794 = vadd.f32 %v1793, 1.0
    %v1795 = vrcp.pop %v1794
    %v1796 = vmul.f32 1.0, %v1795
    %v1797 = vadd.f32 %v1778, %v462
    %v1798 = vmul.f32 %v1789, %v1797
    %v1799 = vadd.f32 %v1540, %v1798
    %v1800 = vtanh.pop %v1799
    %v1801 = vsub.f32 %v1534, %v1800
    %v1802 = vmul.f32 %v1796, %v1801
    %v1803 = vadd.f32 %v1800, %v1802
    %s1804 = scalar_lea.vmem [#allocation3], 32
    %1805 = vst [vmem:[%s1804] sm:$0xff] %v1803
    %s1806 = scalar_lea.vmem [#allocation2], 120
    %v1807 = vld [vmem:[%s1806] sm:$0xff]
    %v1808 = vld [vmem:[%s1806 + $0x8] sm:$0xff]
    %v1809 = vld [vmem:[%s1806 + $0x10] sm:$0xff]
    %v1810 = vpack.c.bf16 %v1803, %v1803
    %v1811 = vld [vmem:[#allocation9] sm:$0xff]
    %v1812 = vld [vmem:[#allocation9 + $0x8] sm:$0xf]
    %v1813 = vld [vmem:[#allocation9 + $0xc] sm:$0xff]
    %v1814 = vld [vmem:[#allocation9 + $0x14] sm:$0xf]
    %v1815 = vld [vmem:[#allocation9 + $0x18] sm:$0xff]
    %v1816 = vld [vmem:[#allocation9 + $0x20] sm:$0xf]
    %v1817 = vld [vmem:[#allocation9 + $0x24] sm:$0xff]
    %v1818 = vld [vmem:[#allocation9 + $0x2c] sm:$0xf]
    %v1819 = vld [vmem:[#allocation9 + $0x30] sm:$0xff]
    %v1820 = vld [vmem:[#allocation9 + $0x38] sm:$0xf]
    %v1821 = vld [vmem:[#allocation9 + $0x3c] sm:$0xff]
    %v1822 = vld [vmem:[#allocation9 + $0x44] sm:$0xf]
    %v1823 = vld [vmem:[#allocation9 + $0x48] sm:$0xff]
    %v1824 = vld [vmem:[#allocation9 + $0x50] sm:$0xf]
    %v1825 = vld [vmem:[#allocation9 + $0x54] sm:$0xff]
    %v1826 = vld [vmem:[#allocation9 + $0x5c] sm:$0xf]
    %v1827 = vld [vmem:[#allocation9 + $0x60] sm:$0xff]
    %v1828 = vld [vmem:[#allocation9 + $0x68] sm:$0xf]
    %v1829 = vld [vmem:[#allocation9 + $0x6c] sm:$0xff]
    %v1830 = vld [vmem:[#allocation9 + $0x74] sm:$0xf]
    %v1831 = vld [vmem:[#allocation9 + $0x78] sm:$0xff]
    %v1832 = vld [vmem:[#allocation9 + $0x80] sm:$0xf]
    %v1833 = vld [vmem:[#allocation9 + $0x84] sm:$0xff]
    %v1834 = vld [vmem:[#allocation9 + $0x8c] sm:$0xf]
    %v1835 = vld [vmem:[#allocation9 + $0x90] sm:$0xff]
    %v1836 = vld [vmem:[#allocation9 + $0x98] sm:$0xf]
    %v1837 = vld [vmem:[#allocation9 + $0x9c] sm:$0xff]
    %v1838 = vld [vmem:[#allocation9 + $0xa4] sm:$0xf]
    %v1839 = vld [vmem:[#allocation9 + $0xa8] sm:$0xff]
    %v1840 = vld [vmem:[#allocation9 + $0xb0] sm:$0xf]
    %v1841 = vld [vmem:[#allocation9 + $0xb4] sm:$0xff]
    %v1842 = vld [vmem:[#allocation9 + $0xbc] sm:$0xf]
    %v1875 = vunpack.c.l.b16 %v1811
    %v1876 = vunpack.c.h.b16 %v1811
    %v1877 = vunpack.c.l.b16 %v1812
    %v1878 = vunpack.c.l.b16 %v1813
    %v1879 = vunpack.c.h.b16 %v1813
    %v1880 = vunpack.c.l.b16 %v1814
    %v1881 = vunpack.c.l.b16 %v1815
    %v1882 = vunpack.c.h.b16 %v1815
    %v1883 = vunpack.c.l.b16 %v1816
    %v1884 = vunpack.c.l.b16 %v1817
    %v1885 = vunpack.c.h.b16 %v1817
    %v1886 = vunpack.c.l.b16 %v1818
    %v1887 = vunpack.c.l.b16 %v1819
    %v1888 = vunpack.c.h.b16 %v1819
    %v1889 = vunpack.c.l.b16 %v1820
    %v1890 = vunpack.c.l.b16 %v1821
    %v1891 = vunpack.c.h.b16 %v1821
    %v1892 = vunpack.c.l.b16 %v1822
    %v1893 = vunpack.c.l.b16 %v1823
    %v1894 = vunpack.c.h.b16 %v1823
    %v1895 = vunpack.c.l.b16 %v1824
    %v1896 = vunpack.c.l.b16 %v1825
    %v1897 = vunpack.c.h.b16 %v1825
    %v1898 = vunpack.c.l.b16 %v1826
    %v1899 = vunpack.c.l.b16 %v1827
    %v1900 = vunpack.c.h.b16 %v1827
    %v1901 = vunpack.c.l.b16 %v1828
    %v1902 = vunpack.c.l.b16 %v1829
    %v1903 = vunpack.c.h.b16 %v1829
    %v1904 = vunpack.c.l.b16 %v1830
    %v1905 = vunpack.c.l.b16 %v1831
    %v1906 = vunpack.c.h.b16 %v1831
    %v1907 = vunpack.c.l.b16 %v1832
    %v1908 = vunpack.c.l.b16 %v1833
    %v1909 = vunpack.c.h.b16 %v1833
    %v1910 = vunpack.c.l.b16 %v1834
    %v1911 = vunpack.c.l.b16 %v1835
    %v1912 = vunpack.c.h.b16 %v1835
    %v1913 = vunpack.c.l.b16 %v1836
    %v1914 = vunpack.c.l.b16 %v1837
    %v1915 = vunpack.c.h.b16 %v1837
    %v1916 = vunpack.c.l.b16 %v1838
    %v1917 = vunpack.c.l.b16 %v1839
    %v1918 = vunpack.c.h.b16 %v1839
    %v1919 = vunpack.c.l.b16 %v1840
    %v1920 = vunpack.c.l.b16 %v1841
    %v1921 = vunpack.c.h.b16 %v1841
    %v1922 = vunpack.c.l.b16 %v1842
    %v1923 = vpack.c.b16 %v1878, %v1875
    %v1924 = vpack.c.b16 %v1879, %v1876
    %v1925 = vpack.c.b16 %v1880, %v1877
    %v1926 = vpack.c.b16 %v1884, %v1881
    %v1927 = vpack.c.b16 %v1885, %v1882
    %v1928 = vpack.c.b16 %v1886, %v1883
    %v1929 = vpack.c.b16 %v1890, %v1887
    %v1930 = vpack.c.b16 %v1891, %v1888
    %v1931 = vpack.c.b16 %v1892, %v1889
    %v1932 = vpack.c.b16 %v1896, %v1893
    %v1933 = vpack.c.b16 %v1897, %v1894
    %v1934 = vpack.c.b16 %v1898, %v1895
    %v1935 = vpack.c.b16 %v1902, %v1899
    %v1936 = vpack.c.b16 %v1903, %v1900
    %v1937 = vpack.c.b16 %v1904, %v1901
    %v1938 = vpack.c.b16 %v1908, %v1905
    %v1939 = vpack.c.b16 %v1909, %v1906
    %v1940 = vpack.c.b16 %v1910, %v1907
    %v1941 = vpack.c.b16 %v1914, %v1911
    %v1942 = vpack.c.b16 %v1915, %v1912
    %v1943 = vpack.c.b16 %v1916, %v1913
    %v1944 = vpack.c.b16 %v1920, %v1917
    %v1945 = vpack.c.b16 %v1921, %v1918
    %v1946 = vpack.c.b16 %v1922, %v1919
    %1971 = vmatprep.subr.bf16.mxu0 %v1924
    %1972 = vmatpush1.bf16.msra.mxu0 %v1923
    %1973 = vmatprep.subr.bf16.mxu0 %v1927
    %1974 = vmatpush1.bf16.msra.mxu0 %v1926
    %1975 = vmatprep.subr.bf16.mxu0 %v1930
    %1976 = vmatpush1.bf16.msra.mxu0 %v1929
    %1977 = vmatprep.subr.bf16.mxu0 %v1933
    %1978 = vmatpush1.bf16.msra.mxu0 %v1932
    %1979 = vmatprep.subr.bf16.mxu0 %v1936
    %1980 = vmatpush1.bf16.msra.mxu0 %v1935
    %1981 = vmatprep.subr.bf16.mxu0 %v1939
    %1982 = vmatpush1.bf16.msra.mxu0 %v1938
    %1983 = vmatprep.subr.bf16.mxu0 %v1942
    %1984 = vmatpush1.bf16.msra.mxu0 %v1941
    %1985 = vmatprep.subr.bf16.mxu0 %v1945
    %1986 = vmatpush1.bf16.msra.mxu0 %v1944
    %1987 = vmatprep.subr.bf16.mxu0 0
    %1988 = vmatpush1.bf16.msra.mxu0 0
    %1989 = vmatprep.subr.bf16.mxu0 0
    %1990 = vmatpush1.bf16.msra.mxu0 0
    %1991 = vmatprep.subr.bf16.mxu0 0
    %1992 = vmatpush1.bf16.msra.mxu0 0
    %1993 = vmatprep.subr.bf16.mxu0 0
    %1994 = vmatpush1.bf16.msra.mxu0 0
    %1995 = vmatprep.subr.bf16.mxu0 0
    %1996 = vmatpush1.bf16.msra.mxu0 0
    %1997 = vmatprep.subr.bf16.mxu0 0
    %1998 = vmatpush1.bf16.msra.mxu0 0
    %1999 = vmatprep.subr.bf16.mxu0 0
    %2000 = vmatpush1.bf16.msra.mxu0 0
    %2001 = vmatprep.subr.bf16.mxu0 0
    %2002 = vmatpush1.bf16.msra.mxu0 0
    %2003 = vmatprep.mubr.bf16.mxu0 0
    %2004 = vmatmul.mubr.bf16.gmra.mrb[0].mxu0 %v1810
    %v2005 = vpop.f32.mrb[0].mxu0
    %v2006 = vadd.f32 0.0, %v2005
    %v2007 = vpop.f32.mrb[0].mxu0
    %v2008 = vadd.f32 0.0, %v2007
    %v2009 = vpop.f32.mrb[0].mxu0
    %v2010 = vpop.f32.mrb[0].mxu0
    %2011 = vdwg.mxu0
    %2012 = vmatprep.subr.bf16.mxu0 0
    %2013 = vmatpush1.bf16.msra.mxu0 %v1925
    %2014 = vmatprep.subr.bf16.mxu0 0
    %2015 = vmatpush1.bf16.msra.mxu0 %v1928
    %2016 = vmatprep.subr.bf16.mxu0 0
    %2017 = vmatpush1.bf16.msra.mxu0 %v1931
    %2018 = vmatprep.subr.bf16.mxu0 0
    %2019 = vmatpush1.bf16.msra.mxu0 %v1934
    %2020 = vmatprep.subr.bf16.mxu0 0
    %2021 = vmatpush1.bf16.msra.mxu0 %v1937
    %2022 = vmatprep.subr.bf16.mxu0 0
    %2023 = vmatpush1.bf16.msra.mxu0 %v1940
    %2024 = vmatprep.subr.bf16.mxu0 0
    %2025 = vmatpush1.bf16.msra.mxu0 %v1943
    %2026 = vmatprep.subr.bf16.mxu0 0
    %2027 = vmatpush1.bf16.msra.mxu0 %v1946
    %2028 = vmatprep.subr.bf16.mxu0 0
    %2029 = vmatpush1.bf16.msra.mxu0 0
    %2030 = vmatprep.subr.bf16.mxu0 0
    %2031 = vmatpush1.bf16.msra.mxu0 0
    %2032 = vmatprep.subr.bf16.mxu0 0
    %2033 = vmatpush1.bf16.msra.mxu0 0
    %2034 = vmatprep.subr.bf16.mxu0 0
    %2035 = vmatpush1.bf16.msra.mxu0 0
    %2036 = vmatprep.subr.bf16.mxu0 0
    %2037 = vmatpush1.bf16.msra.mxu0 0
    %2038 = vmatprep.subr.bf16.mxu0 0
    %2039 = vmatpush1.bf16.msra.mxu0 0
    %2040 = vmatprep.subr.bf16.mxu0 0
    %2041 = vmatpush1.bf16.msra.mxu0 0
    %2042 = vmatprep.subr.bf16.mxu0 0
    %2043 = vmatpush1.bf16.msra.mxu0 0
    %2044 = vmatprep.mubr.bf16.mxu0 0
    %2045 = vmatmul.mubr.bf16.gmra.mrb[0].mxu0 %v1810
    %v2046 = vpop.f32.mrb[0].mxu0
    %v2047 = vadd.f32 0.0, %v2046
    %v2048 = vpop.f32.mrb[0].mxu0
    %v2049 = vpop.f32.mrb[0].mxu0
    %v2050 = vpop.f32.mrb[0].mxu0
    %2051 = vdwg.mxu0
    %v2052 = vadd.f32 %v1807, %v2006
    %v2053 = vxor.u32 %v2052, 2147483648
    %v2054 = vmul.f32 %v2053, 1.442695
    %v2055 = vpow.pop %v2054
    %v2056 = vadd.f32 %v2055, 1.0
    %v2057 = vrcp.pop %v2056
    %v2058 = vmul.f32 1.0, %v2057
    %v2059 = vadd.f32 %v1808, %v2008
    %v2060 = vxor.u32 %v2059, 2147483648
    %v2061 = vmul.f32 %v2060, 1.442695
    %v2062 = vpow.pop %v2061
    %v2063 = vadd.f32 %v2062, 1.0
    %v2064 = vrcp.pop %v2063
    %v2065 = vmul.f32 1.0, %v2064
    %v2066 = vadd.f32 %v2047, %v462
    %v2067 = vmul.f32 %v2058, %v2066
    %v2068 = vadd.f32 %v1809, %v2067
    %v2069 = vtanh.pop %v2068
    %v2070 = vsub.f32 %v1803, %v2069
    %v2071 = vmul.f32 %v2065, %v2070
    %v2072 = vadd.f32 %v2069, %v2071
    %s2073 = scalar_lea.vmem [#allocation3], 40
    %2074 = vst [vmem:[%s2073] sm:$0xff] %v2072
    %s2075 = scalar_lea.vmem [#allocation2], 144
    %v2076 = vld [vmem:[%s2075] sm:$0xff]
    %v2077 = vld [vmem:[%s2075 + $0x8] sm:$0xff]
    %v2078 = vld [vmem:[%s2075 + $0x10] sm:$0xff]
    %v2079 = vpack.c.bf16 %v2072, %v2072
    %v2080 = vld [vmem:[#allocation9] sm:$0xff]
    %v2081 = vld [vmem:[#allocation9 + $0x8] sm:$0xf]
    %v2082 = vld [vmem:[#allocation9 + $0xc] sm:$0xff]
    %v2083 = vld [vmem:[#allocation9 + $0x14] sm:$0xf]
    %v2084 = vld [vmem:[#allocation9 + $0x18] sm:$0xff]
    %v2085 = vld [vmem:[#allocation9 + $0x20] sm:$0xf]
    %v2086 = vld [vmem:[#allocation9 + $0x24] sm:$0xff]
    %v2087 = vld [vmem:[#allocation9 + $0x2c] sm:$0xf]
    %v2088 = vld [vmem:[#allocation9 + $0x30] sm:$0xff]
    %v2089 = vld [vmem:[#allocation9 + $0x38] sm:$0xf]
    %v2090 = vld [vmem:[#allocation9 + $0x3c] sm:$0xff]
    %v2091 = vld [vmem:[#allocation9 + $0x44] sm:$0xf]
    %v2092 = vld [vmem:[#allocation9 + $0x48] sm:$0xff]
    %v2093 = vld [vmem:[#allocation9 + $0x50] sm:$0xf]
    %v2094 = vld [vmem:[#allocation9 + $0x54] sm:$0xff]
    %v2095 = vld [vmem:[#allocation9 + $0x5c] sm:$0xf]
    %v2096 = vld [vmem:[#allocation9 + $0x60] sm:$0xff]
    %v2097 = vld [vmem:[#allocation9 + $0x68] sm:$0xf]
    %v2098 = vld [vmem:[#allocation9 + $0x6c] sm:$0xff]
    %v2099 = vld [vmem:[#allocation9 + $0x74] sm:$0xf]
    %v2100 = vld [vmem:[#allocation9 + $0x78] sm:$0xff]
    %v2101 = vld [vmem:[#allocation9 + $0x80] sm:$0xf]
    %v2102 = vld [vmem:[#allocation9 + $0x84] sm:$0xff]
    %v2103 = vld [vmem:[#allocation9 + $0x8c] sm:$0xf]
    %v2104 = vld [vmem:[#allocation9 + $0x90] sm:$0xff]
    %v2105 = vld [vmem:[#allocation9 + $0x98] sm:$0xf]
    %v2106 = vld [vmem:[#allocation9 + $0x9c] sm:$0xff]
    %v2107 = vld [vmem:[#allocation9 + $0xa4] sm:$0xf]
    %v2108 = vld [vmem:[#allocation9 + $0xa8] sm:$0xff]
    %v2109 = vld [vmem:[#allocation9 + $0xb0] sm:$0xf]
    %v2110 = vld [vmem:[#allocation9 + $0xb4] sm:$0xff]
    %v2111 = vld [vmem:[#allocation9 + $0xbc] sm:$0xf]
    %v2144 = vunpack.c.l.b16 %v2080
    %v2145 = vunpack.c.h.b16 %v2080
    %v2146 = vunpack.c.l.b16 %v2081
    %v2147 = vunpack.c.l.b16 %v2082
    %v2148 = vunpack.c.h.b16 %v2082
    %v2149 = vunpack.c.l.b16 %v2083
    %v2150 = vunpack.c.l.b16 %v2084
    %v2151 = vunpack.c.h.b16 %v2084
    %v2152 = vunpack.c.l.b16 %v2085
    %v2153 = vunpack.c.l.b16 %v2086
    %v2154 = vunpack.c.h.b16 %v2086
    %v2155 = vunpack.c.l.b16 %v2087
    %v2156 = vunpack.c.l.b16 %v2088
    %v2157 = vunpack.c.h.b16 %v2088
    %v2158 = vunpack.c.l.b16 %v2089
    %v2159 = vunpack.c.l.b16 %v2090
    %v2160 = vunpack.c.h.b16 %v2090
    %v2161 = vunpack.c.l.b16 %v2091
    %v2162 = vunpack.c.l.b16 %v2092
    %v2163 = vunpack.c.h.b16 %v2092
    %v2164 = vunpack.c.l.b16 %v2093
    %v2165 = vunpack.c.l.b16 %v2094
    %v2166 = vunpack.c.h.b16 %v2094
    %v2167 = vunpack.c.l.b16 %v2095
    %v2168 = vunpack.c.l.b16 %v2096
    %v2169 = vunpack.c.h.b16 %v2096
    %v2170 = vunpack.c.l.b16 %v2097
    %v2171 = vunpack.c.l.b16 %v2098
    %v2172 = vunpack.c.h.b16 %v2098
    %v2173 = vunpack.c.l.b16 %v2099
    %v2174 = vunpack.c.l.b16 %v2100
    %v2175 = vunpack.c.h.b16 %v2100
    %v2176 = vunpack.c.l.b16 %v2101
    %v2177 = vunpack.c.l.b16 %v2102
    %v2178 = vunpack.c.h.b16 %v2102
    %v2179 = vunpack.c.l.b16 %v2103
    %v2180 = vunpack.c.l.b16 %v2104
    %v2181 = vunpack.c.h.b16 %v2104
    %v2182 = vunpack.c.l.b16 %v2105
    %v2183 = vunpack.c.l.b16 %v2106
    %v2184 = vunpack.c.h.b16 %v2106
    %v2185 = vunpack.c.l.b16 %v2107
    %v2186 = vunpack.c.l.b16 %v2108
    %v2187 = vunpack.c.h.b16 %v2108
    %v2188 = vunpack.c.l.b16 %v2109
    %v2189 = vunpack.c.l.b16 %v2110
    %v2190 = vunpack.c.h.b16 %v2110
    %v2191 = vunpack.c.l.b16 %v2111
    %v2192 = vpack.c.b16 %v2147, %v2144
    %v2193 = vpack.c.b16 %v2148, %v2145
    %v2194 = vpack.c.b16 %v2149, %v2146
    %v2195 = vpack.c.b16 %v2153, %v2150
    %v2196 = vpack.c.b16 %v2154, %v2151
    %v2197 = vpack.c.b16 %v2155, %v2152
    %v2198 = vpack.c.b16 %v2159, %v2156
    %v2199 = vpack.c.b16 %v2160, %v2157
    %v2200 = vpack.c.b16 %v2161, %v2158
    %v2201 = vpack.c.b16 %v2165, %v2162
    %v2202 = vpack.c.b16 %v2166, %v2163
    %v2203 = vpack.c.b16 %v2167, %v2164
    %v2204 = vpack.c.b16 %v2171, %v2168
    %v2205 = vpack.c.b16 %v2172, %v2169
    %v2206 = vpack.c.b16 %v2173, %v2170
    %v2207 = vpack.c.b16 %v2177, %v2174
    %v2208 = vpack.c.b16 %v2178, %v2175
    %v2209 = vpack.c.b16 %v2179, %v2176
    %v2210 = vpack.c.b16 %v2183, %v2180
    %v2211 = vpack.c.b16 %v2184, %v2181
    %v2212 = vpack.c.b16 %v2185, %v2182
    %v2213 = vpack.c.b16 %v2189, %v2186
    %v2214 = vpack.c.b16 %v2190, %v2187
    %v2215 = vpack.c.b16 %v2191, %v2188
    %2240 = vmatprep.subr.bf16.mxu0 %v2193
    %2241 = vmatpush1.bf16.msra.mxu0 %v2192
    %2242 = vmatprep.subr.bf16.mxu0 %v2196
    %2243 = vmatpush1.bf16.msra.mxu0 %v2195
    %2244 = vmatprep.subr.bf16.mxu0 %v2199
    %2245 = vmatpush1.bf16.msra.mxu0 %v2198
    %2246 = vmatprep.subr.bf16.mxu0 %v2202
    %2247 = vmatpush1.bf16.msra.mxu0 %v2201
    %2248 = vmatprep.subr.bf16.mxu0 %v2205
    %2249 = vmatpush1.bf16.msra.mxu0 %v2204
    %2250 = vmatprep.subr.bf16.mxu0 %v2208
    %2251 = vmatpush1.bf16.msra.mxu0 %v2207
    %2252 = vmatprep.subr.bf16.mxu0 %v2211
    %2253 = vmatpush1.bf16.msra.mxu0 %v2210
    %2254 = vmatprep.subr.bf16.mxu0 %v2214
    %2255 = vmatpush1.bf16.msra.mxu0 %v2213
    %2256 = vmatprep.subr.bf16.mxu0 0
    %2257 = vmatpush1.bf16.msra.mxu0 0
    %2258 = vmatprep.subr.bf16.mxu0 0
    %2259 = vmatpush1.bf16.msra.mxu0 0
    %2260 = vmatprep.subr.bf16.mxu0 0
    %2261 = vmatpush1.bf16.msra.mxu0 0
    %2262 = vmatprep.subr.bf16.mxu0 0
    %2263 = vmatpush1.bf16.msra.mxu0 0
    %2264 = vmatprep.subr.bf16.mxu0 0
    %2265 = vmatpush1.bf16.msra.mxu0 0
    %2266 = vmatprep.subr.bf16.mxu0 0
    %2267 = vmatpush1.bf16.msra.mxu0 0
    %2268 = vmatprep.subr.bf16.mxu0 0
    %2269 = vmatpush1.bf16.msra.mxu0 0
    %2270 = vmatprep.subr.bf16.mxu0 0
    %2271 = vmatpush1.bf16.msra.mxu0 0
    %2272 = vmatprep.mubr.bf16.mxu0 0
    %2273 = vmatmul.mubr.bf16.gmra.mrb[0].mxu0 %v2079
    %v2274 = vpop.f32.mrb[0].mxu0
    %v2275 = vadd.f32 0.0, %v2274
    %v2276 = vpop.f32.mrb[0].mxu0
    %v2277 = vadd.f32 0.0, %v2276
    %v2278 = vpop.f32.mrb[0].mxu0
    %v2279 = vpop.f32.mrb[0].mxu0
    %2280 = vdwg.mxu0
    %2281 = vmatprep.subr.bf16.mxu0 0
    %2282 = vmatpush1.bf16.msra.mxu0 %v2194
    %2283 = vmatprep.subr.bf16.mxu0 0
    %2284 = vmatpush1.bf16.msra.mxu0 %v2197
    %2285 = vmatprep.subr.bf16.mxu0 0
    %2286 = vmatpush1.bf16.msra.mxu0 %v2200
    %2287 = vmatprep.subr.bf16.mxu0 0
    %2288 = vmatpush1.bf16.msra.mxu0 %v2203
    %2289 = vmatprep.subr.bf16.mxu0 0
    %2290 = vmatpush1.bf16.msra.mxu0 %v2206
    %2291 = vmatprep.subr.bf16.mxu0 0
    %2292 = vmatpush1.bf16.msra.mxu0 %v2209
    %2293 = vmatprep.subr.bf16.mxu0 0
    %2294 = vmatpush1.bf16.msra.mxu0 %v2212
    %2295 = vmatprep.subr.bf16.mxu0 0
    %2296 = vmatpush1.bf16.msra.mxu0 %v2215
    %2297 = vmatprep.subr.bf16.mxu0 0
    %2298 = vmatpush1.bf16.msra.mxu0 0
    %2299 = vmatprep.subr.bf16.mxu0 0
    %2300 = vmatpush1.bf16.msra.mxu0 0
    %2301 = vmatprep.subr.bf16.mxu0 0
    %2302 = vmatpush1.bf16.msra.mxu0 0
    %2303 = vmatprep.subr.bf16.mxu0 0
    %2304 = vmatpush1.bf16.msra.mxu0 0
    %2305 = vmatprep.subr.bf16.mxu0 0
    %2306 = vmatpush1.bf16.msra.mxu0 0
    %2307 = vmatprep.subr.bf16.mxu0 0
    %2308 = vmatpush1.bf16.msra.mxu0 0
    %2309 = vmatprep.subr.bf16.mxu0 0
    %2310 = vmatpush1.bf16.msra.mxu0 0
    %2311 = vmatprep.subr.bf16.mxu0 0
    %2312 = vmatpush1.bf16.msra.mxu0 0
    %2313 = vmatprep.mubr.bf16.mxu0 0
    %2314 = vmatmul.mubr.bf16.gmra.mrb[0].mxu0 %v2079
    %v2315 = vpop.f32.mrb[0].mxu0
    %v2316 = vadd.f32 0.0, %v2315
    %v2317 = vpop.f32.mrb[0].mxu0
    %v2318 = vpop.f32.mrb[0].mxu0
    %v2319 = vpop.f32.mrb[0].mxu0
    %2320 = vdwg.mxu0
    %v2321 = vadd.f32 %v2076, %v2275
    %v2322 = vxor.u32 %v2321, 2147483648
    %v2323 = vmul.f32 %v2322, 1.442695
    %v2324 = vpow.pop %v2323
    %v2325 = vadd.f32 %v2324, 1.0
    %v2326 = vrcp.pop %v2325
    %v2327 = vmul.f32 1.0, %v2326
    %v2328 = vadd.f32 %v2077, %v2277
    %v2329 = vxor.u32 %v2328, 2147483648
    %v2330 = vmul.f32 %v2329, 1.442695
    %v2331 = vpow.pop %v2330
    %v2332 = vadd.f32 %v2331, 1.0
    %v2333 = vrcp.pop %v2332
    %v2334 = vmul.f32 1.0, %v2333
    %v2335 = vadd.f32 %v2316, %v462
    %v2336 = vmul.f32 %v2327, %v2335
    %v2337 = vadd.f32 %v2078, %v2336
    %v2338 = vtanh.pop %v2337
    %v2339 = vsub.f32 %v2072, %v2338
    %v2340 = vmul.f32 %v2334, %v2339
    %v2341 = vadd.f32 %v2338, %v2340
    %s2342 = scalar_lea.vmem [#allocation3], 48
    %2343 = vst [vmem:[%s2342] sm:$0xff] %v2341
    %s2344 = scalar_lea.vmem [#allocation2], 168
    %v2345 = vld [vmem:[%s2344] sm:$0xff]
    %v2346 = vld [vmem:[%s2344 + $0x8] sm:$0xff]
    %v2347 = vld [vmem:[%s2344 + $0x10] sm:$0xff]
    %v2348 = vpack.c.bf16 %v2341, %v2341
    %v2349 = vld [vmem:[#allocation9] sm:$0xff]
    %v2350 = vld [vmem:[#allocation9 + $0x8] sm:$0xf]
    %v2351 = vld [vmem:[#allocation9 + $0xc] sm:$0xff]
    %v2352 = vld [vmem:[#allocation9 + $0x14] sm:$0xf]
    %v2353 = vld [vmem:[#allocation9 + $0x18] sm:$0xff]
    %v2354 = vld [vmem:[#allocation9 + $0x20] sm:$0xf]
    %v2355 = vld [vmem:[#allocation9 + $0x24] sm:$0xff]
    %v2356 = vld [vmem:[#allocation9 + $0x2c] sm:$0xf]
    %v2357 = vld [vmem:[#allocation9 + $0x30] sm:$0xff]
    %v2358 = vld [vmem:[#allocation9 + $0x38] sm:$0xf]
    %v2359 = vld [vmem:[#allocation9 + $0x3c] sm:$0xff]
    %v2360 = vld [vmem:[#allocation9 + $0x44] sm:$0xf]
    %v2361 = vld [vmem:[#allocation9 + $0x48] sm:$0xff]
    %v2362 = vld [vmem:[#allocation9 + $0x50] sm:$0xf]
    %v2363 = vld [vmem:[#allocation9 + $0x54] sm:$0xff]
    %v2364 = vld [vmem:[#allocation9 + $0x5c] sm:$0xf]
    %v2365 = vld [vmem:[#allocation9 + $0x60] sm:$0xff]
    %v2366 = vld [vmem:[#allocation9 + $0x68] sm:$0xf]
    %v2367 = vld [vmem:[#allocation9 + $0x6c] sm:$0xff]
    %v2368 = vld [vmem:[#allocation9 + $0x74] sm:$0xf]
    %v2369 = vld [vmem:[#allocation9 + $0x78] sm:$0xff]
    %v2370 = vld [vmem:[#allocation9 + $0x80] sm:$0xf]
    %v2371 = vld [vmem:[#allocation9 + $0x84] sm:$0xff]
    %v2372 = vld [vmem:[#allocation9 + $0x8c] sm:$0xf]
    %v2373 = vld [vmem:[#allocation9 + $0x90] sm:$0xff]
    %v2374 = vld [vmem:[#allocation9 + $0x98] sm:$0xf]
    %v2375 = vld [vmem:[#allocation9 + $0x9c] sm:$0xff]
    %v2376 = vld [vmem:[#allocation9 + $0xa4] sm:$0xf]
    %v2377 = vld [vmem:[#allocation9 + $0xa8] sm:$0xff]
    %v2378 = vld [vmem:[#allocation9 + $0xb0] sm:$0xf]
    %v2379 = vld [vmem:[#allocation9 + $0xb4] sm:$0xff]
    %v2380 = vld [vmem:[#allocation9 + $0xbc] sm:$0xf]
    %v2413 = vunpack.c.l.b16 %v2349
    %v2414 = vunpack.c.h.b16 %v2349
    %v2415 = vunpack.c.l.b16 %v2350
    %v2416 = vunpack.c.l.b16 %v2351
    %v2417 = vunpack.c.h.b16 %v2351
    %v2418 = vunpack.c.l.b16 %v2352
    %v2419 = vunpack.c.l.b16 %v2353
    %v2420 = vunpack.c.h.b16 %v2353
    %v2421 = vunpack.c.l.b16 %v2354
    %v2422 = vunpack.c.l.b16 %v2355
    %v2423 = vunpack.c.h.b16 %v2355
    %v2424 = vunpack.c.l.b16 %v2356
    %v2425 = vunpack.c.l.b16 %v2357
    %v2426 = vunpack.c.h.b16 %v2357
    %v2427 = vunpack.c.l.b16 %v2358
    %v2428 = vunpack.c.l.b16 %v2359
    %v2429 = vunpack.c.h.b16 %v2359
    %v2430 = vunpack.c.l.b16 %v2360
    %v2431 = vunpack.c.l.b16 %v2361
    %v2432 = vunpack.c.h.b16 %v2361
    %v2433 = vunpack.c.l.b16 %v2362
    %v2434 = vunpack.c.l.b16 %v2363
    %v2435 = vunpack.c.h.b16 %v2363
    %v2436 = vunpack.c.l.b16 %v2364
    %v2437 = vunpack.c.l.b16 %v2365
    %v2438 = vunpack.c.h.b16 %v2365
    %v2439 = vunpack.c.l.b16 %v2366
    %v2440 = vunpack.c.l.b16 %v2367
    %v2441 = vunpack.c.h.b16 %v2367
    %v2442 = vunpack.c.l.b16 %v2368
    %v2443 = vunpack.c.l.b16 %v2369
    %v2444 = vunpack.c.h.b16 %v2369
    %v2445 = vunpack.c.l.b16 %v2370
    %v2446 = vunpack.c.l.b16 %v2371
    %v2447 = vunpack.c.h.b16 %v2371
    %v2448 = vunpack.c.l.b16 %v2372
    %v2449 = vunpack.c.l.b16 %v2373
    %v2450 = vunpack.c.h.b16 %v2373
    %v2451 = vunpack.c.l.b16 %v2374
    %v2452 = vunpack.c.l.b16 %v2375
    %v2453 = vunpack.c.h.b16 %v2375
    %v2454 = vunpack.c.l.b16 %v2376
    %v2455 = vunpack.c.l.b16 %v2377
    %v2456 = vunpack.c.h.b16 %v2377
    %v2457 = vunpack.c.l.b16 %v2378
    %v2458 = vunpack.c.l.b16 %v2379
    %v2459 = vunpack.c.h.b16 %v2379
    %v2460 = vunpack.c.l.b16 %v2380
    %v2461 = vpack.c.b16 %v2416, %v2413
    %v2462 = vpack.c.b16 %v2417, %v2414
    %v2463 = vpack.c.b16 %v2418, %v2415
    %v2464 = vpack.c.b16 %v2422, %v2419
    %v2465 = vpack.c.b16 %v2423, %v2420
    %v2466 = vpack.c.b16 %v2424, %v2421
    %v2467 = vpack.c.b16 %v2428, %v2425
    %v2468 = vpack.c.b16 %v2429, %v2426
    %v2469 = vpack.c.b16 %v2430, %v2427
    %v2470 = vpack.c.b16 %v2434, %v2431
    %v2471 = vpack.c.b16 %v2435, %v2432
    %v2472 = vpack.c.b16 %v2436, %v2433
    %v2473 = vpack.c.b16 %v2440, %v2437
    %v2474 = vpack.c.b16 %v2441, %v2438
    %v2475 = vpack.c.b16 %v2442, %v2439
    %v2476 = vpack.c.b16 %v2446, %v2443
    %v2477 = vpack.c.b16 %v2447, %v2444
    %v2478 = vpack.c.b16 %v2448, %v2445
    %v2479 = vpack.c.b16 %v2452, %v2449
    %v2480 = vpack.c.b16 %v2453, %v2450
    %v2481 = vpack.c.b16 %v2454, %v2451
    %v2482 = vpack.c.b16 %v2458, %v2455
    %v2483 = vpack.c.b16 %v2459, %v2456
    %v2484 = vpack.c.b16 %v2460, %v2457
    %2509 = vmatprep.subr.bf16.mxu0 %v2462
    %2510 = vmatpush1.bf16.msra.mxu0 %v2461
    %2511 = vmatprep.subr.bf16.mxu0 %v2465
    %2512 = vmatpush1.bf16.msra.mxu0 %v2464
    %2513 = vmatprep.subr.bf16.mxu0 %v2468
    %2514 = vmatpush1.bf16.msra.mxu0 %v2467
    %2515 = vmatprep.subr.bf16.mxu0 %v2471
    %2516 = vmatpush1.bf16.msra.mxu0 %v2470
    %2517 = vmatprep.subr.bf16.mxu0 %v2474
    %2518 = vmatpush1.bf16.msra.mxu0 %v2473
    %2519 = vmatprep.subr.bf16.mxu0 %v2477
    %2520 = vmatpush1.bf16.msra.mxu0 %v2476
    %2521 = vmatprep.subr.bf16.mxu0 %v2480
    %2522 = vmatpush1.bf16.msra.mxu0 %v2479
    %2523 = vmatprep.subr.bf16.mxu0 %v2483
    %2524 = vmatpush1.bf16.msra.mxu0 %v2482
    %2525 = vmatprep.subr.bf16.mxu0 0
    %2526 = vmatpush1.bf16.msra.mxu0 0
    %2527 = vmatprep.subr.bf16.mxu0 0
    %2528 = vmatpush1.bf16.msra.mxu0 0
    %2529 = vmatprep.subr.bf16.mxu0 0
    %2530 = vmatpush1.bf16.msra.mxu0 0
    %2531 = vmatprep.subr.bf16.mxu0 0
    %2532 = vmatpush1.bf16.msra.mxu0 0
    %2533 = vmatprep.subr.bf16.mxu0 0
    %2534 = vmatpush1.bf16.msra.mxu0 0
    %2535 = vmatprep.subr.bf16.mxu0 0
    %2536 = vmatpush1.bf16.msra.mxu0 0
    %2537 = vmatprep.subr.bf16.mxu0 0
    %2538 = vmatpush1.bf16.msra.mxu0 0
    %2539 = vmatprep.subr.bf16.mxu0 0
    %2540 = vmatpush1.bf16.msra.mxu0 0
    %2541 = vmatprep.mubr.bf16.mxu0 0
    %2542 = vmatmul.mubr.bf16.gmra.mrb[0].mxu0 %v2348
    %v2543 = vpop.f32.mrb[0].mxu0
    %v2544 = vadd.f32 0.0, %v2543
    %v2545 = vpop.f32.mrb[0].mxu0
    %v2546 = vadd.f32 0.0, %v2545
    %v2547 = vpop.f32.mrb[0].mxu0
    %v2548 = vpop.f32.mrb[0].mxu0
    %2549 = vdwg.mxu0
    %2550 = vmatprep.subr.bf16.mxu0 0
    %2551 = vmatpush1.bf16.msra.mxu0 %v2463
    %2552 = vmatprep.subr.bf16.mxu0 0
    %2553 = vmatpush1.bf16.msra.mxu0 %v2466
    %2554 = vmatprep.subr.bf16.mxu0 0
    %2555 = vmatpush1.bf16.msra.mxu0 %v2469
    %2556 = vmatprep.subr.bf16.mxu0 0
    %2557 = vmatpush1.bf16.msra.mxu0 %v2472
    %2558 = vmatprep.subr.bf16.mxu0 0
    %2559 = vmatpush1.bf16.msra.mxu0 %v2475
    %2560 = vmatprep.subr.bf16.mxu0 0
    %2561 = vmatpush1.bf16.msra.mxu0 %v2478
    %2562 = vmatprep.subr.bf16.mxu0 0
    %2563 = vmatpush1.bf16.msra.mxu0 %v2481
    %2564 = vmatprep.subr.bf16.mxu0 0
    %2565 = vmatpush1.bf16.msra.mxu0 %v2484
    %2566 = vmatprep.subr.bf16.mxu0 0
    %2567 = vmatpush1.bf16.msra.mxu0 0
    %2568 = vmatprep.subr.bf16.mxu0 0
    %2569 = vmatpush1.bf16.msra.mxu0 0
    %2570 = vmatprep.subr.bf16.mxu0 0
    %2571 = vmatpush1.bf16.msra.mxu0 0
    %2572 = vmatprep.subr.bf16.mxu0 0
    %2573 = vmatpush1.bf16.msra.mxu0 0
    %2574 = vmatprep.subr.bf16.mxu0 0
    %2575 = vmatpush1.bf16.msra.mxu0 0
    %2576 = vmatprep.subr.bf16.mxu0 0
    %2577 = vmatpush1.bf16.msra.mxu0 0
    %2578 = vmatprep.subr.bf16.mxu0 0
    %2579 = vmatpush1.bf16.msra.mxu0 0
    %2580 = vmatprep.subr.bf16.mxu0 0
    %2581 = vmatpush1.bf16.msra.mxu0 0
    %2582 = vmatprep.mubr.bf16.mxu0 0
    %2583 = vmatmul.mubr.bf16.gmra.mrb[0].mxu0 %v2348
    %v2584 = vpop.f32.mrb[0].mxu0
    %v2585 = vadd.f32 0.0, %v2584
    %v2586 = vpop.f32.mrb[0].mxu0
    %v2587 = vpop.f32.mrb[0].mxu0
    %v2588 = vpop.f32.mrb[0].mxu0
    %2589 = vdwg.mxu0
    %v2590 = vadd.f32 %v2345, %v2544
    %v2591 = vxor.u32 %v2590, 2147483648
    %v2592 = vmul.f32 %v2591, 1.442695
    %v2593 = vpow.pop %v2592
    %v2594 = vadd.f32 %v2593, 1.0
    %v2595 = vrcp.pop %v2594
    %v2596 = vmul.f32 1.0, %v2595
    %v2597 = vadd.f32 %v2346, %v2546
    %v2598 = vxor.u32 %v2597, 2147483648
    %v2599 = vmul.f32 %v2598, 1.442695
    %v2600 = vpow.pop %v2599
    %v2601 = vadd.f32 %v2600, 1.0
    %v2602 = vrcp.pop %v2601
    %v2603 = vmul.f32 1.0, %v2602
    %v2604 = vadd.f32 %v2585, %v462
    %v2605 = vmul.f32 %v2596, %v2604
    %v2606 = vadd.f32 %v2347, %v2605
    %v2607 = vtanh.pop %v2606
    %v2608 = vsub.f32 %v2341, %v2607
    %v2609 = vmul.f32 %v2603, %v2608
    %v2610 = vadd.f32 %v2607, %v2609
    %s2611 = scalar_lea.vmem [#allocation3], 56
    %2612 = vst [vmem:[%s2611] sm:$0xff] %v2610
    %v2613 = vld [vmem:[#allocation3] sm:$0xff]
    %v2614 = vld [vmem:[#allocation3 + $0x8] sm:$0xff]
    %v2615 = vld [vmem:[#allocation3 + $0x10] sm:$0xff]
    %v2616 = vld [vmem:[#allocation3 + $0x18] sm:$0xff]
    %v2617 = vld [vmem:[#allocation3 + $0x20] sm:$0xff]
    %v2618 = vld [vmem:[#allocation3 + $0x28] sm:$0xff]
    %v2619 = vld [vmem:[#allocation3 + $0x30] sm:$0xff]
    %v2620 = vld [vmem:[#allocation3 + $0x38] sm:$0xff]
    %v2621 = vpack.c.bf16 %v2614, %v2613
    %v2622 = vpack.c.bf16 %v2616, %v2615
    %v2623 = vpack.c.bf16 %v2618, %v2617
    %v2624 = vpack.c.bf16 %v2620, %v2619
    %v2625 = vld [vmem:[#allocation10] sm:$0xf]
    %v2626 = vld [vmem:[#allocation10 + $0x4] sm:$0xf]
    %v2627 = vld [vmem:[#allocation10 + $0x8] sm:$0xf]
    %v2628 = vld [vmem:[#allocation10 + $0xc] sm:$0xf]
    %v2629 = vld [vmem:[#allocation10 + $0x10] sm:$0xf]
    %v2630 = vld [vmem:[#allocation10 + $0x14] sm:$0xf]
    %v2631 = vld [vmem:[#allocation10 + $0x18] sm:$0xf]
    %v2632 = vld [vmem:[#allocation10 + $0x1c] sm:$0xf]
    %v2633 = vld [vmem:[#allocation10 + $0x20] sm:$0xf]
    %v2634 = vld [vmem:[#allocation10 + $0x24] sm:$0xf]
    %v2635 = vld [vmem:[#allocation10 + $0x28] sm:$0xf]
    %v2636 = vld [vmem:[#allocation10 + $0x2c] sm:$0xf]
    %v2637 = vld [vmem:[#allocation10 + $0x30] sm:$0xf]
    %v2638 = vld [vmem:[#allocation10 + $0x34] sm:$0xf]
    %v2639 = vld [vmem:[#allocation10 + $0x38] sm:$0xf]
    %v2640 = vld [vmem:[#allocation10 + $0x3c] sm:$0xf]
    %v2641 = vld [vmem:[%s6] sm:$0x1]
    %v2643 = vlaneseq
    %v2644 = vshrl.u32 %v2643, 7
    %v2645 = vsub.s32 0, %v2644
    %v2646 = vrot.slane %v2641, %v2645
    %v2664 = vunpack.c.l.b16 %v2625
    %v2665 = vunpack.c.l.b16 %v2626
    %v2666 = vunpack.c.l.b16 %v2627
    %v2667 = vunpack.c.l.b16 %v2628
    %v2668 = vunpack.c.l.b16 %v2629
    %v2669 = vunpack.c.l.b16 %v2630
    %v2670 = vunpack.c.l.b16 %v2631
    %v2671 = vunpack.c.l.b16 %v2632
    %v2672 = vunpack.c.l.b16 %v2633
    %v2673 = vunpack.c.l.b16 %v2634
    %v2674 = vunpack.c.l.b16 %v2635
    %v2675 = vunpack.c.l.b16 %v2636
    %v2676 = vunpack.c.l.b16 %v2637
    %v2677 = vunpack.c.l.b16 %v2638
    %v2678 = vunpack.c.l.b16 %v2639
    %v2679 = vunpack.c.l.b16 %v2640
    %v2680 = vpack.c.b16 %v2665, %v2664
    %v2681 = vpack.c.b16 %v2667, %v2666
    %v2682 = vpack.c.b16 %v2669, %v2668
    %v2683 = vpack.c.b16 %v2671, %v2670
    %v2684 = vpack.c.b16 %v2673, %v2672
    %v2685 = vpack.c.b16 %v2675, %v2674
    %v2686 = vpack.c.b16 %v2677, %v2676
    %v2687 = vpack.c.b16 %v2679, %v2678
    %2696 = vmatprep.subr.bf16.mxu0 0
    %2697 = vmatpush1.bf16.msra.mxu0 %v2680
    %2698 = vmatprep.subr.bf16.mxu0 0
    %2699 = vmatpush1.bf16.msra.mxu0 %v2681
    %2700 = vmatprep.subr.bf16.mxu0 0
    %2701 = vmatpush1.bf16.msra.mxu0 %v2682
    %2702 = vmatprep.subr.bf16.mxu0 0
    %2703 = vmatpush1.bf16.msra.mxu0 %v2683
    %2704 = vmatprep.subr.bf16.mxu0 0
    %2705 = vmatpush1.bf16.msra.mxu0 %v2684
    %2706 = vmatprep.subr.bf16.mxu0 0
    %2707 = vmatpush1.bf16.msra.mxu0 %v2685
    %2708 = vmatprep.subr.bf16.mxu0 0
    %2709 = vmatpush1.bf16.msra.mxu0 %v2686
    %2710 = vmatprep.subr.bf16.mxu0 0
    %2711 = vmatpush1.bf16.msra.mxu0 %v2687
    %2712 = vmatprep.subr.bf16.mxu0 0
    %2713 = vmatpush1.bf16.msra.mxu0 0
    %2714 = vmatprep.subr.bf16.mxu0 0
    %2715 = vmatpush1.bf16.msra.mxu0 0
    %2716 = vmatprep.subr.bf16.mxu0 0
    %2717 = vmatpush1.bf16.msra.mxu0 0
    %2718 = vmatprep.subr.bf16.mxu0 0
    %2719 = vmatpush1.bf16.msra.mxu0 0
    %2720 = vmatprep.subr.bf16.mxu0 0
    %2721 = vmatpush1.bf16.msra.mxu0 0
    %2722 = vmatprep.subr.bf16.mxu0 0
    %2723 = vmatpush1.bf16.msra.mxu0 0
    %2724 = vmatprep.subr.bf16.mxu0 0
    %2725 = vmatpush1.bf16.msra.mxu0 0
    %2726 = vmatprep.subr.bf16.mxu0 0
    %2727 = vmatpush1.bf16.msra.mxu0 0
    %2728 = vmatprep.mubr.bf16.mxu0 0
    %2729 = vmatmul.mubr.bf16.gmra.mrb[0].mxu0 %v2621
    %v2730 = vpop.f32.mrb[0].mxu0
    %v2731 = vadd.f32 %v2646, %v2730
    %v2732 = vpop.f32.mrb[0].mxu0
    %v2733 = vpop.f32.mrb[0].mxu0
    %v2734 = vadd.f32 %v2646, %v2733
    %v2735 = vpop.f32.mrb[0].mxu0
    %2736 = vmatprep.mubr.bf16.mxu0 0
    %2737 = vmatmul.mubr.bf16.gmra.mrb[0].mxu0 %v2622
    %v2738 = vpop.f32.mrb[0].mxu0
    %v2739 = vadd.f32 %v2646, %v2738
    %v2740 = vpop.f32.mrb[0].mxu0
    %v2741 = vpop.f32.mrb[0].mxu0
    %v2742 = vadd.f32 %v2646, %v2741
    %v2743 = vpop.f32.mrb[0].mxu0
    %2744 = vmatprep.mubr.bf16.mxu0 0
    %2745 = vmatmul.mubr.bf16.gmra.mrb[0].mxu0 %v2623
    %v2746 = vpop.f32.mrb[0].mxu0
    %v2747 = vadd.f32 %v2646, %v2746
    %v2748 = vpop.f32.mrb[0].mxu0
    %v2749 = vpop.f32.mrb[0].mxu0
    %v2750 = vadd.f32 %v2646, %v2749
    %v2751 = vpop.f32.mrb[0].mxu0
    %2752 = vmatprep.mubr.bf16.mxu0 0
    %2753 = vmatmul.mubr.bf16.gmra.mrb[0].mxu0 %v2624
    %v2754 = vpop.f32.mrb[0].mxu0
    %v2755 = vadd.f32 %v2646, %v2754
    %v2756 = vpop.f32.mrb[0].mxu0
    %v2757 = vpop.f32.mrb[0].mxu0
    %v2758 = vadd.f32 %v2646, %v2757
    %v2759 = vpop.f32.mrb[0].mxu0
    %2760 = vdwg.mxu0
    %2761 = vst [vmem:[#allocation12] sm:$0xff] %v2731
    %2762 = vst [vmem:[#allocation12 + $0x8] sm:$0xff] %v2734
    %2763 = vst [vmem:[#allocation12 + $0x10] sm:$0xff] %v2739
    %2764 = vst [vmem:[#allocation12 + $0x18] sm:$0xff] %v2742
    %2765 = vst [vmem:[#allocation12 + $0x20] sm:$0xff] %v2747
    %2766 = vst [vmem:[#allocation12 + $0x28] sm:$0xff] %v2750
    %2767 = vst [vmem:[#allocation12 + $0x30] sm:$0xff] %v2755
    %2768 = vst [vmem:[#allocation12 + $0x38] sm:$0xff] %v2758
    %2769 = vst [vmem:[#allocation13] sm:$0xff] %v2610
    // Predicated region
    $region46: #{tpu_custom_call.1} parent=1 // pred_check
      _
    $region47: #{tpu_custom_call.1} parent=1 // pred_check_branch
      %2771 = sbr.rel (0) target = $region49
    $region48: #{tpu_custom_call.1} parent=1 // pred_region
      %s2773 = ssub.s32 1024, 1024
      %2774 = vsyncadd [#allocation6], %s2773
      %s2775 = sshll.u32 [#allocation12], 4
      %s2776 = int_to_ptr.vmem [resolvable:$true] %s2775
      %2781 = dma.vmem_to_hbm [thread:$0]  %s2776, 1024, %s7, [#allocation6], 128, 128, 8
    $region49: #{tpu_custom_call.1} parent=1 // pred_fallthru
      _
    // Predicated region
    $region50: #{tpu_custom_call.1} parent=1 // pred_check
      _
    $region51: #{tpu_custom_call.1} parent=1 // pred_check_branch
      %2783 = sbr.rel (0) target = $region53
    $region52: #{tpu_custom_call.1} parent=1 // pred_region
      %s2785 = ssub.s32 128, 128
      %2786 = vsyncadd [#allocation14], %s2785
      %s2788 = sshll.u32 [#allocation13], 4
      %s2789 = int_to_ptr.vmem [resolvable:$true] %s2788
      %2791 = dma.vmem_to_hbm [thread:$0]  %s2789, 128, %s8, [#allocation14]
    $region53: #{tpu_custom_call.1} parent=1 // pred_fallthru
      _
    // Predicated region
    $region54: #{tpu_custom_call.1} parent=1 // pred_check
      _
    $region55: #{tpu_custom_call.1} parent=1 // pred_check_branch
      %2793 = sbr.rel (0) target = $region57
    $region56: #{tpu_custom_call.1} parent=1 // pred_region
      %2794 = dma.done [#allocation6], 1024
    $region57: #{tpu_custom_call.1} parent=1 // pred_fallthru
      _
    // Predicated region
    $region58: #{tpu_custom_call.1} parent=1 // pred_check
      _
    $region59: #{tpu_custom_call.1} parent=1 // pred_check_branch
      %2796 = sbr.rel (0) target = $region61
    $region60: #{tpu_custom_call.1} parent=1 // pred_region
      %2797 = dma.done [#allocation14], 128
    $region61: #{tpu_custom_call.1} parent=1 // pred_fallthru
      _
    %2798 = vsyncpa [#allocation5], 1
    %2799 = vsyncpa [#allocation8], 1
    %2800 = vsyncpa [#allocation11], 1
    %2801 = vsyncpa [#allocation6], 1
    %2802 = vsyncpa [#allocation14], 1

</llo_original>
